<compile_context>
chip_gen: v6e
topology: v6e:2x2x1
jax: 0.10.0
libtpu: 0.0.40
codegen_flags: <defaults>
</compile_context>

<pallas_src>
import functools

import jax
import jax.numpy as jnp
from jax.experimental import pallas as pl
from jax.experimental.pallas import tpu as pltpu
import numpy as np


def head_kernel(hd_ref, gate_ref, wa_ref, ba_ref, w1_ref, b1_ref, w2_ref, b2_ref,
                o_ref, *, compute_dtype, H):
    cd = compute_dtype

    # lin_align + ReLU on the DGCNN branch (MXU, f32 accumulation).
    # Dtype cast (if any) happens here, in-kernel, not as a wrapper HBM pass.
    ha = jnp.dot(hd_ref[...].astype(cd), wa_ref[...].astype(cd),
                 preferred_element_type=jnp.float32) + ba_ref[...]
    ha = jnp.maximum(ha, 0.0)

    # lin1 over concat([ha, gate]) == split matmul: ha @ W1[:H] + gate @ W1[H:] + b1.
    # Static, sublane-aligned slices of the resident [2H, H] weight block.
    w1a = w1_ref[:H, :].astype(cd)
    w1b = w1_ref[H:, :].astype(cd)
    h1 = (jnp.dot(ha.astype(cd), w1a, preferred_element_type=jnp.float32)
          + jnp.dot(gate_ref[...].astype(cd), w1b, preferred_element_type=jnp.float32)
          + b1_ref[...])
    h1 = jnp.maximum(h1, 0.0)

    # F.dropout(p=0.5, training=False) is the identity at inference.
    # TODO(synk): training-mode dropout (stateful PRNG mask) not implemented.

    # lin2 (out features = 1): VPU multiply + lane reduction instead of an N=1 MXU
    # matmul; scalar bias comes from SMEM; store as a lane-dense (1, tb) row.
    logits = jnp.sum(h1 * w2_ref[...], axis=-1) + b2_ref[0]   # [tb]
    o_ref[...] = logits.reshape(o_ref.shape).astype(o_ref.dtype)


def ngnn_dgcnn_graphormer_head(h_dgcnn, h_graphormer, wa, ba, w1, b1, w2, b2,
                               *, tb=None, compute_dtype=jnp.float32):
    """Head of NGNNDGCNNGraphormer (readout_type=0), inference.

    h_dgcnn:      [B, dense_dim] DGCNN pooled embedding (submodule output).
    h_graphormer: [B, S, H]      Graphormer node embeddings (submodule output).
    wa/ba:  lin_align weight [dense_dim, H] / bias [1, H]   (weight = torch.weight.T)
    w1/b1:  lin1 weight [2H, H] / bias [1, H]
    w2/b2:  lin2 weight [H, 1]  / bias [1, 1]
    tb:     batch tile. None -> single grid step (v5e / v6e). On v7x use tb=128 so the
            two TensorCores each take a "parallel" 128-row tile (requires B % 128 == 0).
    compute_dtype: jnp.float32 (v5e) or jnp.bfloat16 (v6e / v7x matmul path);
            casts happen inside the kernel, accumulation is always f32.
    Returns [B, 1] link-prediction logits (f32).
    """
    B, Dd = h_dgcnn.shape
    _, S, H = h_graphormer.shape
    assert w1.shape == (2 * H, H)

    if tb is None:
        tb = B                      # single grid step: best on single-TC chips
    tb = min(tb, B)
    assert B % tb == 0, "batch must be divisible by the batch tile"
    grid = (B // tb,)
    if grid[0] > 1:
        # lane-dense (1, tb) output block requires a 128-multiple tile when tiled.
        assert tb % 128 == 0, "tb must be a multiple of 128 when grid > 1"

    # One fused slice-multiply in the wrapper: the only graphormer data the head uses
    # is the src*dst gate, streamed as a dense 2-D [B, H] array (no (tb,2,H) padding).
    gate = h_graphormer[:, 0, :] * h_graphormer[:, 1, :]        # [B, H], f32

    w2row = w2.reshape(1, H)                                    # lin2 weight as a row
    b2s = b2.reshape(1)                                         # lin2 bias as SMEM scalar

    kernel = functools.partial(head_kernel, compute_dtype=compute_dtype, H=H)

    out = pl.pallas_call(
        kernel,
        out_shape=jax.ShapeDtypeStruct((1, B), jnp.float32),
        grid=grid,
        in_specs=[
            pl.BlockSpec((tb, Dd), lambda i: (i, 0)),           # DGCNN features tile
            pl.BlockSpec((tb, H), lambda i: (i, 0)),            # src*dst gate tile
            # Constant-index weight/bias blocks stay resident across grid steps.
            pl.BlockSpec((Dd, H), lambda i: (0, 0)),            # lin_align weight
            pl.BlockSpec((1, H), lambda i: (0, 0)),             # lin_align bias
            pl.BlockSpec((2 * H, H), lambda i: (0, 0)),         # lin1 weight (whole)
            pl.BlockSpec((1, H), lambda i: (0, 0)),             # lin1 bias
            pl.BlockSpec((1, H), lambda i: (0, 0)),             # lin2 weight row
            pl.BlockSpec(memory_space=pltpu.MemorySpace.SMEM),  # lin2 bias scalar
        ],
        out_specs=pl.BlockSpec((1, tb), lambda i: (0, i)),      # lane-dense output row
        compiler_params=pltpu.CompilerParams(
            dimension_semantics=("parallel",)),
    )(h_dgcnn, gate, wa, ba, w1, b1, w2row, b2s)

    return out.reshape(B, 1)


def reference_head(h_dgcnn, h_graphormer, wa, ba, w1, b1, w2, b2):
    h = jnp.maximum(h_dgcnn @ wa + ba, 0.0)
    src = h_graphormer[:, 0, :]
    dst = h_graphormer[:, 1, :]
    h = jnp.concatenate([h, src * dst], axis=-1)
    h = jnp.maximum(h @ w1 + b1, 0.0)
    return h @ w2 + b2


if __name__ == "__main__":
    # Shapes consistent with the module: mlp_hidden_channels=32, 8 nodes per pair-graph
    # (nodes 0/1 = src/dst centers), DGCNN dense_dim=64, batch 256 (so the v7x-style
    # tb=128 path runs two parallel grid steps).
    B, S, H, Dd = 256, 8, 32, 64

    key = jax.random.PRNGKey(0)
    k_hd, k_hg, k_wa, k_ba, k_w1, k_b1, k_w2, k_b2 = jax.random.split(key, 8)

    # TODO(synk): ngnn_models.DGCNN and Graphormer submodules (definitions not provided
    # in the reference code) are not reproduced; their outputs are taken as inputs.
    h_dgcnn = jax.random.normal(k_hd, (B, Dd), dtype=jnp.float32)
    h_graphormer = jax.random.normal(k_hg, (B, S, H), dtype=jnp.float32)

    # PyTorch-Linear-style init: U(-1/sqrt(fan_in), 1/sqrt(fan_in)); weights stored [in, out].
    ba_bound = 1.0 / np.sqrt(Dd)
    wa = jax.random.uniform(k_wa, (Dd, H), jnp.float32, -ba_bound, ba_bound)
    ba = jax.random.uniform(k_ba, (1, H), jnp.float32, -ba_bound, ba_bound)
    b1_bound = 1.0 / np.sqrt(2 * H)
    w1 = jax.random.uniform(k_w1, (2 * H, H), jnp.float32, -b1_bound, b1_bound)
    b1 = jax.random.uniform(k_b1, (1, H), jnp.float32, -b1_bound, b1_bound)
    b2_bound = 1.0 / np.sqrt(H)
    w2 = jax.random.uniform(k_w2, (H, 1), jnp.float32, -b2_bound, b2_bound)
    b2 = jax.random.uniform(k_b2, (1, 1), jnp.float32, -b2_bound, b2_bound)

    ref = reference_head(h_dgcnn, h_graphormer, wa, ba, w1, b1, w2, b2)

    # f32, single grid step (v5e / v6e configuration), tight tolerance.
    out_single = ngnn_dgcnn_graphormer_head(
        h_dgcnn, h_graphormer, wa, ba, w1, b1, w2, b2,
        tb=None, compute_dtype=jnp.float32)
    out_single = jax.block_until_ready(out_single)
    np.testing.assert_allclose(np.asarray(out_single), np.asarray(ref),
                               rtol=1e-5, atol=1e-5)

    # f32, two parallel 128-row grid steps (v7x two-TensorCore configuration).
    out_tiled = ngnn_dgcnn_graphormer_head(
        h_dgcnn, h_graphormer, wa, ba, w1, b1, w2, b2,
        tb=128, compute_dtype=jnp.float32)
    out_tiled = jax.block_until_ready(out_tiled)
    np.testing.assert_allclose(np.asarray(out_tiled), np.asarray(ref),
                               rtol=1e-5, atol=1e-5)

    # bf16 matmul path (v6e / v7x), casts inside the kernel, f32 accumulation.
    out_bf16 = ngnn_dgcnn_graphormer_head(
        h_dgcnn, h_graphormer, wa, ba, w1, b1, w2, b2,
        tb=None, compute_dtype=jnp.bfloat16)
    out_bf16 = jax.block_until_ready(out_bf16)
    np.testing.assert_allclose(np.asarray(out_bf16), np.asarray(ref),
                               rtol=3e-2, atol=3e-2)

    print("KERNEL_OK")
</pallas_src>

<mosaic_0001>
module attributes {stable_mosaic.version = 11 : i64} {
  func.func @head_kernel(%arg0: i32, %arg1: memref<256x64xf32, #tpu.memory_space<vmem>>, %arg2: memref<256x32xf32, #tpu.memory_space<vmem>>, %arg3: memref<64x32xf32, #tpu.memory_space<vmem>>, %arg4: memref<1x32xf32, #tpu.memory_space<vmem>>, %arg5: memref<64x32xf32, #tpu.memory_space<vmem>>, %arg6: memref<1x32xf32, #tpu.memory_space<vmem>>, %arg7: memref<1x32xf32, #tpu.memory_space<vmem>>, %arg8: memref<1xf32, #tpu.memory_space<smem>>, %arg9: memref<1x256xf32, #tpu.memory_space<vmem>>) attributes {dimension_semantics = [#tpu.dimension_semantics<parallel>], iteration_bounds = array<i64: 1>, scalar_prefetch = 0 : i64, scratch_operands = 0 : i64, tpu.core_type = #tpu.core_type<tc>, window_params = [{transform_indices = @transform_0, window_bounds = array<i64: 256, 64>}, {transform_indices = @transform_1, window_bounds = array<i64: 256, 32>}, {pipeline_mode = #tpu.pipeline_mode<synchronous>, transform_indices = @transform_2, window_bounds = array<i64: 64, 32>}, {pipeline_mode = #tpu.pipeline_mode<synchronous>, transform_indices = @transform_3, window_bounds = array<i64: 1, 32>}, {pipeline_mode = #tpu.pipeline_mode<synchronous>, transform_indices = @transform_4, window_bounds = array<i64: 64, 32>}, {pipeline_mode = #tpu.pipeline_mode<synchronous>, transform_indices = @transform_5, window_bounds = array<i64: 1, 32>}, {pipeline_mode = #tpu.pipeline_mode<synchronous>, transform_indices = @transform_6, window_bounds = array<i64: 1, 32>}, {transform_indices = @transform_7, window_bounds = array<i64: 1>}, {transform_indices = @transform_8, window_bounds = array<i64: 1, 256>}]} {
    %c0 = arith.constant 0 : index
    %c0_0 = arith.constant 0 : index
    %0 = vector.load %arg1[%c0, %c0_0] : memref<256x64xf32, #tpu.memory_space<vmem>>, vector<256x64xf32>
    %c0_1 = arith.constant 0 : index
    %c0_2 = arith.constant 0 : index
    %1 = vector.load %arg3[%c0_1, %c0_2] : memref<64x32xf32, #tpu.memory_space<vmem>>, vector<64x32xf32>
    %cst = arith.constant dense<0.000000e+00> : vector<256x32xf32>
    %2 = tpu.matmul %0, %1, %cst {dimension_numbers = #tpu.dot_dimension_numbers<[1], [0], [0], [1], [0, 0, 1, 1], [], []>} : vector<256x64xf32>, vector<64x32xf32>, vector<256x32xf32> -> vector<256x32xf32>
    %c0_3 = arith.constant 0 : index
    %c0_4 = arith.constant 0 : index
    %3 = vector.load %arg4[%c0_3, %c0_4] : memref<1x32xf32, #tpu.memory_space<vmem>>, vector<1x32xf32>
    %4 = vector.broadcast %3 : vector<1x32xf32> to vector<256x32xf32>
    %5 = arith.addf %2, %4 : vector<256x32xf32>
    %cst_5 = arith.constant 0.000000e+00 : f32
    %6 = vector.broadcast %cst_5 : f32 to vector<256x32xf32>
    %7 = arith.maximumf %5, %6 : vector<256x32xf32>
    %c0_6 = arith.constant 0 : index
    %c0_7 = arith.constant 0 : index
    %8 = vector.load %arg5[%c0_6, %c0_7] : memref<64x32xf32, #tpu.memory_space<vmem>>, vector<32x32xf32>
    %c32 = arith.constant 32 : index
    %c0_8 = arith.constant 0 : index
    %9 = vector.load %arg5[%c32, %c0_8] : memref<64x32xf32, #tpu.memory_space<vmem>>, vector<32x32xf32>
    %cst_9 = arith.constant dense<0.000000e+00> : vector<256x32xf32>
    %10 = tpu.matmul %7, %8, %cst_9 {dimension_numbers = #tpu.dot_dimension_numbers<[1], [0], [0], [1], [0, 0, 1, 1], [], []>} : vector<256x32xf32>, vector<32x32xf32>, vector<256x32xf32> -> vector<256x32xf32>
    %c0_10 = arith.constant 0 : index
    %c0_11 = arith.constant 0 : index
    %11 = vector.load %arg2[%c0_10, %c0_11] : memref<256x32xf32, #tpu.memory_space<vmem>>, vector<256x32xf32>
    %cst_12 = arith.constant dense<0.000000e+00> : vector<256x32xf32>
    %12 = tpu.matmul %11, %9, %cst_12 {dimension_numbers = #tpu.dot_dimension_numbers<[1], [0], [0], [1], [0, 0, 1, 1], [], []>} : vector<256x32xf32>, vector<32x32xf32>, vector<256x32xf32> -> vector<256x32xf32>
    %13 = arith.addf %10, %12 : vector<256x32xf32>
    %c0_13 = arith.constant 0 : index
    %c0_14 = arith.constant 0 : index
    %14 = vector.load %arg6[%c0_13, %c0_14] : memref<1x32xf32, #tpu.memory_space<vmem>>, vector<1x32xf32>
    %15 = vector.broadcast %14 : vector<1x32xf32> to vector<256x32xf32>
    %16 = arith.addf %13, %15 : vector<256x32xf32>
    %cst_15 = arith.constant 0.000000e+00 : f32
    %17 = vector.broadcast %cst_15 : f32 to vector<256x32xf32>
    %18 = arith.maximumf %16, %17 : vector<256x32xf32>
    %c0_16 = arith.constant 0 : index
    %c0_17 = arith.constant 0 : index
    %19 = vector.load %arg7[%c0_16, %c0_17] : memref<1x32xf32, #tpu.memory_space<vmem>>, vector<1x32xf32>
    %20 = vector.broadcast %19 : vector<1x32xf32> to vector<256x32xf32>
    %21 = arith.mulf %18, %20 : vector<256x32xf32>
    %cst_18 = arith.constant dense<0.000000e+00> : vector<256xf32>
    %22 = vector.multi_reduction <add>, %21, %cst_18 [1] : vector<256x32xf32> to vector<256xf32>
    %c0_19 = arith.constant 0 : index
    %23 = memref.load %arg8[%c0_19] : memref<1xf32, #tpu.memory_space<smem>>
    %24 = vector.broadcast %23 : f32 to vector<256xf32>
    %25 = arith.addf %22, %24 : vector<256xf32>
    %26 = vector.shape_cast %25 : vector<256xf32> to vector<1x256xf32>
    %c0_20 = arith.constant 0 : index
    %c0_21 = arith.constant 0 : index
    %27 = vector.load %arg9[%c0_20, %c0_21] : memref<1x256xf32, #tpu.memory_space<vmem>>, vector<1x256xf32>
    tpu.vector_store %arg9[%c0_20, %c0_21], %26 {strides = array<i32>} : memref<1x256xf32, #tpu.memory_space<vmem>>, vector<1x256xf32>,
    return
  }
  func.func @transform_0(%arg0: i32) -> (i32, i32) {
    %c0_i32 = arith.constant 0 : i32
    %c0_i32_0 = arith.constant 0 : i32
    return %arg0, %c0_i32 : i32, i32
  }
  func.func @transform_1(%arg0: i32) -> (i32, i32) {
    %c0_i32 = arith.constant 0 : i32
    %c0_i32_0 = arith.constant 0 : i32
    return %arg0, %c0_i32 : i32, i32
  }
  func.func @transform_2(%arg0: i32) -> (i32, i32) {
    %c0_i32 = arith.constant 0 : i32
    %c0_i32_0 = arith.constant 0 : i32
    %c0_i32_1 = arith.constant 0 : i32
    return %c0_i32, %c0_i32_0 : i32, i32
  }
  func.func @transform_3(%arg0: i32) -> (i32, i32) {
    %c0_i32 = arith.constant 0 : i32
    %c0_i32_0 = arith.constant 0 : i32
    %c0_i32_1 = arith.constant 0 : i32
    return %c0_i32, %c0_i32_0 : i32, i32
  }
  func.func @transform_4(%arg0: i32) -> (i32, i32) {
    %c0_i32 = arith.constant 0 : i32
    %c0_i32_0 = arith.constant 0 : i32
    %c0_i32_1 = arith.constant 0 : i32
    return %c0_i32, %c0_i32_0 : i32, i32
  }
  func.func @transform_5(%arg0: i32) -> (i32, i32) {
    %c0_i32 = arith.constant 0 : i32
    %c0_i32_0 = arith.constant 0 : i32
    %c0_i32_1 = arith.constant 0 : i32
    return %c0_i32, %c0_i32_0 : i32, i32
  }
  func.func @transform_6(%arg0: i32) -> (i32, i32) {
    %c0_i32 = arith.constant 0 : i32
    %c0_i32_0 = arith.constant 0 : i32
    %c0_i32_1 = arith.constant 0 : i32
    return %c0_i32, %c0_i32_0 : i32, i32
  }
  func.func @transform_7(%arg0: i32) -> i32 {
    %c0_i32 = arith.constant 0 : i32
    %c0_i32_0 = arith.constant 0 : i32
    return %c0_i32 : i32
  }
  func.func @transform_8(%arg0: i32) -> (i32, i32) {
    %c0_i32 = arith.constant 0 : i32
    %c0_i32_0 = arith.constant 0 : i32
    return %c0_i32, %arg0 : i32, i32
  }
}

</mosaic_0001>

<llo_original>
// kernel: tpu_custom_call.1
$region0: #{tpu_custom_call.1}
  #allocation0 [shape = 'u32[]', space=smem, size = 0x4, offset = 0x4, fixed_abs, tag = 'smem constant byte address 0x4 - core index']
  #allocation1 [shape = 'u32[144,128]{1,0:T(1,128)}', space=vmem, size = 0x12000, scoped, tag = 'internal scratch']
  #allocation2 [shape = 'f32[1]{0:T(128)S(6)}', space=smem, size = 0x200, scoped, tag = 'scoped memory for tpu_custom_call.1']
  %s0 = inlined_call_operand.vmem [shape: f32[256,64], index: 0, kind: input, shape index: {}]
  %s1 = inlined_call_operand.vmem [shape: f32[256,32], index: 1, kind: input, shape index: {}]
  %s2 = inlined_call_operand.vmem [shape: f32[64,32], index: 2, kind: input, shape index: {}]
  %s3 = inlined_call_operand.vmem [shape: f32[1,32], index: 3, kind: input, shape index: {}]
  %s4 = inlined_call_operand.vmem [shape: f32[64,32], index: 4, kind: input, shape index: {}]
  %s5 = inlined_call_operand.vmem [shape: f32[1,32], index: 5, kind: input, shape index: {}]
  %s6 = inlined_call_operand.vmem [shape: f32[1,32], index: 6, kind: input, shape index: {}]
  %s7 = inlined_call_operand.<no memory space> [shape: f32[1], index: 7, kind: input, shape index: {}]
  %s8 = inlined_call_operand.hbm [shape: f32[1,256], index: 8, kind: output, shape index: {}]
  %s9 = sld [smem:[#allocation0]]
  $region42: #{tpu_custom_call.1} parent=0
    _
  %s11 = ssub.s32 1, %s9
  %s12 = scalar_select 0, %s11, %s9
  %13 = sst [smem:[#allocation2]] %s7
  $region1: #{tpu_custom_call.1} parent=0
    #allocation3 [shape = 'u8[1024]{0}', space=vmem, size = 0x400, scoped, tag = 'output window, operand 0, single buffered']
    #allocation4 [shape = 's32[1]{0}', space=sflag, size = 0x4, scoped, tag = 'scoped memory for tpu_custom_call.1']
    %14 = vsyncpa [#allocation4], 0
    // Predicated region
    $region2: #{tpu_custom_call.1} parent=1 // pred_check
      _
    $region3: #{tpu_custom_call.1} parent=1 // pred_check_branch
      %16 = sbr.rel (0) target = $region5
    $region4: #{tpu_custom_call.1} parent=1 // pred_region
      _
    $region5: #{tpu_custom_call.1} parent=1 // pred_fallthru
      _
    // Predicated region
    $region6: #{tpu_custom_call.1} parent=1 // pred_check
      _
    $region7: #{tpu_custom_call.1} parent=1 // pred_check_branch
      %18 = sbr.rel (0) target = $region9
    $region8: #{tpu_custom_call.1} parent=1 // pred_region
      _
    $region9: #{tpu_custom_call.1} parent=1 // pred_fallthru
      _
    // Predicated region
    $region10: #{tpu_custom_call.1} parent=1 // pred_check
      _
    $region11: #{tpu_custom_call.1} parent=1 // pred_check_branch
      %20 = sbr.rel (0) target = $region13
    $region12: #{tpu_custom_call.1} parent=1 // pred_region
      _
    $region13: #{tpu_custom_call.1} parent=1 // pred_fallthru
      _
    // Predicated region
    $region14: #{tpu_custom_call.1} parent=1 // pred_check
      _
    $region15: #{tpu_custom_call.1} parent=1 // pred_check_branch
      %22 = sbr.rel (0) target = $region17
    $region16: #{tpu_custom_call.1} parent=1 // pred_region
      _
    $region17: #{tpu_custom_call.1} parent=1 // pred_fallthru
      _
    // Predicated region
    $region18: #{tpu_custom_call.1} parent=1 // pred_check
      _
    $region19: #{tpu_custom_call.1} parent=1 // pred_check_branch
      %24 = sbr.rel (0) target = $region21
    $region20: #{tpu_custom_call.1} parent=1 // pred_region
      _
    $region21: #{tpu_custom_call.1} parent=1 // pred_fallthru
      _
    // Predicated region
    $region22: #{tpu_custom_call.1} parent=1 // pred_check
      _
    $region23: #{tpu_custom_call.1} parent=1 // pred_check_branch
      %26 = sbr.rel (0) target = $region25
    $region24: #{tpu_custom_call.1} parent=1 // pred_region
      _
    $region25: #{tpu_custom_call.1} parent=1 // pred_fallthru
      _
    // Predicated region
    $region26: #{tpu_custom_call.1} parent=1 // pred_check
      _
    $region27: #{tpu_custom_call.1} parent=1 // pred_check_branch
      %28 = sbr.rel (0) target = $region29
    $region28: #{tpu_custom_call.1} parent=1 // pred_region
      _
    $region29: #{tpu_custom_call.1} parent=1 // pred_fallthru
      _
    // Predicated region
    $region30: #{tpu_custom_call.1} parent=1 // pred_check
      _
    $region31: #{tpu_custom_call.1} parent=1 // pred_check_branch
      %30 = sbr.rel (0) target = $region33
    $region32: #{tpu_custom_call.1} parent=1 // pred_region
      _
    $region33: #{tpu_custom_call.1} parent=1 // pred_fallthru
      _
    %v31 = vld [vmem:[%s0] sm:$0xff]
    %v32 = vld [vmem:[%s0 + $0x8] sm:$0xff]
    %v33 = vld [vmem:[%s0 + $0x10] sm:$0xff]
    %v34 = vld [vmem:[%s0 + $0x18] sm:$0xff]
    %v35 = vld [vmem:[%s0 + $0x20] sm:$0xff]
    %v36 = vld [vmem:[%s0 + $0x28] sm:$0xff]
    %v37 = vld [vmem:[%s0 + $0x30] sm:$0xff]
    %v38 = vld [vmem:[%s0 + $0x38] sm:$0xff]
    %v39 = vld [vmem:[%s0 + $0x40] sm:$0xff]
    %v40 = vld [vmem:[%s0 + $0x48] sm:$0xff]
    %v41 = vld [vmem:[%s0 + $0x50] sm:$0xff]
    %v42 = vld [vmem:[%s0 + $0x58] sm:$0xff]
    %v43 = vld [vmem:[%s0 + $0x60] sm:$0xff]
    %v44 = vld [vmem:[%s0 + $0x68] sm:$0xff]
    %v45 = vld [vmem:[%s0 + $0x70] sm:$0xff]
    %v46 = vld [vmem:[%s0 + $0x78] sm:$0xff]
    %v47 = vld [vmem:[%s0 + $0x80] sm:$0xff]
    %v48 = vld [vmem:[%s0 + $0x88] sm:$0xff]
    %v49 = vld [vmem:[%s0 + $0x90] sm:$0xff]
    %v50 = vld [vmem:[%s0 + $0x98] sm:$0xff]
    %v51 = vld [vmem:[%s0 + $0xa0] sm:$0xff]
    %v52 = vld [vmem:[%s0 + $0xa8] sm:$0xff]
    %v53 = vld [vmem:[%s0 + $0xb0] sm:$0xff]
    %v54 = vld [vmem:[%s0 + $0xb8] sm:$0xff]
    %v55 = vld [vmem:[%s0 + $0xc0] sm:$0xff]
    %v56 = vld [vmem:[%s0 + $0xc8] sm:$0xff]
    %v57 = vld [vmem:[%s0 + $0xd0] sm:$0xff]
    %v58 = vld [vmem:[%s0 + $0xd8] sm:$0xff]
    %v59 = vld [vmem:[%s0 + $0xe0] sm:$0xff]
    %v60 = vld [vmem:[%s0 + $0xe8] sm:$0xff]
    %v61 = vld [vmem:[%s0 + $0xf0] sm:$0xff]
    %v62 = vld [vmem:[%s0 + $0xf8] sm:$0xff]
    %v63 = vld [vmem:[%s2] sm:$0xff]
    %v64 = vld [vmem:[%s2 + $0x8] sm:$0xff]
    %v65 = vld [vmem:[%s2 + $0x10] sm:$0xff]
    %v66 = vld [vmem:[%s2 + $0x18] sm:$0xff]
    %v67 = vld [vmem:[%s2 + $0x20] sm:$0xff]
    %v68 = vld [vmem:[%s2 + $0x28] sm:$0xff]
    %v69 = vld [vmem:[%s2 + $0x30] sm:$0xff]
    %v70 = vld [vmem:[%s2 + $0x38] sm:$0xff]
    %v71 = vld [vmem:[%s3] sm:$0x1]
    %v73 = vlaneseq
    %v74 = vshrl.u32 %v73, 7
    %v75 = vsub.s32 0, %v74
    %v76 = vrot.slane %v71, %v75
    %vm78 = vcmask 523264
    %v80 = vsel %vm78, %v31, 0
    %v83 = vsel %vm78, %v32, 0
    %v86 = vsel %vm78, %v33, 0
    %v89 = vsel %vm78, %v34, 0
    %v92 = vsel %vm78, %v35, 0
    %v95 = vsel %vm78, %v36, 0
    %v98 = vsel %vm78, %v37, 0
    %v101 = vsel %vm78, %v38, 0
    %v104 = vsel %vm78, %v39, 0
    %v107 = vsel %vm78, %v40, 0
    %v110 = vsel %vm78, %v41, 0
    %v113 = vsel %vm78, %v42, 0
    %v116 = vsel %vm78, %v43, 0
    %v119 = vsel %vm78, %v44, 0
    %v122 = vsel %vm78, %v45, 0
    %v125 = vsel %vm78, %v46, 0
    %v128 = vsel %vm78, %v47, 0
    %v131 = vsel %vm78, %v48, 0
    %v134 = vsel %vm78, %v49, 0
    %v137 = vsel %vm78, %v50, 0
    %v140 = vsel %vm78, %v51, 0
    %v143 = vsel %vm78, %v52, 0
    %v146 = vsel %vm78, %v53, 0
    %v149 = vsel %vm78, %v54, 0
    %v152 = vsel %vm78, %v55, 0
    %v155 = vsel %vm78, %v56, 0
    %v158 = vsel %vm78, %v57, 0
    %v161 = vsel %vm78, %v58, 0
    %v164 = vsel %vm78, %v59, 0
    %v167 = vsel %vm78, %v60, 0
    %v170 = vsel %vm78, %v61, 0
    %v173 = vsel %vm78, %v62, 0
    %175 = vmatprep.subr.mxu0 0.0
    %176 = vmatpush1.msra.mxu0 0.0
    %177 = vmatprep.subr.mxu0 0.0
    %178 = vmatpush1.msra.mxu0 0.0
    %179 = vmatprep.subr.mxu0 0.0
    %180 = vmatpush1.msra.mxu0 0.0
    %181 = vmatprep.subr.mxu0 0.0
    %182 = vmatpush1.msra.mxu0 0.0
    %183 = vmatprep.subr.mxu0 0.0
    %184 = vmatpush1.msra.mxu0 0.0
    %185 = vmatprep.subr.mxu0 0.0
    %186 = vmatpush1.msra.mxu0 0.0
    %187 = vmatprep.subr.mxu0 0.0
    %188 = vmatpush1.msra.mxu0 0.0
    %189 = vmatprep.subr.mxu0 0.0
    %190 = vmatpush1.msra.mxu0 0.0
    %191 = vmatprep.subr.mxu0 0.0
    %192 = vmatpush1.msra.mxu0 %v70
    %193 = vmatprep.subr.mxu0 0.0
    %194 = vmatpush1.msra.mxu0 %v69
    %195 = vmatprep.subr.mxu0 0.0
    %196 = vmatpush1.msra.mxu0 %v68
    %197 = vmatprep.subr.mxu0 0.0
    %198 = vmatpush1.msra.mxu0 %v67
    %199 = vmatprep.subr.mxu0 0.0
    %200 = vmatpush1.msra.mxu0 %v66
    %201 = vmatprep.subr.mxu0 0.0
    %202 = vmatpush1.msra.mxu0 %v65
    %203 = vmatprep.subr.mxu0 0.0
    %204 = vmatpush1.msra.mxu0 %v64
    %205 = vmatprep.subr.mxu0 0.0
    %206 = vmatpush1.msra.mxu0 %v63
    %207 = vmatprep.subr.mxu0 0.0
    %208 = vmatpush2.msra.mxu0 0.0
    %209 = vmatprep.subr.mxu0 0.0
    %210 = vmatpush2.msra.mxu0 0.0
    %211 = vmatprep.subr.mxu0 0.0
    %212 = vmatpush2.msra.mxu0 0.0
    %213 = vmatprep.subr.mxu0 0.0
    %214 = vmatpush2.msra.mxu0 0.0
    %215 = vmatprep.subr.mxu0 0.0
    %216 = vmatpush2.msra.mxu0 0.0
    %217 = vmatprep.subr.mxu0 0.0
    %218 = vmatpush2.msra.mxu0 0.0
    %219 = vmatprep.subr.mxu0 0.0
    %220 = vmatpush2.msra.mxu0 0.0
    %221 = vmatprep.subr.mxu0 0.0
    %222 = vmatpush2.msra.mxu0 0.0
    %223 = vmatprep.subr.mxu0 0.0
    %224 = vmatpush2.msra.mxu0 0.0
    %225 = vmatprep.subr.mxu0 0.0
    %226 = vmatpush2.msra.mxu0 0.0
    %227 = vmatprep.subr.mxu0 0.0
    %228 = vmatpush2.msra.mxu0 0.0
    %229 = vmatprep.subr.mxu0 0.0
    %230 = vmatpush2.msra.mxu0 0.0
    %231 = vmatprep.subr.mxu0 0.0
    %232 = vmatpush2.msra.mxu0 0.0
    %233 = vmatprep.subr.mxu0 0.0
    %234 = vmatpush2.msra.mxu0 0.0
    %235 = vmatprep.subr.mxu0 0.0
    %236 = vmatpush2.msra.mxu0 0.0
    %237 = vmatprep.subr.mxu0 0.0
    %238 = vmatpush2.msra.mxu0 0.0
    %239 = vmatprep.mubr.f32.mxu0 0.0
    %240 = vmatmul.mubr.f32.gmra.mxu0 %v80
    %v241 = vpop.f32.mrf.mxu0
    %v242 = vadd.f32 %v76, %v241
    %v243 = vpop.f32.mrf.mxu0
    %244 = vmatprep.mubr.f32.mxu0 0.0
    %245 = vmatmul.mubr.f32.gmra.mxu0 %v83
    %v246 = vpop.f32.mrf.mxu0
    %v247 = vadd.f32 %v76, %v246
    %v248 = vpop.f32.mrf.mxu0
    %249 = vmatprep.mubr.f32.mxu0 0.0
    %250 = vmatmul.mubr.f32.gmra.mxu0 %v86
    %v251 = vpop.f32.mrf.mxu0
    %v252 = vadd.f32 %v76, %v251
    %v253 = vpop.f32.mrf.mxu0
    %254 = vmatprep.mubr.f32.mxu0 0.0
    %255 = vmatmul.mubr.f32.gmra.mxu0 %v89
    %v256 = vpop.f32.mrf.mxu0
    %v257 = vadd.f32 %v76, %v256
    %v258 = vpop.f32.mrf.mxu0
    %259 = vmatprep.mubr.f32.mxu0 0.0
    %260 = vmatmul.mubr.f32.gmra.mxu0 %v92
    %v261 = vpop.f32.mrf.mxu0
    %v262 = vadd.f32 %v76, %v261
    %v263 = vpop.f32.mrf.mxu0
    %264 = vmatprep.mubr.f32.mxu0 0.0
    %265 = vmatmul.mubr.f32.gmra.mxu0 %v95
    %v266 = vpop.f32.mrf.mxu0
    %v267 = vadd.f32 %v76, %v266
    %v268 = vpop.f32.mrf.mxu0
    %269 = vmatprep.mubr.f32.mxu0 0.0
    %270 = vmatmul.mubr.f32.gmra.mxu0 %v98
    %v271 = vpop.f32.mrf.mxu0
    %v272 = vadd.f32 %v76, %v271
    %v273 = vpop.f32.mrf.mxu0
    %274 = vmatprep.mubr.f32.mxu0 0.0
    %275 = vmatmul.mubr.f32.gmra.mxu0 %v101
    %v276 = vpop.f32.mrf.mxu0
    %v277 = vadd.f32 %v76, %v276
    %v278 = vpop.f32.mrf.mxu0
    %279 = vmatprep.mubr.f32.mxu0 0.0
    %280 = vmatmul.mubr.f32.gmra.mxu0 %v104
    %v281 = vpop.f32.mrf.mxu0
    %v282 = vadd.f32 %v76, %v281
    %v283 = vpop.f32.mrf.mxu0
    %284 = vmatprep.mubr.f32.mxu0 0.0
    %285 = vmatmul.mubr.f32.gmra.mxu0 %v107
    %v286 = vpop.f32.mrf.mxu0
    %v287 = vadd.f32 %v76, %v286
    %v288 = vpop.f32.mrf.mxu0
    %289 = vmatprep.mubr.f32.mxu0 0.0
    %290 = vmatmul.mubr.f32.gmra.mxu0 %v110
    %v291 = vpop.f32.mrf.mxu0
    %v292 = vadd.f32 %v76, %v291
    %v293 = vpop.f32.mrf.mxu0
    %294 = vmatprep.mubr.f32.mxu0 0.0
    %295 = vmatmul.mubr.f32.gmra.mxu0 %v113
    %v296 = vpop.f32.mrf.mxu0
    %v297 = vadd.f32 %v76, %v296
    %v298 = vpop.f32.mrf.mxu0
    %299 = vmatprep.mubr.f32.mxu0 0.0
    %300 = vmatmul.mubr.f32.gmra.mxu0 %v116
    %v301 = vpop.f32.mrf.mxu0
    %v302 = vadd.f32 %v76, %v301
    %v303 = vpop.f32.mrf.mxu0
    %304 = vmatprep.mubr.f32.mxu0 0.0
    %305 = vmatmul.mubr.f32.gmra.mxu0 %v119
    %v306 = vpop.f32.mrf.mxu0
    %v307 = vadd.f32 %v76, %v306
    %v308 = vpop.f32.mrf.mxu0
    %309 = vmatprep.mubr.f32.mxu0 0.0
    %310 = vmatmul.mubr.f32.gmra.mxu0 %v122
    %v311 = vpop.f32.mrf.mxu0
    %v312 = vadd.f32 %v76, %v311
    %v313 = vpop.f32.mrf.mxu0
    %314 = vmatprep.mubr.f32.mxu0 0.0
    %315 = vmatmul.mubr.f32.gmra.mxu0 %v125
    %v316 = vpop.f32.mrf.mxu0
    %v317 = vadd.f32 %v76, %v316
    %v318 = vpop.f32.mrf.mxu0
    %319 = vmatprep.mubr.f32.mxu0 0.0
    %320 = vmatmul.mubr.f32.gmra.mxu0 %v128
    %v321 = vpop.f32.mrf.mxu0
    %v322 = vadd.f32 %v76, %v321
    %v323 = vpop.f32.mrf.mxu0
    %324 = vmatprep.mubr.f32.mxu0 0.0
    %325 = vmatmul.mubr.f32.gmra.mxu0 %v131
    %v326 = vpop.f32.mrf.mxu0
    %v327 = vadd.f32 %v76, %v326
    %v328 = vpop.f32.mrf.mxu0
    %329 = vmatprep.mubr.f32.mxu0 0.0
    %330 = vmatmul.mubr.f32.gmra.mxu0 %v134
    %v331 = vpop.f32.mrf.mxu0
    %v332 = vadd.f32 %v76, %v331
    %v333 = vpop.f32.mrf.mxu0
    %334 = vmatprep.mubr.f32.mxu0 0.0
    %335 = vmatmul.mubr.f32.gmra.mxu0 %v137
    %v336 = vpop.f32.mrf.mxu0
    %v337 = vadd.f32 %v76, %v336
    %v338 = vpop.f32.mrf.mxu0
    %339 = vmatprep.mubr.f32.mxu0 0.0
    %340 = vmatmul.mubr.f32.gmra.mxu0 %v140
    %v341 = vpop.f32.mrf.mxu0
    %v342 = vadd.f32 %v76, %v341
    %v343 = vpop.f32.mrf.mxu0
    %344 = vmatprep.mubr.f32.mxu0 0.0
    %345 = vmatmul.mubr.f32.gmra.mxu0 %v143
    %v346 = vpop.f32.mrf.mxu0
    %v347 = vadd.f32 %v76, %v346
    %v348 = vpop.f32.mrf.mxu0
    %349 = vmatprep.mubr.f32.mxu0 0.0
    %350 = vmatmul.mubr.f32.gmra.mxu0 %v146
    %v351 = vpop.f32.mrf.mxu0
    %v352 = vadd.f32 %v76, %v351
    %v353 = vpop.f32.mrf.mxu0
    %354 = vmatprep.mubr.f32.mxu0 0.0
    %355 = vmatmul.mubr.f32.gmra.mxu0 %v149
    %v356 = vpop.f32.mrf.mxu0
    %v357 = vadd.f32 %v76, %v356
    %v358 = vpop.f32.mrf.mxu0
    %359 = vmatprep.mubr.f32.mxu0 0.0
    %360 = vmatmul.mubr.f32.gmra.mxu0 %v152
    %v361 = vpop.f32.mrf.mxu0
    %v362 = vadd.f32 %v76, %v361
    %v363 = vpop.f32.mrf.mxu0
    %364 = vmatprep.mubr.f32.mxu0 0.0
    %365 = vmatmul.mubr.f32.gmra.mxu0 %v155
    %v366 = vpop.f32.mrf.mxu0
    %v367 = vadd.f32 %v76, %v366
    %v368 = vpop.f32.mrf.mxu0
    %369 = vmatprep.mubr.f32.mxu0 0.0
    %370 = vmatmul.mubr.f32.gmra.mxu0 %v158
    %v371 = vpop.f32.mrf.mxu0
    %v372 = vadd.f32 %v76, %v371
    %v373 = vpop.f32.mrf.mxu0
    %374 = vmatprep.mubr.f32.mxu0 0.0
    %375 = vmatmul.mubr.f32.gmra.mxu0 %v161
    %v376 = vpop.f32.mrf.mxu0
    %v377 = vadd.f32 %v76, %v376
    %v378 = vpop.f32.mrf.mxu0
    %379 = vmatprep.mubr.f32.mxu0 0.0
    %380 = vmatmul.mubr.f32.gmra.mxu0 %v164
    %v381 = vpop.f32.mrf.mxu0
    %v382 = vadd.f32 %v76, %v381
    %v383 = vpop.f32.mrf.mxu0
    %384 = vmatprep.mubr.f32.mxu0 0.0
    %385 = vmatmul.mubr.f32.gmra.mxu0 %v167
    %v386 = vpop.f32.mrf.mxu0
    %v387 = vadd.f32 %v76, %v386
    %v388 = vpop.f32.mrf.mxu0
    %389 = vmatprep.mubr.f32.mxu0 0.0
    %390 = vmatmul.mubr.f32.gmra.mxu0 %v170
    %v391 = vpop.f32.mrf.mxu0
    %v392 = vadd.f32 %v76, %v391
    %v393 = vpop.f32.mrf.mxu0
    %394 = vmatprep.mubr.f32.mxu0 0.0
    %395 = vmatmul.mubr.f32.gmra.mxu0 %v173
    %v396 = vpop.f32.mrf.mxu0
    %v397 = vadd.f32 %v76, %v396
    %v398 = vpop.f32.mrf.mxu0
    %399 = vdwg.mxu0
    %v400 = vmax.f32 %v242, 0.0
    %v401 = vmax.f32 %v247, 0.0
    %v402 = vmax.f32 %v252, 0.0
    %v403 = vmax.f32 %v257, 0.0
    %v404 = vmax.f32 %v262, 0.0
    %v405 = vmax.f32 %v267, 0.0
    %v406 = vmax.f32 %v272, 0.0
    %v407 = vmax.f32 %v277, 0.0
    %v408 = vmax.f32 %v282, 0.0
    %v409 = vmax.f32 %v287, 0.0
    %v410 = vmax.f32 %v292, 0.0
    %v411 = vmax.f32 %v297, 0.0
    %v412 = vmax.f32 %v302, 0.0
    %v413 = vmax.f32 %v307, 0.0
    %v414 = vmax.f32 %v312, 0.0
    %v415 = vmax.f32 %v317, 0.0
    %v416 = vmax.f32 %v322, 0.0
    %v417 = vmax.f32 %v327, 0.0
    %v418 = vmax.f32 %v332, 0.0
    %v419 = vmax.f32 %v337, 0.0
    %v420 = vmax.f32 %v342, 0.0
    %v421 = vmax.f32 %v347, 0.0
    %v422 = vmax.f32 %v352, 0.0
    %v423 = vmax.f32 %v357, 0.0
    %v424 = vmax.f32 %v362, 0.0
    %v425 = vmax.f32 %v367, 0.0
    %v426 = vmax.f32 %v372, 0.0
    %v427 = vmax.f32 %v377, 0.0
    %v428 = vmax.f32 %v382, 0.0
    %v429 = vmax.f32 %v387, 0.0
    %v430 = vmax.f32 %v392, 0.0
    %v431 = vmax.f32 %v397, 0.0
    %v432 = vld [vmem:[%s4] sm:$0xff]
    %v433 = vld [vmem:[%s4 + $0x8] sm:$0xff]
    %v434 = vld [vmem:[%s4 + $0x10] sm:$0xff]
    %v435 = vld [vmem:[%s4 + $0x18] sm:$0xff]
    %v436 = vld [vmem:[%s4 + $0x20] sm:$0xff]
    %v437 = vld [vmem:[%s4 + $0x28] sm:$0xff]
    %v438 = vld [vmem:[%s4 + $0x30] sm:$0xff]
    %v439 = vld [vmem:[%s4 + $0x38] sm:$0xff]
    %v440 = vld [vmem:[%s1] sm:$0xff]
    %v441 = vld [vmem:[%s1 + $0x8] sm:$0xff]
    %v442 = vld [vmem:[%s1 + $0x10] sm:$0xff]
    %v443 = vld [vmem:[%s1 + $0x18] sm:$0xff]
    %v444 = vld [vmem:[%s1 + $0x20] sm:$0xff]
    %v445 = vld [vmem:[%s1 + $0x28] sm:$0xff]
    %v446 = vld [vmem:[%s1 + $0x30] sm:$0xff]
    %v447 = vld [vmem:[%s1 + $0x38] sm:$0xff]
    %v448 = vld [vmem:[%s1 + $0x40] sm:$0xff]
    %v449 = vld [vmem:[%s1 + $0x48] sm:$0xff]
    %v450 = vld [vmem:[%s1 + $0x50] sm:$0xff]
    %v451 = vld [vmem:[%s1 + $0x58] sm:$0xff]
    %v452 = vld [vmem:[%s1 + $0x60] sm:$0xff]
    %v453 = vld [vmem:[%s1 + $0x68] sm:$0xff]
    %v454 = vld [vmem:[%s1 + $0x70] sm:$0xff]
    %v455 = vld [vmem:[%s1 + $0x78] sm:$0xff]
    %v456 = vld [vmem:[%s1 + $0x80] sm:$0xff]
    %v457 = vld [vmem:[%s1 + $0x88] sm:$0xff]
    %v458 = vld [vmem:[%s1 + $0x90] sm:$0xff]
    %v459 = vld [vmem:[%s1 + $0x98] sm:$0xff]
    %v460 = vld [vmem:[%s1 + $0xa0] sm:$0xff]
    %v461 = vld [vmem:[%s1 + $0xa8] sm:$0xff]
    %v462 = vld [vmem:[%s1 + $0xb0] sm:$0xff]
    %v463 = vld [vmem:[%s1 + $0xb8] sm:$0xff]
    %v464 = vld [vmem:[%s1 + $0xc0] sm:$0xff]
    %v465 = vld [vmem:[%s1 + $0xc8] sm:$0xff]
    %v466 = vld [vmem:[%s1 + $0xd0] sm:$0xff]
    %v467 = vld [vmem:[%s1 + $0xd8] sm:$0xff]
    %v468 = vld [vmem:[%s1 + $0xe0] sm:$0xff]
    %v469 = vld [vmem:[%s1 + $0xe8] sm:$0xff]
    %v470 = vld [vmem:[%s1 + $0xf0] sm:$0xff]
    %v471 = vld [vmem:[%s1 + $0xf8] sm:$0xff]
    %vm472 = vcmask 261120
    %v474 = vsel %vm472, %v440, 0
    %v477 = vsel %vm472, %v441, 0
    %v480 = vsel %vm472, %v442, 0
    %v483 = vsel %vm472, %v443, 0
    %v486 = vsel %vm472, %v444, 0
    %v489 = vsel %vm472, %v445, 0
    %v492 = vsel %vm472, %v446, 0
    %v495 = vsel %vm472, %v447, 0
    %v498 = vsel %vm472, %v448, 0
    %v501 = vsel %vm472, %v449, 0
    %v504 = vsel %vm472, %v450, 0
    %v507 = vsel %vm472, %v451, 0
    %v510 = vsel %vm472, %v452, 0
    %v513 = vsel %vm472, %v453, 0
    %v516 = vsel %vm472, %v454, 0
    %v519 = vsel %vm472, %v455, 0
    %v522 = vsel %vm472, %v456, 0
    %v525 = vsel %vm472, %v457, 0
    %v528 = vsel %vm472, %v458, 0
    %v531 = vsel %vm472, %v459, 0
    %v534 = vsel %vm472, %v460, 0
    %v537 = vsel %vm472, %v461, 0
    %v540 = vsel %vm472, %v462, 0
    %v543 = vsel %vm472, %v463, 0
    %v546 = vsel %vm472, %v464, 0
    %v549 = vsel %vm472, %v465, 0
    %v552 = vsel %vm472, %v466, 0
    %v555 = vsel %vm472, %v467, 0
    %v558 = vsel %vm472, %v468, 0
    %v561 = vsel %vm472, %v469, 0
    %v564 = vsel %vm472, %v470, 0
    %v567 = vsel %vm472, %v471, 0
    %569 = vmatprep.subr.mxu0 0.0
    %570 = vmatpush1.msra.mxu0 0.0
    %571 = vmatprep.subr.mxu0 0.0
    %572 = vmatpush1.msra.mxu0 0.0
    %573 = vmatprep.subr.mxu0 0.0
    %574 = vmatpush1.msra.mxu0 0.0
    %575 = vmatprep.subr.mxu0 0.0
    %576 = vmatpush1.msra.mxu0 0.0
    %577 = vmatprep.subr.mxu0 0.0
    %578 = vmatpush1.msra.mxu0 0.0
    %579 = vmatprep.subr.mxu0 0.0
    %580 = vmatpush1.msra.mxu0 0.0
    %581 = vmatprep.subr.mxu0 0.0
    %582 = vmatpush1.msra.mxu0 0.0
    %583 = vmatprep.subr.mxu0 0.0
    %584 = vmatpush1.msra.mxu0 0.0
    %585 = vmatprep.subr.mxu0 0.0
    %586 = vmatpush1.msra.mxu0 0.0
    %587 = vmatprep.subr.mxu0 0.0
    %588 = vmatpush1.msra.mxu0 0.0
    %589 = vmatprep.subr.mxu0 0.0
    %590 = vmatpush1.msra.mxu0 0.0
    %591 = vmatprep.subr.mxu0 0.0
    %592 = vmatpush1.msra.mxu0 0.0
    %593 = vmatprep.subr.mxu0 0.0
    %594 = vmatpush1.msra.mxu0 %v439
    %595 = vmatprep.subr.mxu0 0.0
    %596 = vmatpush1.msra.mxu0 %v438
    %597 = vmatprep.subr.mxu0 0.0
    %598 = vmatpush1.msra.mxu0 %v437
    %599 = vmatprep.subr.mxu0 0.0
    %600 = vmatpush1.msra.mxu0 %v436
    %601 = vmatprep.subr.mxu0 0.0
    %602 = vmatpush2.msra.mxu0 0.0
    %603 = vmatprep.subr.mxu0 0.0
    %604 = vmatpush2.msra.mxu0 0.0
    %605 = vmatprep.subr.mxu0 0.0
    %606 = vmatpush2.msra.mxu0 0.0
    %607 = vmatprep.subr.mxu0 0.0
    %608 = vmatpush2.msra.mxu0 0.0
    %609 = vmatprep.subr.mxu0 0.0
    %610 = vmatpush2.msra.mxu0 0.0
    %611 = vmatprep.subr.mxu0 0.0
    %612 = vmatpush2.msra.mxu0 0.0
    %613 = vmatprep.subr.mxu0 0.0
    %614 = vmatpush2.msra.mxu0 0.0
    %615 = vmatprep.subr.mxu0 0.0
    %616 = vmatpush2.msra.mxu0 0.0
    %617 = vmatprep.subr.mxu0 0.0
    %618 = vmatpush2.msra.mxu0 0.0
    %619 = vmatprep.subr.mxu0 0.0
    %620 = vmatpush2.msra.mxu0 0.0
    %621 = vmatprep.subr.mxu0 0.0
    %622 = vmatpush2.msra.mxu0 0.0
    %623 = vmatprep.subr.mxu0 0.0
    %624 = vmatpush2.msra.mxu0 0.0
    %625 = vmatprep.subr.mxu0 0.0
    %626 = vmatpush2.msra.mxu0 0.0
    %627 = vmatprep.subr.mxu0 0.0
    %628 = vmatpush2.msra.mxu0 0.0
    %629 = vmatprep.subr.mxu0 0.0
    %630 = vmatpush2.msra.mxu0 0.0
    %631 = vmatprep.subr.mxu0 0.0
    %632 = vmatpush2.msra.mxu0 0.0
    %633 = vmatprep.mubr.f32.mxu0 0.0
    %634 = vmatmul.mubr.f32.gmra.mxu0 %v474
    %v635 = vpop.f32.mrf.mxu0
    %v636 = vadd.f32 0.0, %v635
    %v637 = vpop.f32.mrf.mxu0
    %638 = vmatprep.mubr.f32.mxu0 0.0
    %639 = vmatmul.mubr.f32.gmra.mxu0 %v477
    %v640 = vpop.f32.mrf.mxu0
    %v641 = vadd.f32 0.0, %v640
    %v642 = vpop.f32.mrf.mxu0
    %643 = vmatprep.mubr.f32.mxu0 0.0
    %644 = vmatmul.mubr.f32.gmra.mxu0 %v480
    %v645 = vpop.f32.mrf.mxu0
    %v646 = vadd.f32 0.0, %v645
    %v647 = vpop.f32.mrf.mxu0
    %648 = vmatprep.mubr.f32.mxu0 0.0
    %649 = vmatmul.mubr.f32.gmra.mxu0 %v483
    %v650 = vpop.f32.mrf.mxu0
    %v651 = vadd.f32 0.0, %v650
    %v652 = vpop.f32.mrf.mxu0
    %653 = vmatprep.mubr.f32.mxu0 0.0
    %654 = vmatmul.mubr.f32.gmra.mxu0 %v486
    %v655 = vpop.f32.mrf.mxu0
    %v656 = vadd.f32 0.0, %v655
    %v657 = vpop.f32.mrf.mxu0
    %658 = vmatprep.mubr.f32.mxu0 0.0
    %659 = vmatmul.mubr.f32.gmra.mxu0 %v489
    %v660 = vpop.f32.mrf.mxu0
    %v661 = vadd.f32 0.0, %v660
    %v662 = vpop.f32.mrf.mxu0
    %663 = vmatprep.mubr.f32.mxu0 0.0
    %664 = vmatmul.mubr.f32.gmra.mxu0 %v492
    %v665 = vpop.f32.mrf.mxu0
    %v666 = vadd.f32 0.0, %v665
    %v667 = vpop.f32.mrf.mxu0
    %668 = vmatprep.mubr.f32.mxu0 0.0
    %669 = vmatmul.mubr.f32.gmra.mxu0 %v495
    %v670 = vpop.f32.mrf.mxu0
    %v671 = vadd.f32 0.0, %v670
    %v672 = vpop.f32.mrf.mxu0
    %673 = vmatprep.mubr.f32.mxu0 0.0
    %674 = vmatmul.mubr.f32.gmra.mxu0 %v498
    %v675 = vpop.f32.mrf.mxu0
    %v676 = vadd.f32 0.0, %v675
    %v677 = vpop.f32.mrf.mxu0
    %678 = vmatprep.mubr.f32.mxu0 0.0
    %679 = vmatmul.mubr.f32.gmra.mxu0 %v501
    %v680 = vpop.f32.mrf.mxu0
    %v681 = vadd.f32 0.0, %v680
    %v682 = vpop.f32.mrf.mxu0
    %683 = vmatprep.mubr.f32.mxu0 0.0
    %684 = vmatmul.mubr.f32.gmra.mxu0 %v504
    %v685 = vpop.f32.mrf.mxu0
    %v686 = vadd.f32 0.0, %v685
    %v687 = vpop.f32.mrf.mxu0
    %688 = vmatprep.mubr.f32.mxu0 0.0
    %689 = vmatmul.mubr.f32.gmra.mxu0 %v507
    %v690 = vpop.f32.mrf.mxu0
    %v691 = vadd.f32 0.0, %v690
    %v692 = vpop.f32.mrf.mxu0
    %693 = vmatprep.mubr.f32.mxu0 0.0
    %694 = vmatmul.mubr.f32.gmra.mxu0 %v510
    %v695 = vpop.f32.mrf.mxu0
    %v696 = vadd.f32 0.0, %v695
    %v697 = vpop.f32.mrf.mxu0
    %698 = vmatprep.mubr.f32.mxu0 0.0
    %699 = vmatmul.mubr.f32.gmra.mxu0 %v513
    %v700 = vpop.f32.mrf.mxu0
    %v701 = vadd.f32 0.0, %v700
    %v702 = vpop.f32.mrf.mxu0
    %703 = vmatprep.mubr.f32.mxu0 0.0
    %704 = vmatmul.mubr.f32.gmra.mxu0 %v516
    %v705 = vpop.f32.mrf.mxu0
    %v706 = vadd.f32 0.0, %v705
    %v707 = vpop.f32.mrf.mxu0
    %708 = vmatprep.mubr.f32.mxu0 0.0
    %709 = vmatmul.mubr.f32.gmra.mxu0 %v519
    %v710 = vpop.f32.mrf.mxu0
    %v711 = vadd.f32 0.0, %v710
    %v712 = vpop.f32.mrf.mxu0
    %713 = vmatprep.mubr.f32.mxu0 0.0
    %714 = vmatmul.mubr.f32.gmra.mxu0 %v522
    %v715 = vpop.f32.mrf.mxu0
    %v716 = vadd.f32 0.0, %v715
    %v717 = vpop.f32.mrf.mxu0
    %718 = vmatprep.mubr.f32.mxu0 0.0
    %719 = vmatmul.mubr.f32.gmra.mxu0 %v525
    %v720 = vpop.f32.mrf.mxu0
    %v721 = vadd.f32 0.0, %v720
    %v722 = vpop.f32.mrf.mxu0
    %723 = vmatprep.mubr.f32.mxu0 0.0
    %724 = vmatmul.mubr.f32.gmra.mxu0 %v528
    %v725 = vpop.f32.mrf.mxu0
    %v726 = vadd.f32 0.0, %v725
    %v727 = vpop.f32.mrf.mxu0
    %728 = vmatprep.mubr.f32.mxu0 0.0
    %729 = vmatmul.mubr.f32.gmra.mxu0 %v531
    %v730 = vpop.f32.mrf.mxu0
    %v731 = vadd.f32 0.0, %v730
    %v732 = vpop.f32.mrf.mxu0
    %733 = vmatprep.mubr.f32.mxu0 0.0
    %734 = vmatmul.mubr.f32.gmra.mxu0 %v534
    %v735 = vpop.f32.mrf.mxu0
    %v736 = vadd.f32 0.0, %v735
    %v737 = vpop.f32.mrf.mxu0
    %738 = vmatprep.mubr.f32.mxu0 0.0
    %739 = vmatmul.mubr.f32.gmra.mxu0 %v537
    %v740 = vpop.f32.mrf.mxu0
    %v741 = vadd.f32 0.0, %v740
    %v742 = vpop.f32.mrf.mxu0
    %743 = vmatprep.mubr.f32.mxu0 0.0
    %744 = vmatmul.mubr.f32.gmra.mxu0 %v540
    %v745 = vpop.f32.mrf.mxu0
    %v746 = vadd.f32 0.0, %v745
    %v747 = vpop.f32.mrf.mxu0
    %748 = vmatprep.mubr.f32.mxu0 0.0
    %749 = vmatmul.mubr.f32.gmra.mxu0 %v543
    %v750 = vpop.f32.mrf.mxu0
    %v751 = vadd.f32 0.0, %v750
    %v752 = vpop.f32.mrf.mxu0
    %753 = vmatprep.mubr.f32.mxu0 0.0
    %754 = vmatmul.mubr.f32.gmra.mxu0 %v546
    %v755 = vpop.f32.mrf.mxu0
    %v756 = vadd.f32 0.0, %v755
    %v757 = vpop.f32.mrf.mxu0
    %758 = vmatprep.mubr.f32.mxu0 0.0
    %759 = vmatmul.mubr.f32.gmra.mxu0 %v549
    %v760 = vpop.f32.mrf.mxu0
    %v761 = vadd.f32 0.0, %v760
    %v762 = vpop.f32.mrf.mxu0
    %763 = vmatprep.mubr.f32.mxu0 0.0
    %764 = vmatmul.mubr.f32.gmra.mxu0 %v552
    %v765 = vpop.f32.mrf.mxu0
    %v766 = vadd.f32 0.0, %v765
    %v767 = vpop.f32.mrf.mxu0
    %768 = vmatprep.mubr.f32.mxu0 0.0
    %769 = vmatmul.mubr.f32.gmra.mxu0 %v555
    %v770 = vpop.f32.mrf.mxu0
    %v771 = vadd.f32 0.0, %v770
    %v772 = vpop.f32.mrf.mxu0
    %773 = vmatprep.mubr.f32.mxu0 0.0
    %774 = vmatmul.mubr.f32.gmra.mxu0 %v558
    %v775 = vpop.f32.mrf.mxu0
    %v776 = vadd.f32 0.0, %v775
    %v777 = vpop.f32.mrf.mxu0
    %778 = vmatprep.mubr.f32.mxu0 0.0
    %779 = vmatmul.mubr.f32.gmra.mxu0 %v561
    %v780 = vpop.f32.mrf.mxu0
    %v781 = vadd.f32 0.0, %v780
    %v782 = vpop.f32.mrf.mxu0
    %783 = vmatprep.mubr.f32.mxu0 0.0
    %784 = vmatmul.mubr.f32.gmra.mxu0 %v564
    %v785 = vpop.f32.mrf.mxu0
    %v786 = vadd.f32 0.0, %v785
    %v787 = vpop.f32.mrf.mxu0
    %788 = vmatprep.mubr.f32.mxu0 0.0
    %789 = vmatmul.mubr.f32.gmra.mxu0 %v567
    %v790 = vpop.f32.mrf.mxu0
    %v791 = vadd.f32 0.0, %v790
    %v792 = vpop.f32.mrf.mxu0
    %793 = vdwg.mxu0
    %v795 = vsel %vm472, %v400, 0
    %v798 = vsel %vm472, %v401, 0
    %v801 = vsel %vm472, %v402, 0
    %v804 = vsel %vm472, %v403, 0
    %v807 = vsel %vm472, %v404, 0
    %v810 = vsel %vm472, %v405, 0
    %v813 = vsel %vm472, %v406, 0
    %v816 = vsel %vm472, %v407, 0
    %v819 = vsel %vm472, %v408, 0
    %v822 = vsel %vm472, %v409, 0
    %v825 = vsel %vm472, %v410, 0
    %v828 = vsel %vm472, %v411, 0
    %v831 = vsel %vm472, %v412, 0
    %v834 = vsel %vm472, %v413, 0
    %v837 = vsel %vm472, %v414, 0
    %v840 = vsel %vm472, %v415, 0
    %v843 = vsel %vm472, %v416, 0
    %v846 = vsel %vm472, %v417, 0
    %v849 = vsel %vm472, %v418, 0
    %v852 = vsel %vm472, %v419, 0
    %v855 = vsel %vm472, %v420, 0
    %v858 = vsel %vm472, %v421, 0
    %v861 = vsel %vm472, %v422, 0
    %v864 = vsel %vm472, %v423, 0
    %v867 = vsel %vm472, %v424, 0
    %v870 = vsel %vm472, %v425, 0
    %v873 = vsel %vm472, %v426, 0
    %v876 = vsel %vm472, %v427, 0
    %v879 = vsel %vm472, %v428, 0
    %v882 = vsel %vm472, %v429, 0
    %v885 = vsel %vm472, %v430, 0
    %v888 = vsel %vm472, %v431, 0
    %890 = vmatprep.subr.mxu0 0.0
    %891 = vmatpush1.msra.mxu0 0.0
    %892 = vmatprep.subr.mxu0 0.0
    %893 = vmatpush1.msra.mxu0 0.0
    %894 = vmatprep.subr.mxu0 0.0
    %895 = vmatpush1.msra.mxu0 0.0
    %896 = vmatprep.subr.mxu0 0.0
    %897 = vmatpush1.msra.mxu0 0.0
    %898 = vmatprep.subr.mxu0 0.0
    %899 = vmatpush1.msra.mxu0 0.0
    %900 = vmatprep.subr.mxu0 0.0
    %901 = vmatpush1.msra.mxu0 0.0
    %902 = vmatprep.subr.mxu0 0.0
    %903 = vmatpush1.msra.mxu0 0.0
    %904 = vmatprep.subr.mxu0 0.0
    %905 = vmatpush1.msra.mxu0 0.0
    %906 = vmatprep.subr.mxu0 0.0
    %907 = vmatpush1.msra.mxu0 0.0
    %908 = vmatprep.subr.mxu0 0.0
    %909 = vmatpush1.msra.mxu0 0.0
    %910 = vmatprep.subr.mxu0 0.0
    %911 = vmatpush1.msra.mxu0 0.0
    %912 = vmatprep.subr.mxu0 0.0
    %913 = vmatpush1.msra.mxu0 0.0
    %914 = vmatprep.subr.mxu0 0.0
    %915 = vmatpush1.msra.mxu0 %v435
    %916 = vmatprep.subr.mxu0 0.0
    %917 = vmatpush1.msra.mxu0 %v434
    %918 = vmatprep.subr.mxu0 0.0
    %919 = vmatpush1.msra.mxu0 %v433
    %920 = vmatprep.subr.mxu0 0.0
    %921 = vmatpush1.msra.mxu0 %v432
    %922 = vmatprep.subr.mxu0 0.0
    %923 = vmatpush2.msra.mxu0 0.0
    %924 = vmatprep.subr.mxu0 0.0
    %925 = vmatpush2.msra.mxu0 0.0
    %926 = vmatprep.subr.mxu0 0.0
    %927 = vmatpush2.msra.mxu0 0.0
    %928 = vmatprep.subr.mxu0 0.0
    %929 = vmatpush2.msra.mxu0 0.0
    %930 = vmatprep.subr.mxu0 0.0
    %931 = vmatpush2.msra.mxu0 0.0
    %932 = vmatprep.subr.mxu0 0.0
    %933 = vmatpush2.msra.mxu0 0.0
    %934 = vmatprep.subr.mxu0 0.0
    %935 = vmatpush2.msra.mxu0 0.0
    %936 = vmatprep.subr.mxu0 0.0
    %937 = vmatpush2.msra.mxu0 0.0
    %938 = vmatprep.subr.mxu0 0.0
    %939 = vmatpush2.msra.mxu0 0.0
    %940 = vmatprep.subr.mxu0 0.0
    %941 = vmatpush2.msra.mxu0 0.0
    %942 = vmatprep.subr.mxu0 0.0
    %943 = vmatpush2.msra.mxu0 0.0
    %944 = vmatprep.subr.mxu0 0.0
    %945 = vmatpush2.msra.mxu0 0.0
    %946 = vmatprep.subr.mxu0 0.0
    %947 = vmatpush2.msra.mxu0 0.0
    %948 = vmatprep.subr.mxu0 0.0
    %949 = vmatpush2.msra.mxu0 0.0
    %950 = vmatprep.subr.mxu0 0.0
    %951 = vmatpush2.msra.mxu0 0.0
    %952 = vmatprep.subr.mxu0 0.0
    %953 = vmatpush2.msra.mxu0 0.0
    %954 = vmatprep.mubr.f32.mxu0 0.0
    %955 = vmatmul.mubr.f32.gmra.mxu0 %v795
    %v956 = vpop.f32.mrf.mxu0
    %v957 = vadd.f32 %v636, %v956
    %v958 = vpop.f32.mrf.mxu0
    %959 = vmatprep.mubr.f32.mxu0 0.0
    %960 = vmatmul.mubr.f32.gmra.mxu0 %v798
    %v961 = vpop.f32.mrf.mxu0
    %v962 = vadd.f32 %v641, %v961
    %v963 = vpop.f32.mrf.mxu0
    %964 = vmatprep.mubr.f32.mxu0 0.0
    %965 = vmatmul.mubr.f32.gmra.mxu0 %v801
    %v966 = vpop.f32.mrf.mxu0
    %v967 = vadd.f32 %v646, %v966
    %v968 = vpop.f32.mrf.mxu0
    %969 = vmatprep.mubr.f32.mxu0 0.0
    %970 = vmatmul.mubr.f32.gmra.mxu0 %v804
    %v971 = vpop.f32.mrf.mxu0
    %v972 = vadd.f32 %v651, %v971
    %v973 = vpop.f32.mrf.mxu0
    %974 = vmatprep.mubr.f32.mxu0 0.0
    %975 = vmatmul.mubr.f32.gmra.mxu0 %v807
    %v976 = vpop.f32.mrf.mxu0
    %v977 = vadd.f32 %v656, %v976
    %v978 = vpop.f32.mrf.mxu0
    %979 = vmatprep.mubr.f32.mxu0 0.0
    %980 = vmatmul.mubr.f32.gmra.mxu0 %v810
    %v981 = vpop.f32.mrf.mxu0
    %v982 = vadd.f32 %v661, %v981
    %v983 = vpop.f32.mrf.mxu0
    %984 = vmatprep.mubr.f32.mxu0 0.0
    %985 = vmatmul.mubr.f32.gmra.mxu0 %v813
    %v986 = vpop.f32.mrf.mxu0
    %v987 = vadd.f32 %v666, %v986
    %v988 = vpop.f32.mrf.mxu0
    %989 = vmatprep.mubr.f32.mxu0 0.0
    %990 = vmatmul.mubr.f32.gmra.mxu0 %v816
    %v991 = vpop.f32.mrf.mxu0
    %v992 = vadd.f32 %v671, %v991
    %v993 = vpop.f32.mrf.mxu0
    %994 = vmatprep.mubr.f32.mxu0 0.0
    %995 = vmatmul.mubr.f32.gmra.mxu0 %v819
    %v996 = vpop.f32.mrf.mxu0
    %v997 = vadd.f32 %v676, %v996
    %v998 = vpop.f32.mrf.mxu0
    %999 = vmatprep.mubr.f32.mxu0 0.0
    %1000 = vmatmul.mubr.f32.gmra.mxu0 %v822
    %v1001 = vpop.f32.mrf.mxu0
    %v1002 = vadd.f32 %v681, %v1001
    %v1003 = vpop.f32.mrf.mxu0
    %1004 = vmatprep.mubr.f32.mxu0 0.0
    %1005 = vmatmul.mubr.f32.gmra.mxu0 %v825
    %v1006 = vpop.f32.mrf.mxu0
    %v1007 = vadd.f32 %v686, %v1006
    %v1008 = vpop.f32.mrf.mxu0
    %1009 = vmatprep.mubr.f32.mxu0 0.0
    %1010 = vmatmul.mubr.f32.gmra.mxu0 %v828
    %v1011 = vpop.f32.mrf.mxu0
    %v1012 = vadd.f32 %v691, %v1011
    %v1013 = vpop.f32.mrf.mxu0
    %1014 = vmatprep.mubr.f32.mxu0 0.0
    %1015 = vmatmul.mubr.f32.gmra.mxu0 %v831
    %v1016 = vpop.f32.mrf.mxu0
    %v1017 = vadd.f32 %v696, %v1016
    %v1018 = vpop.f32.mrf.mxu0
    %1019 = vmatprep.mubr.f32.mxu0 0.0
    %1020 = vmatmul.mubr.f32.gmra.mxu0 %v834
    %v1021 = vpop.f32.mrf.mxu0
    %v1022 = vadd.f32 %v701, %v1021
    %v1023 = vpop.f32.mrf.mxu0
    %1024 = vmatprep.mubr.f32.mxu0 0.0
    %1025 = vmatmul.mubr.f32.gmra.mxu0 %v837
    %v1026 = vpop.f32.mrf.mxu0
    %v1027 = vadd.f32 %v706, %v1026
    %v1028 = vpop.f32.mrf.mxu0
    %1029 = vmatprep.mubr.f32.mxu0 0.0
    %1030 = vmatmul.mubr.f32.gmra.mxu0 %v840
    %v1031 = vpop.f32.mrf.mxu0
    %v1032 = vadd.f32 %v711, %v1031
    %v1033 = vpop.f32.mrf.mxu0
    %1034 = vmatprep.mubr.f32.mxu0 0.0
    %1035 = vmatmul.mubr.f32.gmra.mxu0 %v843
    %v1036 = vpop.f32.mrf.mxu0
    %v1037 = vadd.f32 %v716, %v1036
    %v1038 = vpop.f32.mrf.mxu0
    %1039 = vmatprep.mubr.f32.mxu0 0.0
    %1040 = vmatmul.mubr.f32.gmra.mxu0 %v846
    %v1041 = vpop.f32.mrf.mxu0
    %v1042 = vadd.f32 %v721, %v1041
    %v1043 = vpop.f32.mrf.mxu0
    %1044 = vmatprep.mubr.f32.mxu0 0.0
    %1045 = vmatmul.mubr.f32.gmra.mxu0 %v849
    %v1046 = vpop.f32.mrf.mxu0
    %v1047 = vadd.f32 %v726, %v1046
    %v1048 = vpop.f32.mrf.mxu0
    %1049 = vmatprep.mubr.f32.mxu0 0.0
    %1050 = vmatmul.mubr.f32.gmra.mxu0 %v852
    %v1051 = vpop.f32.mrf.mxu0
    %v1052 = vadd.f32 %v731, %v1051
    %v1053 = vpop.f32.mrf.mxu0
    %1054 = vmatprep.mubr.f32.mxu0 0.0
    %1055 = vmatmul.mubr.f32.gmra.mxu0 %v855
    %v1056 = vpop.f32.mrf.mxu0
    %v1057 = vadd.f32 %v736, %v1056
    %v1058 = vpop.f32.mrf.mxu0
    %1059 = vmatprep.mubr.f32.mxu0 0.0
    %1060 = vmatmul.mubr.f32.gmra.mxu0 %v858
    %v1061 = vpop.f32.mrf.mxu0
    %v1062 = vadd.f32 %v741, %v1061
    %v1063 = vpop.f32.mrf.mxu0
    %1064 = vmatprep.mubr.f32.mxu0 0.0
    %1065 = vmatmul.mubr.f32.gmra.mxu0 %v861
    %v1066 = vpop.f32.mrf.mxu0
    %v1067 = vadd.f32 %v746, %v1066
    %v1068 = vpop.f32.mrf.mxu0
    %1069 = vmatprep.mubr.f32.mxu0 0.0
    %1070 = vmatmul.mubr.f32.gmra.mxu0 %v864
    %v1071 = vpop.f32.mrf.mxu0
    %v1072 = vadd.f32 %v751, %v1071
    %v1073 = vpop.f32.mrf.mxu0
    %1074 = vmatprep.mubr.f32.mxu0 0.0
    %1075 = vmatmul.mubr.f32.gmra.mxu0 %v867
    %v1076 = vpop.f32.mrf.mxu0
    %v1077 = vadd.f32 %v756, %v1076
    %v1078 = vpop.f32.mrf.mxu0
    %1079 = vmatprep.mubr.f32.mxu0 0.0
    %1080 = vmatmul.mubr.f32.gmra.mxu0 %v870
    %v1081 = vpop.f32.mrf.mxu0
    %v1082 = vadd.f32 %v761, %v1081
    %v1083 = vpop.f32.mrf.mxu0
    %1084 = vmatprep.mubr.f32.mxu0 0.0
    %1085 = vmatmul.mubr.f32.gmra.mxu0 %v873
    %v1086 = vpop.f32.mrf.mxu0
    %v1087 = vadd.f32 %v766, %v1086
    %v1088 = vpop.f32.mrf.mxu0
    %1089 = vmatprep.mubr.f32.mxu0 0.0
    %1090 = vmatmul.mubr.f32.gmra.mxu0 %v876
    %v1091 = vpop.f32.mrf.mxu0
    %v1092 = vadd.f32 %v771, %v1091
    %v1093 = vpop.f32.mrf.mxu0
    %1094 = vmatprep.mubr.f32.mxu0 0.0
    %1095 = vmatmul.mubr.f32.gmra.mxu0 %v879
    %v1096 = vpop.f32.mrf.mxu0
    %v1097 = vadd.f32 %v776, %v1096
    %v1098 = vpop.f32.mrf.mxu0
    %1099 = vmatprep.mubr.f32.mxu0 0.0
    %1100 = vmatmul.mubr.f32.gmra.mxu0 %v882
    %v1101 = vpop.f32.mrf.mxu0
    %v1102 = vadd.f32 %v781, %v1101
    %v1103 = vpop.f32.mrf.mxu0
    %1104 = vmatprep.mubr.f32.mxu0 0.0
    %1105 = vmatmul.mubr.f32.gmra.mxu0 %v885
    %v1106 = vpop.f32.mrf.mxu0
    %v1107 = vadd.f32 %v786, %v1106
    %v1108 = vpop.f32.mrf.mxu0
    %1109 = vmatprep.mubr.f32.mxu0 0.0
    %1110 = vmatmul.mubr.f32.gmra.mxu0 %v888
    %v1111 = vpop.f32.mrf.mxu0
    %v1112 = vadd.f32 %v791, %v1111
    %v1113 = vpop.f32.mrf.mxu0
    %1114 = vdwg.mxu0
    %v1115 = vld [vmem:[%s5] sm:$0x1]
    %v1117 = vlaneseq
    %v1118 = vshrl.u32 %v1117, 7
    %v1119 = vsub.s32 0, %v1118
    %v1120 = vrot.slane %v1115, %v1119
    %v1122 = vadd.f32 %v957, %v1120
    %v1123 = vadd.f32 %v962, %v1120
    %v1124 = vadd.f32 %v967, %v1120
    %v1125 = vadd.f32 %v972, %v1120
    %v1126 = vadd.f32 %v977, %v1120
    %v1127 = vadd.f32 %v982, %v1120
    %v1128 = vadd.f32 %v987, %v1120
    %v1129 = vadd.f32 %v992, %v1120
    %v1130 = vadd.f32 %v997, %v1120
    %v1131 = vadd.f32 %v1002, %v1120
    %v1132 = vadd.f32 %v1007, %v1120
    %v1133 = vadd.f32 %v1012, %v1120
    %v1134 = vadd.f32 %v1017, %v1120
    %v1135 = vadd.f32 %v1022, %v1120
    %v1136 = vadd.f32 %v1027, %v1120
    %v1137 = vadd.f32 %v1032, %v1120
    %v1138 = vadd.f32 %v1037, %v1120
    %v1139 = vadd.f32 %v1042, %v1120
    %v1140 = vadd.f32 %v1047, %v1120
    %v1141 = vadd.f32 %v1052, %v1120
    %v1142 = vadd.f32 %v1057, %v1120
    %v1143 = vadd.f32 %v1062, %v1120
    %v1144 = vadd.f32 %v1067, %v1120
    %v1145 = vadd.f32 %v1072, %v1120
    %v1146 = vadd.f32 %v1077, %v1120
    %v1147 = vadd.f32 %v1082, %v1120
    %v1148 = vadd.f32 %v1087, %v1120
    %v1149 = vadd.f32 %v1092, %v1120
    %v1150 = vadd.f32 %v1097, %v1120
    %v1151 = vadd.f32 %v1102, %v1120
    %v1152 = vadd.f32 %v1107, %v1120
    %v1153 = vadd.f32 %v1112, %v1120
    %v1154 = vmax.f32 %v1122, 0.0
    %v1155 = vmax.f32 %v1123, 0.0
    %v1156 = vmax.f32 %v1124, 0.0
    %v1157 = vmax.f32 %v1125, 0.0
    %v1158 = vmax.f32 %v1126, 0.0
    %v1159 = vmax.f32 %v1127, 0.0
    %v1160 = vmax.f32 %v1128, 0.0
    %v1161 = vmax.f32 %v1129, 0.0
    %v1162 = vmax.f32 %v1130, 0.0
    %v1163 = vmax.f32 %v1131, 0.0
    %v1164 = vmax.f32 %v1132, 0.0
    %v1165 = vmax.f32 %v1133, 0.0
    %v1166 = vmax.f32 %v1134, 0.0
    %v1167 = vmax.f32 %v1135, 0.0
    %v1168 = vmax.f32 %v1136, 0.0
    %v1169 = vmax.f32 %v1137, 0.0
    %v1170 = vmax.f32 %v1138, 0.0
    %v1171 = vmax.f32 %v1139, 0.0
    %v1172 = vmax.f32 %v1140, 0.0
    %v1173 = vmax.f32 %v1141, 0.0
    %v1174 = vmax.f32 %v1142, 0.0
    %v1175 = vmax.f32 %v1143, 0.0
    %v1176 = vmax.f32 %v1144, 0.0
    %v1177 = vmax.f32 %v1145, 0.0
    %v1178 = vmax.f32 %v1146, 0.0
    %v1179 = vmax.f32 %v1147, 0.0
    %v1180 = vmax.f32 %v1148, 0.0
    %v1181 = vmax.f32 %v1149, 0.0
    %v1182 = vmax.f32 %v1150, 0.0
    %v1183 = vmax.f32 %v1151, 0.0
    %v1184 = vmax.f32 %v1152, 0.0
    %v1185 = vmax.f32 %v1153, 0.0
    %v1186 = vld [vmem:[%s6] sm:$0x1]
    %v1188 = vlaneseq
    %v1189 = vshrl.u32 %v1188, 7
    %v1190 = vsub.s32 0, %v1189
    %v1191 = vrot.slane %v1186, %v1190
    %v1193 = vmul.f32 %v1154, %v1191
    %v1194 = vmul.f32 %v1155, %v1191
    %v1195 = vmul.f32 %v1156, %v1191
    %v1196 = vmul.f32 %v1157, %v1191
    %v1197 = vmul.f32 %v1158, %v1191
    %v1198 = vmul.f32 %v1159, %v1191
    %v1199 = vmul.f32 %v1160, %v1191
    %v1200 = vmul.f32 %v1161, %v1191
    %v1201 = vmul.f32 %v1162, %v1191
    %v1202 = vmul.f32 %v1163, %v1191
    %v1203 = vmul.f32 %v1164, %v1191
    %v1204 = vmul.f32 %v1165, %v1191
    %v1205 = vmul.f32 %v1166, %v1191
    %v1206 = vmul.f32 %v1167, %v1191
    %v1207 = vmul.f32 %v1168, %v1191
    %v1208 = vmul.f32 %v1169, %v1191
    %v1209 = vmul.f32 %v1170, %v1191
    %v1210 = vmul.f32 %v1171, %v1191
    %v1211 = vmul.f32 %v1172, %v1191
    %v1212 = vmul.f32 %v1173, %v1191
    %v1213 = vmul.f32 %v1174, %v1191
    %v1214 = vmul.f32 %v1175, %v1191
    %v1215 = vmul.f32 %v1176, %v1191
    %v1216 = vmul.f32 %v1177, %v1191
    %v1217 = vmul.f32 %v1178, %v1191
    %v1218 = vmul.f32 %v1179, %v1191
    %v1219 = vmul.f32 %v1180, %v1191
    %v1220 = vmul.f32 %v1181, %v1191
    %v1221 = vmul.f32 %v1182, %v1191
    %v1222 = vmul.f32 %v1183, %v1191
    %v1223 = vmul.f32 %v1184, %v1191
    %v1224 = vmul.f32 %v1185, %v1191
    %v1225 = vsel %vm472, %v1193, 0.0
    %1226 = vadd.xlane.f32.xlu0 %v1225
    %v1227 = vpop.xlane.xlu0 %1226
    %v1228 = vsel %vm472, %v1194, 0.0
    %1229 = vadd.xlane.f32.xlu0 %v1228
    %v1230 = vpop.xlane.xlu0 %1229
    %v1231 = vsel %vm472, %v1195, 0.0
    %1232 = vadd.xlane.f32.xlu0 %v1231
    %v1233 = vpop.xlane.xlu0 %1232
    %v1234 = vsel %vm472, %v1196, 0.0
    %1235 = vadd.xlane.f32.xlu0 %v1234
    %v1236 = vpop.xlane.xlu0 %1235
    %v1237 = vsel %vm472, %v1197, 0.0
    %1238 = vadd.xlane.f32.xlu0 %v1237
    %v1239 = vpop.xlane.xlu0 %1238
    %v1240 = vsel %vm472, %v1198, 0.0
    %1241 = vadd.xlane.f32.xlu0 %v1240
    %v1242 = vpop.xlane.xlu0 %1241
    %v1243 = vsel %vm472, %v1199, 0.0
    %1244 = vadd.xlane.f32.xlu0 %v1243
    %v1245 = vpop.xlane.xlu0 %1244
    %v1246 = vsel %vm472, %v1200, 0.0
    %1247 = vadd.xlane.f32.xlu0 %v1246
    %v1248 = vpop.xlane.xlu0 %1247
    %v1249 = vsel %vm472, %v1201, 0.0
    %1250 = vadd.xlane.f32.xlu0 %v1249
    %v1251 = vpop.xlane.xlu0 %1250
    %v1252 = vsel %vm472, %v1202, 0.0
    %1253 = vadd.xlane.f32.xlu0 %v1252
    %v1254 = vpop.xlane.xlu0 %1253
    %v1255 = vsel %vm472, %v1203, 0.0
    %1256 = vadd.xlane.f32.xlu0 %v1255
    %v1257 = vpop.xlane.xlu0 %1256
    %v1258 = vsel %vm472, %v1204, 0.0
    %1259 = vadd.xlane.f32.xlu0 %v1258
    %v1260 = vpop.xlane.xlu0 %1259
    %v1261 = vsel %vm472, %v1205, 0.0
    %1262 = vadd.xlane.f32.xlu0 %v1261
    %v1263 = vpop.xlane.xlu0 %1262
    %v1264 = vsel %vm472, %v1206, 0.0
    %1265 = vadd.xlane.f32.xlu0 %v1264
    %v1266 = vpop.xlane.xlu0 %1265
    %v1267 = vsel %vm472, %v1207, 0.0
    %1268 = vadd.xlane.f32.xlu0 %v1267
    %v1269 = vpop.xlane.xlu0 %1268
    %v1270 = vsel %vm472, %v1208, 0.0
    %1271 = vadd.xlane.f32.xlu0 %v1270
    %v1272 = vpop.xlane.xlu0 %1271
    %v1273 = vsel %vm472, %v1209, 0.0
    %1274 = vadd.xlane.f32.xlu0 %v1273
    %v1275 = vpop.xlane.xlu0 %1274
    %v1276 = vsel %vm472, %v1210, 0.0
    %1277 = vadd.xlane.f32.xlu0 %v1276
    %v1278 = vpop.xlane.xlu0 %1277
    %v1279 = vsel %vm472, %v1211, 0.0
    %1280 = vadd.xlane.f32.xlu0 %v1279
    %v1281 = vpop.xlane.xlu0 %1280
    %v1282 = vsel %vm472, %v1212, 0.0
    %1283 = vadd.xlane.f32.xlu0 %v1282
    %v1284 = vpop.xlane.xlu0 %1283
    %v1285 = vsel %vm472, %v1213, 0.0
    %1286 = vadd.xlane.f32.xlu0 %v1285
    %v1287 = vpop.xlane.xlu0 %1286
    %v1288 = vsel %vm472, %v1214, 0.0
    %1289 = vadd.xlane.f32.xlu0 %v1288
    %v1290 = vpop.xlane.xlu0 %1289
    %v1291 = vsel %vm472, %v1215, 0.0
    %1292 = vadd.xlane.f32.xlu0 %v1291
    %v1293 = vpop.xlane.xlu0 %1292
    %v1294 = vsel %vm472, %v1216, 0.0
    %1295 = vadd.xlane.f32.xlu0 %v1294
    %v1296 = vpop.xlane.xlu0 %1295
    %v1297 = vsel %vm472, %v1217, 0.0
    %1298 = vadd.xlane.f32.xlu0 %v1297
    %v1299 = vpop.xlane.xlu0 %1298
    %v1300 = vsel %vm472, %v1218, 0.0
    %1301 = vadd.xlane.f32.xlu0 %v1300
    %v1302 = vpop.xlane.xlu0 %1301
    %v1303 = vsel %vm472, %v1219, 0.0
    %1304 = vadd.xlane.f32.xlu0 %v1303
    %v1305 = vpop.xlane.xlu0 %1304
    %v1306 = vsel %vm472, %v1220, 0.0
    %1307 = vadd.xlane.f32.xlu0 %v1306
    %v1308 = vpop.xlane.xlu0 %1307
    %v1309 = vsel %vm472, %v1221, 0.0
    %1310 = vadd.xlane.f32.xlu0 %v1309
    %v1311 = vpop.xlane.xlu0 %1310
    %v1312 = vsel %vm472, %v1222, 0.0
    %1313 = vadd.xlane.f32.xlu0 %v1312
    %v1314 = vpop.xlane.xlu0 %1313
    %v1315 = vsel %vm472, %v1223, 0.0
    %1316 = vadd.xlane.f32.xlu0 %v1315
    %v1317 = vpop.xlane.xlu0 %1316
    %v1318 = vsel %vm472, %v1224, 0.0
    %1319 = vadd.xlane.f32.xlu0 %v1318
    %v1320 = vpop.xlane.xlu0 %1319
    %s1321 = sld [smem:[#allocation2]]
    %v1322 = vstv %s1321
    %v1323 = vadd.f32 %v1227, %v1322
    %v1324 = vadd.f32 %v1230, %v1322
    %v1325 = vadd.f32 %v1233, %v1322
    %v1326 = vadd.f32 %v1236, %v1322
    %v1327 = vadd.f32 %v1239, %v1322
    %v1328 = vadd.f32 %v1242, %v1322
    %v1329 = vadd.f32 %v1245, %v1322
    %v1330 = vadd.f32 %v1248, %v1322
    %v1331 = vadd.f32 %v1251, %v1322
    %v1332 = vadd.f32 %v1254, %v1322
    %v1333 = vadd.f32 %v1257, %v1322
    %v1334 = vadd.f32 %v1260, %v1322
    %v1335 = vadd.f32 %v1263, %v1322
    %v1336 = vadd.f32 %v1266, %v1322
    %v1337 = vadd.f32 %v1269, %v1322
    %v1338 = vadd.f32 %v1272, %v1322
    %v1339 = vadd.f32 %v1275, %v1322
    %v1340 = vadd.f32 %v1278, %v1322
    %v1341 = vadd.f32 %v1281, %v1322
    %v1342 = vadd.f32 %v1284, %v1322
    %v1343 = vadd.f32 %v1287, %v1322
    %v1344 = vadd.f32 %v1290, %v1322
    %v1345 = vadd.f32 %v1293, %v1322
    %v1346 = vadd.f32 %v1296, %v1322
    %v1347 = vadd.f32 %v1299, %v1322
    %v1348 = vadd.f32 %v1302, %v1322
    %v1349 = vadd.f32 %v1305, %v1322
    %v1350 = vadd.f32 %v1308, %v1322
    %v1351 = vadd.f32 %v1311, %v1322
    %v1352 = vadd.f32 %v1314, %v1322
    %v1353 = vadd.f32 %v1317, %v1322
    %v1354 = vadd.f32 %v1320, %v1322
    %v1387 = vlaneseq
    %v1388 = vshrl.u32 %v1387, 7
    %v1389 = vsub.s32 0, %v1388
    %v1390 = vrot.slane %v1323, %v1389
    %v1391 = vlaneseq
    %v1392 = vshrl.u32 %v1391, 7
    %v1393 = vsub.s32 1, %v1392
    %v1394 = vrot.slane %v1323, %v1393
    %v1395 = vlaneseq
    %v1396 = vshrl.u32 %v1395, 7
    %v1397 = vsub.s32 2, %v1396
    %v1398 = vrot.slane %v1323, %v1397
    %v1399 = vlaneseq
    %v1400 = vshrl.u32 %v1399, 7
    %v1401 = vsub.s32 3, %v1400
    %v1402 = vrot.slane %v1323, %v1401
    %v1403 = vlaneseq
    %v1404 = vshrl.u32 %v1403, 7
    %v1405 = vsub.s32 4, %v1404
    %v1406 = vrot.slane %v1323, %v1405
    %v1407 = vlaneseq
    %v1408 = vshrl.u32 %v1407, 7
    %v1409 = vsub.s32 5, %v1408
    %v1410 = vrot.slane %v1323, %v1409
    %v1411 = vlaneseq
    %v1412 = vshrl.u32 %v1411, 7
    %v1413 = vsub.s32 6, %v1412
    %v1414 = vrot.slane %v1323, %v1413
    %v1415 = vlaneseq
    %v1416 = vshrl.u32 %v1415, 7
    %v1417 = vsub.s32 7, %v1416
    %v1418 = vrot.slane %v1323, %v1417
    %v1419 = vlaneseq
    %v1420 = vshrl.u32 %v1419, 7
    %v1421 = vsub.s32 0, %v1420
    %v1422 = vrot.slane %v1324, %v1421
    %v1423 = vlaneseq
    %v1424 = vshrl.u32 %v1423, 7
    %v1425 = vsub.s32 1, %v1424
    %v1426 = vrot.slane %v1324, %v1425
    %v1427 = vlaneseq
    %v1428 = vshrl.u32 %v1427, 7
    %v1429 = vsub.s32 2, %v1428
    %v1430 = vrot.slane %v1324, %v1429
    %v1431 = vlaneseq
    %v1432 = vshrl.u32 %v1431, 7
    %v1433 = vsub.s32 3, %v1432
    %v1434 = vrot.slane %v1324, %v1433
    %v1435 = vlaneseq
    %v1436 = vshrl.u32 %v1435, 7
    %v1437 = vsub.s32 4, %v1436
    %v1438 = vrot.slane %v1324, %v1437
    %v1439 = vlaneseq
    %v1440 = vshrl.u32 %v1439, 7
    %v1441 = vsub.s32 5, %v1440
    %v1442 = vrot.slane %v1324, %v1441
    %v1443 = vlaneseq
    %v1444 = vshrl.u32 %v1443, 7
    %v1445 = vsub.s32 6, %v1444
    %v1446 = vrot.slane %v1324, %v1445
    %v1447 = vlaneseq
    %v1448 = vshrl.u32 %v1447, 7
    %v1449 = vsub.s32 7, %v1448
    %v1450 = vrot.slane %v1324, %v1449
    %v1451 = vlaneseq
    %v1452 = vshrl.u32 %v1451, 7
    %v1453 = vsub.s32 0, %v1452
    %v1454 = vrot.slane %v1325, %v1453
    %v1455 = vlaneseq
    %v1456 = vshrl.u32 %v1455, 7
    %v1457 = vsub.s32 1, %v1456
    %v1458 = vrot.slane %v1325, %v1457
    %v1459 = vlaneseq
    %v1460 = vshrl.u32 %v1459, 7
    %v1461 = vsub.s32 2, %v1460
    %v1462 = vrot.slane %v1325, %v1461
    %v1463 = vlaneseq
    %v1464 = vshrl.u32 %v1463, 7
    %v1465 = vsub.s32 3, %v1464
    %v1466 = vrot.slane %v1325, %v1465
    %v1467 = vlaneseq
    %v1468 = vshrl.u32 %v1467, 7
    %v1469 = vsub.s32 4, %v1468
    %v1470 = vrot.slane %v1325, %v1469
    %v1471 = vlaneseq
    %v1472 = vshrl.u32 %v1471, 7
    %v1473 = vsub.s32 5, %v1472
    %v1474 = vrot.slane %v1325, %v1473
    %v1475 = vlaneseq
    %v1476 = vshrl.u32 %v1475, 7
    %v1477 = vsub.s32 6, %v1476
    %v1478 = vrot.slane %v1325, %v1477
    %v1479 = vlaneseq
    %v1480 = vshrl.u32 %v1479, 7
    %v1481 = vsub.s32 7, %v1480
    %v1482 = vrot.slane %v1325, %v1481
    %v1483 = vlaneseq
    %v1484 = vshrl.u32 %v1483, 7
    %v1485 = vsub.s32 0, %v1484
    %v1486 = vrot.slane %v1326, %v1485
    %v1487 = vlaneseq
    %v1488 = vshrl.u32 %v1487, 7
    %v1489 = vsub.s32 1, %v1488
    %v1490 = vrot.slane %v1326, %v1489
    %v1491 = vlaneseq
    %v1492 = vshrl.u32 %v1491, 7
    %v1493 = vsub.s32 2, %v1492
    %v1494 = vrot.slane %v1326, %v1493
    %v1495 = vlaneseq
    %v1496 = vshrl.u32 %v1495, 7
    %v1497 = vsub.s32 3, %v1496
    %v1498 = vrot.slane %v1326, %v1497
    %v1499 = vlaneseq
    %v1500 = vshrl.u32 %v1499, 7
    %v1501 = vsub.s32 4, %v1500
    %v1502 = vrot.slane %v1326, %v1501
    %v1503 = vlaneseq
    %v1504 = vshrl.u32 %v1503, 7
    %v1505 = vsub.s32 5, %v1504
    %v1506 = vrot.slane %v1326, %v1505
    %v1507 = vlaneseq
    %v1508 = vshrl.u32 %v1507, 7
    %v1509 = vsub.s32 6, %v1508
    %v1510 = vrot.slane %v1326, %v1509
    %v1511 = vlaneseq
    %v1512 = vshrl.u32 %v1511, 7
    %v1513 = vsub.s32 7, %v1512
    %v1514 = vrot.slane %v1326, %v1513
    %v1515 = vlaneseq
    %v1516 = vshrl.u32 %v1515, 7
    %v1517 = vsub.s32 0, %v1516
    %v1518 = vrot.slane %v1327, %v1517
    %v1519 = vlaneseq
    %v1520 = vshrl.u32 %v1519, 7
    %v1521 = vsub.s32 1, %v1520
    %v1522 = vrot.slane %v1327, %v1521
    %v1523 = vlaneseq
    %v1524 = vshrl.u32 %v1523, 7
    %v1525 = vsub.s32 2, %v1524
    %v1526 = vrot.slane %v1327, %v1525
    %v1527 = vlaneseq
    %v1528 = vshrl.u32 %v1527, 7
    %v1529 = vsub.s32 3, %v1528
    %v1530 = vrot.slane %v1327, %v1529
    %v1531 = vlaneseq
    %v1532 = vshrl.u32 %v1531, 7
    %v1533 = vsub.s32 4, %v1532
    %v1534 = vrot.slane %v1327, %v1533
    %v1535 = vlaneseq
    %v1536 = vshrl.u32 %v1535, 7
    %v1537 = vsub.s32 5, %v1536
    %v1538 = vrot.slane %v1327, %v1537
    %v1539 = vlaneseq
    %v1540 = vshrl.u32 %v1539, 7
    %v1541 = vsub.s32 6, %v1540
    %v1542 = vrot.slane %v1327, %v1541
    %v1543 = vlaneseq
    %v1544 = vshrl.u32 %v1543, 7
    %v1545 = vsub.s32 7, %v1544
    %v1546 = vrot.slane %v1327, %v1545
    %v1547 = vlaneseq
    %v1548 = vshrl.u32 %v1547, 7
    %v1549 = vsub.s32 0, %v1548
    %v1550 = vrot.slane %v1328, %v1549
    %v1551 = vlaneseq
    %v1552 = vshrl.u32 %v1551, 7
    %v1553 = vsub.s32 1, %v1552
    %v1554 = vrot.slane %v1328, %v1553
    %v1555 = vlaneseq
    %v1556 = vshrl.u32 %v1555, 7
    %v1557 = vsub.s32 2, %v1556
    %v1558 = vrot.slane %v1328, %v1557
    %v1559 = vlaneseq
    %v1560 = vshrl.u32 %v1559, 7
    %v1561 = vsub.s32 3, %v1560
    %v1562 = vrot.slane %v1328, %v1561
    %v1563 = vlaneseq
    %v1564 = vshrl.u32 %v1563, 7
    %v1565 = vsub.s32 4, %v1564
    %v1566 = vrot.slane %v1328, %v1565
    %v1567 = vlaneseq
    %v1568 = vshrl.u32 %v1567, 7
    %v1569 = vsub.s32 5, %v1568
    %v1570 = vrot.slane %v1328, %v1569
    %v1571 = vlaneseq
    %v1572 = vshrl.u32 %v1571, 7
    %v1573 = vsub.s32 6, %v1572
    %v1574 = vrot.slane %v1328, %v1573
    %v1575 = vlaneseq
    %v1576 = vshrl.u32 %v1575, 7
    %v1577 = vsub.s32 7, %v1576
    %v1578 = vrot.slane %v1328, %v1577
    %v1579 = vlaneseq
    %v1580 = vshrl.u32 %v1579, 7
    %v1581 = vsub.s32 0, %v1580
    %v1582 = vrot.slane %v1329, %v1581
    %v1583 = vlaneseq
    %v1584 = vshrl.u32 %v1583, 7
    %v1585 = vsub.s32 1, %v1584
    %v1586 = vrot.slane %v1329, %v1585
    %v1587 = vlaneseq
    %v1588 = vshrl.u32 %v1587, 7
    %v1589 = vsub.s32 2, %v1588
    %v1590 = vrot.slane %v1329, %v1589
    %v1591 = vlaneseq
    %v1592 = vshrl.u32 %v1591, 7
    %v1593 = vsub.s32 3, %v1592
    %v1594 = vrot.slane %v1329, %v1593
    %v1595 = vlaneseq
    %v1596 = vshrl.u32 %v1595, 7
    %v1597 = vsub.s32 4, %v1596
    %v1598 = vrot.slane %v1329, %v1597
    %v1599 = vlaneseq
    %v1600 = vshrl.u32 %v1599, 7
    %v1601 = vsub.s32 5, %v1600
    %v1602 = vrot.slane %v1329, %v1601
    %v1603 = vlaneseq
    %v1604 = vshrl.u32 %v1603, 7
    %v1605 = vsub.s32 6, %v1604
    %v1606 = vrot.slane %v1329, %v1605
    %v1607 = vlaneseq
    %v1608 = vshrl.u32 %v1607, 7
    %v1609 = vsub.s32 7, %v1608
    %v1610 = vrot.slane %v1329, %v1609
    %v1611 = vlaneseq
    %v1612 = vshrl.u32 %v1611, 7
    %v1613 = vsub.s32 0, %v1612
    %v1614 = vrot.slane %v1330, %v1613
    %v1615 = vlaneseq
    %v1616 = vshrl.u32 %v1615, 7
    %v1617 = vsub.s32 1, %v1616
    %v1618 = vrot.slane %v1330, %v1617
    %v1619 = vlaneseq
    %v1620 = vshrl.u32 %v1619, 7
    %v1621 = vsub.s32 2, %v1620
    %v1622 = vrot.slane %v1330, %v1621
    %v1623 = vlaneseq
    %v1624 = vshrl.u32 %v1623, 7
    %v1625 = vsub.s32 3, %v1624
    %v1626 = vrot.slane %v1330, %v1625
    %v1627 = vlaneseq
    %v1628 = vshrl.u32 %v1627, 7
    %v1629 = vsub.s32 4, %v1628
    %v1630 = vrot.slane %v1330, %v1629
    %v1631 = vlaneseq
    %v1632 = vshrl.u32 %v1631, 7
    %v1633 = vsub.s32 5, %v1632
    %v1634 = vrot.slane %v1330, %v1633
    %v1635 = vlaneseq
    %v1636 = vshrl.u32 %v1635, 7
    %v1637 = vsub.s32 6, %v1636
    %v1638 = vrot.slane %v1330, %v1637
    %v1639 = vlaneseq
    %v1640 = vshrl.u32 %v1639, 7
    %v1641 = vsub.s32 7, %v1640
    %v1642 = vrot.slane %v1330, %v1641
    %v1643 = vlaneseq
    %v1644 = vshrl.u32 %v1643, 7
    %v1645 = vsub.s32 0, %v1644
    %v1646 = vrot.slane %v1331, %v1645
    %v1647 = vlaneseq
    %v1648 = vshrl.u32 %v1647, 7
    %v1649 = vsub.s32 1, %v1648
    %v1650 = vrot.slane %v1331, %v1649
    %v1651 = vlaneseq
    %v1652 = vshrl.u32 %v1651, 7
    %v1653 = vsub.s32 2, %v1652
    %v1654 = vrot.slane %v1331, %v1653
    %v1655 = vlaneseq
    %v1656 = vshrl.u32 %v1655, 7
    %v1657 = vsub.s32 3, %v1656
    %v1658 = vrot.slane %v1331, %v1657
    %v1659 = vlaneseq
    %v1660 = vshrl.u32 %v1659, 7
    %v1661 = vsub.s32 4, %v1660
    %v1662 = vrot.slane %v1331, %v1661
    %v1663 = vlaneseq
    %v1664 = vshrl.u32 %v1663, 7
    %v1665 = vsub.s32 5, %v1664
    %v1666 = vrot.slane %v1331, %v1665
    %v1667 = vlaneseq
    %v1668 = vshrl.u32 %v1667, 7
    %v1669 = vsub.s32 6, %v1668
    %v1670 = vrot.slane %v1331, %v1669
    %v1671 = vlaneseq
    %v1672 = vshrl.u32 %v1671, 7
    %v1673 = vsub.s32 7, %v1672
    %v1674 = vrot.slane %v1331, %v1673
    %v1675 = vlaneseq
    %v1676 = vshrl.u32 %v1675, 7
    %v1677 = vsub.s32 0, %v1676
    %v1678 = vrot.slane %v1332, %v1677
    %v1679 = vlaneseq
    %v1680 = vshrl.u32 %v1679, 7
    %v1681 = vsub.s32 1, %v1680
    %v1682 = vrot.slane %v1332, %v1681
    %v1683 = vlaneseq
    %v1684 = vshrl.u32 %v1683, 7
    %v1685 = vsub.s32 2, %v1684
    %v1686 = vrot.slane %v1332, %v1685
    %v1687 = vlaneseq
    %v1688 = vshrl.u32 %v1687, 7
    %v1689 = vsub.s32 3, %v1688
    %v1690 = vrot.slane %v1332, %v1689
    %v1691 = vlaneseq
    %v1692 = vshrl.u32 %v1691, 7
    %v1693 = vsub.s32 4, %v1692
    %v1694 = vrot.slane %v1332, %v1693
    %v1695 = vlaneseq
    %v1696 = vshrl.u32 %v1695, 7
    %v1697 = vsub.s32 5, %v1696
    %v1698 = vrot.slane %v1332, %v1697
    %v1699 = vlaneseq
    %v1700 = vshrl.u32 %v1699, 7
    %v1701 = vsub.s32 6, %v1700
    %v1702 = vrot.slane %v1332, %v1701
    %v1703 = vlaneseq
    %v1704 = vshrl.u32 %v1703, 7
    %v1705 = vsub.s32 7, %v1704
    %v1706 = vrot.slane %v1332, %v1705
    %v1707 = vlaneseq
    %v1708 = vshrl.u32 %v1707, 7
    %v1709 = vsub.s32 0, %v1708
    %v1710 = vrot.slane %v1333, %v1709
    %v1711 = vlaneseq
    %v1712 = vshrl.u32 %v1711, 7
    %v1713 = vsub.s32 1, %v1712
    %v1714 = vrot.slane %v1333, %v1713
    %v1715 = vlaneseq
    %v1716 = vshrl.u32 %v1715, 7
    %v1717 = vsub.s32 2, %v1716
    %v1718 = vrot.slane %v1333, %v1717
    %v1719 = vlaneseq
    %v1720 = vshrl.u32 %v1719, 7
    %v1721 = vsub.s32 3, %v1720
    %v1722 = vrot.slane %v1333, %v1721
    %v1723 = vlaneseq
    %v1724 = vshrl.u32 %v1723, 7
    %v1725 = vsub.s32 4, %v1724
    %v1726 = vrot.slane %v1333, %v1725
    %v1727 = vlaneseq
    %v1728 = vshrl.u32 %v1727, 7
    %v1729 = vsub.s32 5, %v1728
    %v1730 = vrot.slane %v1333, %v1729
    %v1731 = vlaneseq
    %v1732 = vshrl.u32 %v1731, 7
    %v1733 = vsub.s32 6, %v1732
    %v1734 = vrot.slane %v1333, %v1733
    %v1735 = vlaneseq
    %v1736 = vshrl.u32 %v1735, 7
    %v1737 = vsub.s32 7, %v1736
    %v1738 = vrot.slane %v1333, %v1737
    %v1739 = vlaneseq
    %v1740 = vshrl.u32 %v1739, 7
    %v1741 = vsub.s32 0, %v1740
    %v1742 = vrot.slane %v1334, %v1741
    %v1743 = vlaneseq
    %v1744 = vshrl.u32 %v1743, 7
    %v1745 = vsub.s32 1, %v1744
    %v1746 = vrot.slane %v1334, %v1745
    %v1747 = vlaneseq
    %v1748 = vshrl.u32 %v1747, 7
    %v1749 = vsub.s32 2, %v1748
    %v1750 = vrot.slane %v1334, %v1749
    %v1751 = vlaneseq
    %v1752 = vshrl.u32 %v1751, 7
    %v1753 = vsub.s32 3, %v1752
    %v1754 = vrot.slane %v1334, %v1753
    %v1755 = vlaneseq
    %v1756 = vshrl.u32 %v1755, 7
    %v1757 = vsub.s32 4, %v1756
    %v1758 = vrot.slane %v1334, %v1757
    %v1759 = vlaneseq
    %v1760 = vshrl.u32 %v1759, 7
    %v1761 = vsub.s32 5, %v1760
    %v1762 = vrot.slane %v1334, %v1761
    %v1763 = vlaneseq
    %v1764 = vshrl.u32 %v1763, 7
    %v1765 = vsub.s32 6, %v1764
    %v1766 = vrot.slane %v1334, %v1765
    %v1767 = vlaneseq
    %v1768 = vshrl.u32 %v1767, 7
    %v1769 = vsub.s32 7, %v1768
    %v1770 = vrot.slane %v1334, %v1769
    %v1771 = vlaneseq
    %v1772 = vshrl.u32 %v1771, 7
    %v1773 = vsub.s32 0, %v1772
    %v1774 = vrot.slane %v1335, %v1773
    %v1775 = vlaneseq
    %v1776 = vshrl.u32 %v1775, 7
    %v1777 = vsub.s32 1, %v1776
    %v1778 = vrot.slane %v1335, %v1777
    %v1779 = vlaneseq
    %v1780 = vshrl.u32 %v1779, 7
    %v1781 = vsub.s32 2, %v1780
    %v1782 = vrot.slane %v1335, %v1781
    %v1783 = vlaneseq
    %v1784 = vshrl.u32 %v1783, 7
    %v1785 = vsub.s32 3, %v1784
    %v1786 = vrot.slane %v1335, %v1785
    %v1787 = vlaneseq
    %v1788 = vshrl.u32 %v1787, 7
    %v1789 = vsub.s32 4, %v1788
    %v1790 = vrot.slane %v1335, %v1789
    %v1791 = vlaneseq
    %v1792 = vshrl.u32 %v1791, 7
    %v1793 = vsub.s32 5, %v1792
    %v1794 = vrot.slane %v1335, %v1793
    %v1795 = vlaneseq
    %v1796 = vshrl.u32 %v1795, 7
    %v1797 = vsub.s32 6, %v1796
    %v1798 = vrot.slane %v1335, %v1797
    %v1799 = vlaneseq
    %v1800 = vshrl.u32 %v1799, 7
    %v1801 = vsub.s32 7, %v1800
    %v1802 = vrot.slane %v1335, %v1801
    %v1803 = vlaneseq
    %v1804 = vshrl.u32 %v1803, 7
    %v1805 = vsub.s32 0, %v1804
    %v1806 = vrot.slane %v1336, %v1805
    %v1807 = vlaneseq
    %v1808 = vshrl.u32 %v1807, 7
    %v1809 = vsub.s32 1, %v1808
    %v1810 = vrot.slane %v1336, %v1809
    %v1811 = vlaneseq
    %v1812 = vshrl.u32 %v1811, 7
    %v1813 = vsub.s32 2, %v1812
    %v1814 = vrot.slane %v1336, %v1813
    %v1815 = vlaneseq
    %v1816 = vshrl.u32 %v1815, 7
    %v1817 = vsub.s32 3, %v1816
    %v1818 = vrot.slane %v1336, %v1817
    %v1819 = vlaneseq
    %v1820 = vshrl.u32 %v1819, 7
    %v1821 = vsub.s32 4, %v1820
    %v1822 = vrot.slane %v1336, %v1821
    %v1823 = vlaneseq
    %v1824 = vshrl.u32 %v1823, 7
    %v1825 = vsub.s32 5, %v1824
    %v1826 = vrot.slane %v1336, %v1825
    %v1827 = vlaneseq
    %v1828 = vshrl.u32 %v1827, 7
    %v1829 = vsub.s32 6, %v1828
    %v1830 = vrot.slane %v1336, %v1829
    %v1831 = vlaneseq
    %v1832 = vshrl.u32 %v1831, 7
    %v1833 = vsub.s32 7, %v1832
    %v1834 = vrot.slane %v1336, %v1833
    %v1835 = vlaneseq
    %v1836 = vshrl.u32 %v1835, 7
    %v1837 = vsub.s32 0, %v1836
    %v1838 = vrot.slane %v1337, %v1837
    %v1839 = vlaneseq
    %v1840 = vshrl.u32 %v1839, 7
    %v1841 = vsub.s32 1, %v1840
    %v1842 = vrot.slane %v1337, %v1841
    %v1843 = vlaneseq
    %v1844 = vshrl.u32 %v1843, 7
    %v1845 = vsub.s32 2, %v1844
    %v1846 = vrot.slane %v1337, %v1845
    %v1847 = vlaneseq
    %v1848 = vshrl.u32 %v1847, 7
    %v1849 = vsub.s32 3, %v1848
    %v1850 = vrot.slane %v1337, %v1849
    %v1851 = vlaneseq
    %v1852 = vshrl.u32 %v1851, 7
    %v1853 = vsub.s32 4, %v1852
    %v1854 = vrot.slane %v1337, %v1853
    %v1855 = vlaneseq
    %v1856 = vshrl.u32 %v1855, 7
    %v1857 = vsub.s32 5, %v1856
    %v1858 = vrot.slane %v1337, %v1857
    %v1859 = vlaneseq
    %v1860 = vshrl.u32 %v1859, 7
    %v1861 = vsub.s32 6, %v1860
    %v1862 = vrot.slane %v1337, %v1861
    %v1863 = vlaneseq
    %v1864 = vshrl.u32 %v1863, 7
    %v1865 = vsub.s32 7, %v1864
    %v1866 = vrot.slane %v1337, %v1865
    %v1867 = vlaneseq
    %v1868 = vshrl.u32 %v1867, 7
    %v1869 = vsub.s32 0, %v1868
    %v1870 = vrot.slane %v1338, %v1869
    %v1871 = vlaneseq
    %v1872 = vshrl.u32 %v1871, 7
    %v1873 = vsub.s32 1, %v1872
    %v1874 = vrot.slane %v1338, %v1873
    %v1875 = vlaneseq
    %v1876 = vshrl.u32 %v1875, 7
    %v1877 = vsub.s32 2, %v1876
    %v1878 = vrot.slane %v1338, %v1877
    %v1879 = vlaneseq
    %v1880 = vshrl.u32 %v1879, 7
    %v1881 = vsub.s32 3, %v1880
    %v1882 = vrot.slane %v1338, %v1881
    %v1883 = vlaneseq
    %v1884 = vshrl.u32 %v1883, 7
    %v1885 = vsub.s32 4, %v1884
    %v1886 = vrot.slane %v1338, %v1885
    %v1887 = vlaneseq
    %v1888 = vshrl.u32 %v1887, 7
    %v1889 = vsub.s32 5, %v1888
    %v1890 = vrot.slane %v1338, %v1889
    %v1891 = vlaneseq
    %v1892 = vshrl.u32 %v1891, 7
    %v1893 = vsub.s32 6, %v1892
    %v1894 = vrot.slane %v1338, %v1893
    %v1895 = vlaneseq
    %v1896 = vshrl.u32 %v1895, 7
    %v1897 = vsub.s32 7, %v1896
    %v1898 = vrot.slane %v1338, %v1897
    %v1899 = vlaneseq
    %v1900 = vshrl.u32 %v1899, 7
    %v1901 = vsub.s32 0, %v1900
    %v1902 = vrot.slane %v1339, %v1901
    %v1903 = vlaneseq
    %v1904 = vshrl.u32 %v1903, 7
    %v1905 = vsub.s32 1, %v1904
    %v1906 = vrot.slane %v1339, %v1905
    %v1907 = vlaneseq
    %v1908 = vshrl.u32 %v1907, 7
    %v1909 = vsub.s32 2, %v1908
    %v1910 = vrot.slane %v1339, %v1909
    %v1911 = vlaneseq
    %v1912 = vshrl.u32 %v1911, 7
    %v1913 = vsub.s32 3, %v1912
    %v1914 = vrot.slane %v1339, %v1913
    %v1915 = vlaneseq
    %v1916 = vshrl.u32 %v1915, 7
    %v1917 = vsub.s32 4, %v1916
    %v1918 = vrot.slane %v1339, %v1917
    %v1919 = vlaneseq
    %v1920 = vshrl.u32 %v1919, 7
    %v1921 = vsub.s32 5, %v1920
    %v1922 = vrot.slane %v1339, %v1921
    %v1923 = vlaneseq
    %v1924 = vshrl.u32 %v1923, 7
    %v1925 = vsub.s32 6, %v1924
    %v1926 = vrot.slane %v1339, %v1925
    %v1927 = vlaneseq
    %v1928 = vshrl.u32 %v1927, 7
    %v1929 = vsub.s32 7, %v1928
    %v1930 = vrot.slane %v1339, %v1929
    %v1931 = vlaneseq
    %v1932 = vshrl.u32 %v1931, 7
    %v1933 = vsub.s32 0, %v1932
    %v1934 = vrot.slane %v1340, %v1933
    %v1935 = vlaneseq
    %v1936 = vshrl.u32 %v1935, 7
    %v1937 = vsub.s32 1, %v1936
    %v1938 = vrot.slane %v1340, %v1937
    %v1939 = vlaneseq
    %v1940 = vshrl.u32 %v1939, 7
    %v1941 = vsub.s32 2, %v1940
    %v1942 = vrot.slane %v1340, %v1941
    %v1943 = vlaneseq
    %v1944 = vshrl.u32 %v1943, 7
    %v1945 = vsub.s32 3, %v1944
    %v1946 = vrot.slane %v1340, %v1945
    %v1947 = vlaneseq
    %v1948 = vshrl.u32 %v1947, 7
    %v1949 = vsub.s32 4, %v1948
    %v1950 = vrot.slane %v1340, %v1949
    %v1951 = vlaneseq
    %v1952 = vshrl.u32 %v1951, 7
    %v1953 = vsub.s32 5, %v1952
    %v1954 = vrot.slane %v1340, %v1953
    %v1955 = vlaneseq
    %v1956 = vshrl.u32 %v1955, 7
    %v1957 = vsub.s32 6, %v1956
    %v1958 = vrot.slane %v1340, %v1957
    %v1959 = vlaneseq
    %v1960 = vshrl.u32 %v1959, 7
    %v1961 = vsub.s32 7, %v1960
    %v1962 = vrot.slane %v1340, %v1961
    %v1963 = vlaneseq
    %v1964 = vshrl.u32 %v1963, 7
    %v1965 = vsub.s32 0, %v1964
    %v1966 = vrot.slane %v1341, %v1965
    %v1967 = vlaneseq
    %v1968 = vshrl.u32 %v1967, 7
    %v1969 = vsub.s32 1, %v1968
    %v1970 = vrot.slane %v1341, %v1969
    %v1971 = vlaneseq
    %v1972 = vshrl.u32 %v1971, 7
    %v1973 = vsub.s32 2, %v1972
    %v1974 = vrot.slane %v1341, %v1973
    %v1975 = vlaneseq
    %v1976 = vshrl.u32 %v1975, 7
    %v1977 = vsub.s32 3, %v1976
    %v1978 = vrot.slane %v1341, %v1977
    %v1979 = vlaneseq
    %v1980 = vshrl.u32 %v1979, 7
    %v1981 = vsub.s32 4, %v1980
    %v1982 = vrot.slane %v1341, %v1981
    %v1983 = vlaneseq
    %v1984 = vshrl.u32 %v1983, 7
    %v1985 = vsub.s32 5, %v1984
    %v1986 = vrot.slane %v1341, %v1985
    %v1987 = vlaneseq
    %v1988 = vshrl.u32 %v1987, 7
    %v1989 = vsub.s32 6, %v1988
    %v1990 = vrot.slane %v1341, %v1989
    %v1991 = vlaneseq
    %v1992 = vshrl.u32 %v1991, 7
    %v1993 = vsub.s32 7, %v1992
    %v1994 = vrot.slane %v1341, %v1993
    %v1995 = vlaneseq
    %v1996 = vshrl.u32 %v1995, 7
    %v1997 = vsub.s32 0, %v1996
    %v1998 = vrot.slane %v1342, %v1997
    %v1999 = vlaneseq
    %v2000 = vshrl.u32 %v1999, 7
    %v2001 = vsub.s32 1, %v2000
    %v2002 = vrot.slane %v1342, %v2001
    %v2003 = vlaneseq
    %v2004 = vshrl.u32 %v2003, 7
    %v2005 = vsub.s32 2, %v2004
    %v2006 = vrot.slane %v1342, %v2005
    %v2007 = vlaneseq
    %v2008 = vshrl.u32 %v2007, 7
    %v2009 = vsub.s32 3, %v2008
    %v2010 = vrot.slane %v1342, %v2009
    %v2011 = vlaneseq
    %v2012 = vshrl.u32 %v2011, 7
    %v2013 = vsub.s32 4, %v2012
    %v2014 = vrot.slane %v1342, %v2013
    %v2015 = vlaneseq
    %v2016 = vshrl.u32 %v2015, 7
    %v2017 = vsub.s32 5, %v2016
    %v2018 = vrot.slane %v1342, %v2017
    %v2019 = vlaneseq
    %v2020 = vshrl.u32 %v2019, 7
    %v2021 = vsub.s32 6, %v2020
    %v2022 = vrot.slane %v1342, %v2021
    %v2023 = vlaneseq
    %v2024 = vshrl.u32 %v2023, 7
    %v2025 = vsub.s32 7, %v2024
    %v2026 = vrot.slane %v1342, %v2025
    %v2027 = vlaneseq
    %v2028 = vshrl.u32 %v2027, 7
    %v2029 = vsub.s32 0, %v2028
    %v2030 = vrot.slane %v1343, %v2029
    %v2031 = vlaneseq
    %v2032 = vshrl.u32 %v2031, 7
    %v2033 = vsub.s32 1, %v2032
    %v2034 = vrot.slane %v1343, %v2033
    %v2035 = vlaneseq
    %v2036 = vshrl.u32 %v2035, 7
    %v2037 = vsub.s32 2, %v2036
    %v2038 = vrot.slane %v1343, %v2037
    %v2039 = vlaneseq
    %v2040 = vshrl.u32 %v2039, 7
    %v2041 = vsub.s32 3, %v2040
    %v2042 = vrot.slane %v1343, %v2041
    %v2043 = vlaneseq
    %v2044 = vshrl.u32 %v2043, 7
    %v2045 = vsub.s32 4, %v2044
    %v2046 = vrot.slane %v1343, %v2045
    %v2047 = vlaneseq
    %v2048 = vshrl.u32 %v2047, 7
    %v2049 = vsub.s32 5, %v2048
    %v2050 = vrot.slane %v1343, %v2049
    %v2051 = vlaneseq
    %v2052 = vshrl.u32 %v2051, 7
    %v2053 = vsub.s32 6, %v2052
    %v2054 = vrot.slane %v1343, %v2053
    %v2055 = vlaneseq
    %v2056 = vshrl.u32 %v2055, 7
    %v2057 = vsub.s32 7, %v2056
    %v2058 = vrot.slane %v1343, %v2057
    %v2059 = vlaneseq
    %v2060 = vshrl.u32 %v2059, 7
    %v2061 = vsub.s32 0, %v2060
    %v2062 = vrot.slane %v1344, %v2061
    %v2063 = vlaneseq
    %v2064 = vshrl.u32 %v2063, 7
    %v2065 = vsub.s32 1, %v2064
    %v2066 = vrot.slane %v1344, %v2065
    %v2067 = vlaneseq
    %v2068 = vshrl.u32 %v2067, 7
    %v2069 = vsub.s32 2, %v2068
    %v2070 = vrot.slane %v1344, %v2069
    %v2071 = vlaneseq
    %v2072 = vshrl.u32 %v2071, 7
    %v2073 = vsub.s32 3, %v2072
    %v2074 = vrot.slane %v1344, %v2073
    %v2075 = vlaneseq
    %v2076 = vshrl.u32 %v2075, 7
    %v2077 = vsub.s32 4, %v2076
    %v2078 = vrot.slane %v1344, %v2077
    %v2079 = vlaneseq
    %v2080 = vshrl.u32 %v2079, 7
    %v2081 = vsub.s32 5, %v2080
    %v2082 = vrot.slane %v1344, %v2081
    %v2083 = vlaneseq
    %v2084 = vshrl.u32 %v2083, 7
    %v2085 = vsub.s32 6, %v2084
    %v2086 = vrot.slane %v1344, %v2085
    %v2087 = vlaneseq
    %v2088 = vshrl.u32 %v2087, 7
    %v2089 = vsub.s32 7, %v2088
    %v2090 = vrot.slane %v1344, %v2089
    %v2091 = vlaneseq
    %v2092 = vshrl.u32 %v2091, 7
    %v2093 = vsub.s32 0, %v2092
    %v2094 = vrot.slane %v1345, %v2093
    %v2095 = vlaneseq
    %v2096 = vshrl.u32 %v2095, 7
    %v2097 = vsub.s32 1, %v2096
    %v2098 = vrot.slane %v1345, %v2097
    %v2099 = vlaneseq
    %v2100 = vshrl.u32 %v2099, 7
    %v2101 = vsub.s32 2, %v2100
    %v2102 = vrot.slane %v1345, %v2101
    %v2103 = vlaneseq
    %v2104 = vshrl.u32 %v2103, 7
    %v2105 = vsub.s32 3, %v2104
    %v2106 = vrot.slane %v1345, %v2105
    %v2107 = vlaneseq
    %v2108 = vshrl.u32 %v2107, 7
    %v2109 = vsub.s32 4, %v2108
    %v2110 = vrot.slane %v1345, %v2109
    %v2111 = vlaneseq
    %v2112 = vshrl.u32 %v2111, 7
    %v2113 = vsub.s32 5, %v2112
    %v2114 = vrot.slane %v1345, %v2113
    %v2115 = vlaneseq
    %v2116 = vshrl.u32 %v2115, 7
    %v2117 = vsub.s32 6, %v2116
    %v2118 = vrot.slane %v1345, %v2117
    %v2119 = vlaneseq
    %v2120 = vshrl.u32 %v2119, 7
    %v2121 = vsub.s32 7, %v2120
    %v2122 = vrot.slane %v1345, %v2121
    %v2123 = vlaneseq
    %v2124 = vshrl.u32 %v2123, 7
    %v2125 = vsub.s32 0, %v2124
    %v2126 = vrot.slane %v1346, %v2125
    %v2127 = vlaneseq
    %v2128 = vshrl.u32 %v2127, 7
    %v2129 = vsub.s32 1, %v2128
    %v2130 = vrot.slane %v1346, %v2129
    %v2131 = vlaneseq
    %v2132 = vshrl.u32 %v2131, 7
    %v2133 = vsub.s32 2, %v2132
    %v2134 = vrot.slane %v1346, %v2133
    %v2135 = vlaneseq
    %v2136 = vshrl.u32 %v2135, 7
    %v2137 = vsub.s32 3, %v2136
    %v2138 = vrot.slane %v1346, %v2137
    %v2139 = vlaneseq
    %v2140 = vshrl.u32 %v2139, 7
    %v2141 = vsub.s32 4, %v2140
    %v2142 = vrot.slane %v1346, %v2141
    %v2143 = vlaneseq
    %v2144 = vshrl.u32 %v2143, 7
    %v2145 = vsub.s32 5, %v2144
    %v2146 = vrot.slane %v1346, %v2145
    %v2147 = vlaneseq
    %v2148 = vshrl.u32 %v2147, 7
    %v2149 = vsub.s32 6, %v2148
    %v2150 = vrot.slane %v1346, %v2149
    %v2151 = vlaneseq
    %v2152 = vshrl.u32 %v2151, 7
    %v2153 = vsub.s32 7, %v2152
    %v2154 = vrot.slane %v1346, %v2153
    %v2155 = vlaneseq
    %v2156 = vshrl.u32 %v2155, 7
    %v2157 = vsub.s32 0, %v2156
    %v2158 = vrot.slane %v1347, %v2157
    %v2159 = vlaneseq
    %v2160 = vshrl.u32 %v2159, 7
    %v2161 = vsub.s32 1, %v2160
    %v2162 = vrot.slane %v1347, %v2161
    %v2163 = vlaneseq
    %v2164 = vshrl.u32 %v2163, 7
    %v2165 = vsub.s32 2, %v2164
    %v2166 = vrot.slane %v1347, %v2165
    %v2167 = vlaneseq
    %v2168 = vshrl.u32 %v2167, 7
    %v2169 = vsub.s32 3, %v2168
    %v2170 = vrot.slane %v1347, %v2169
    %v2171 = vlaneseq
    %v2172 = vshrl.u32 %v2171, 7
    %v2173 = vsub.s32 4, %v2172
    %v2174 = vrot.slane %v1347, %v2173
    %v2175 = vlaneseq
    %v2176 = vshrl.u32 %v2175, 7
    %v2177 = vsub.s32 5, %v2176
    %v2178 = vrot.slane %v1347, %v2177
    %v2179 = vlaneseq
    %v2180 = vshrl.u32 %v2179, 7
    %v2181 = vsub.s32 6, %v2180
    %v2182 = vrot.slane %v1347, %v2181
    %v2183 = vlaneseq
    %v2184 = vshrl.u32 %v2183, 7
    %v2185 = vsub.s32 7, %v2184
    %v2186 = vrot.slane %v1347, %v2185
    %v2187 = vlaneseq
    %v2188 = vshrl.u32 %v2187, 7
    %v2189 = vsub.s32 0, %v2188
    %v2190 = vrot.slane %v1348, %v2189
    %v2191 = vlaneseq
    %v2192 = vshrl.u32 %v2191, 7
    %v2193 = vsub.s32 1, %v2192
    %v2194 = vrot.slane %v1348, %v2193
    %v2195 = vlaneseq
    %v2196 = vshrl.u32 %v2195, 7
    %v2197 = vsub.s32 2, %v2196
    %v2198 = vrot.slane %v1348, %v2197
    %v2199 = vlaneseq
    %v2200 = vshrl.u32 %v2199, 7
    %v2201 = vsub.s32 3, %v2200
    %v2202 = vrot.slane %v1348, %v2201
    %v2203 = vlaneseq
    %v2204 = vshrl.u32 %v2203, 7
    %v2205 = vsub.s32 4, %v2204
    %v2206 = vrot.slane %v1348, %v2205
    %v2207 = vlaneseq
    %v2208 = vshrl.u32 %v2207, 7
    %v2209 = vsub.s32 5, %v2208
    %v2210 = vrot.slane %v1348, %v2209
    %v2211 = vlaneseq
    %v2212 = vshrl.u32 %v2211, 7
    %v2213 = vsub.s32 6, %v2212
    %v2214 = vrot.slane %v1348, %v2213
    %v2215 = vlaneseq
    %v2216 = vshrl.u32 %v2215, 7
    %v2217 = vsub.s32 7, %v2216
    %v2218 = vrot.slane %v1348, %v2217
    %v2219 = vlaneseq
    %v2220 = vshrl.u32 %v2219, 7
    %v2221 = vsub.s32 0, %v2220
    %v2222 = vrot.slane %v1349, %v2221
    %v2223 = vlaneseq
    %v2224 = vshrl.u32 %v2223, 7
    %v2225 = vsub.s32 1, %v2224
    %v2226 = vrot.slane %v1349, %v2225
    %v2227 = vlaneseq
    %v2228 = vshrl.u32 %v2227, 7
    %v2229 = vsub.s32 2, %v2228
    %v2230 = vrot.slane %v1349, %v2229
    %v2231 = vlaneseq
    %v2232 = vshrl.u32 %v2231, 7
    %v2233 = vsub.s32 3, %v2232
    %v2234 = vrot.slane %v1349, %v2233
    %v2235 = vlaneseq
    %v2236 = vshrl.u32 %v2235, 7
    %v2237 = vsub.s32 4, %v2236
    %v2238 = vrot.slane %v1349, %v2237
    %v2239 = vlaneseq
    %v2240 = vshrl.u32 %v2239, 7
    %v2241 = vsub.s32 5, %v2240
    %v2242 = vrot.slane %v1349, %v2241
    %v2243 = vlaneseq
    %v2244 = vshrl.u32 %v2243, 7
    %v2245 = vsub.s32 6, %v2244
    %v2246 = vrot.slane %v1349, %v2245
    %v2247 = vlaneseq
    %v2248 = vshrl.u32 %v2247, 7
    %v2249 = vsub.s32 7, %v2248
    %v2250 = vrot.slane %v1349, %v2249
    %v2251 = vlaneseq
    %v2252 = vshrl.u32 %v2251, 7
    %v2253 = vsub.s32 0, %v2252
    %v2254 = vrot.slane %v1350, %v2253
    %v2255 = vlaneseq
    %v2256 = vshrl.u32 %v2255, 7
    %v2257 = vsub.s32 1, %v2256
    %v2258 = vrot.slane %v1350, %v2257
    %v2259 = vlaneseq
    %v2260 = vshrl.u32 %v2259, 7
    %v2261 = vsub.s32 2, %v2260
    %v2262 = vrot.slane %v1350, %v2261
    %v2263 = vlaneseq
    %v2264 = vshrl.u32 %v2263, 7
    %v2265 = vsub.s32 3, %v2264
    %v2266 = vrot.slane %v1350, %v2265
    %v2267 = vlaneseq
    %v2268 = vshrl.u32 %v2267, 7
    %v2269 = vsub.s32 4, %v2268
    %v2270 = vrot.slane %v1350, %v2269
    %v2271 = vlaneseq
    %v2272 = vshrl.u32 %v2271, 7
    %v2273 = vsub.s32 5, %v2272
    %v2274 = vrot.slane %v1350, %v2273
    %v2275 = vlaneseq
    %v2276 = vshrl.u32 %v2275, 7
    %v2277 = vsub.s32 6, %v2276
    %v2278 = vrot.slane %v1350, %v2277
    %v2279 = vlaneseq
    %v2280 = vshrl.u32 %v2279, 7
    %v2281 = vsub.s32 7, %v2280
    %v2282 = vrot.slane %v1350, %v2281
    %v2283 = vlaneseq
    %v2284 = vshrl.u32 %v2283, 7
    %v2285 = vsub.s32 0, %v2284
    %v2286 = vrot.slane %v1351, %v2285
    %v2287 = vlaneseq
    %v2288 = vshrl.u32 %v2287, 7
    %v2289 = vsub.s32 1, %v2288
    %v2290 = vrot.slane %v1351, %v2289
    %v2291 = vlaneseq
    %v2292 = vshrl.u32 %v2291, 7
    %v2293 = vsub.s32 2, %v2292
    %v2294 = vrot.slane %v1351, %v2293
    %v2295 = vlaneseq
    %v2296 = vshrl.u32 %v2295, 7
    %v2297 = vsub.s32 3, %v2296
    %v2298 = vrot.slane %v1351, %v2297
    %v2299 = vlaneseq
    %v2300 = vshrl.u32 %v2299, 7
    %v2301 = vsub.s32 4, %v2300
    %v2302 = vrot.slane %v1351, %v2301
    %v2303 = vlaneseq
    %v2304 = vshrl.u32 %v2303, 7
    %v2305 = vsub.s32 5, %v2304
    %v2306 = vrot.slane %v1351, %v2305
    %v2307 = vlaneseq
    %v2308 = vshrl.u32 %v2307, 7
    %v2309 = vsub.s32 6, %v2308
    %v2310 = vrot.slane %v1351, %v2309
    %v2311 = vlaneseq
    %v2312 = vshrl.u32 %v2311, 7
    %v2313 = vsub.s32 7, %v2312
    %v2314 = vrot.slane %v1351, %v2313
    %v2315 = vlaneseq
    %v2316 = vshrl.u32 %v2315, 7
    %v2317 = vsub.s32 0, %v2316
    %v2318 = vrot.slane %v1352, %v2317
    %v2319 = vlaneseq
    %v2320 = vshrl.u32 %v2319, 7
    %v2321 = vsub.s32 1, %v2320
    %v2322 = vrot.slane %v1352, %v2321
    %v2323 = vlaneseq
    %v2324 = vshrl.u32 %v2323, 7
    %v2325 = vsub.s32 2, %v2324
    %v2326 = vrot.slane %v1352, %v2325
    %v2327 = vlaneseq
    %v2328 = vshrl.u32 %v2327, 7
    %v2329 = vsub.s32 3, %v2328
    %v2330 = vrot.slane %v1352, %v2329
    %v2331 = vlaneseq
    %v2332 = vshrl.u32 %v2331, 7
    %v2333 = vsub.s32 4, %v2332
    %v2334 = vrot.slane %v1352, %v2333
    %v2335 = vlaneseq
    %v2336 = vshrl.u32 %v2335, 7
    %v2337 = vsub.s32 5, %v2336
    %v2338 = vrot.slane %v1352, %v2337
    %v2339 = vlaneseq
    %v2340 = vshrl.u32 %v2339, 7
    %v2341 = vsub.s32 6, %v2340
    %v2342 = vrot.slane %v1352, %v2341
    %v2343 = vlaneseq
    %v2344 = vshrl.u32 %v2343, 7
    %v2345 = vsub.s32 7, %v2344
    %v2346 = vrot.slane %v1352, %v2345
    %v2347 = vlaneseq
    %v2348 = vshrl.u32 %v2347, 7
    %v2349 = vsub.s32 0, %v2348
    %v2350 = vrot.slane %v1353, %v2349
    %v2351 = vlaneseq
    %v2352 = vshrl.u32 %v2351, 7
    %v2353 = vsub.s32 1, %v2352
    %v2354 = vrot.slane %v1353, %v2353
    %v2355 = vlaneseq
    %v2356 = vshrl.u32 %v2355, 7
    %v2357 = vsub.s32 2, %v2356
    %v2358 = vrot.slane %v1353, %v2357
    %v2359 = vlaneseq
    %v2360 = vshrl.u32 %v2359, 7
    %v2361 = vsub.s32 3, %v2360
    %v2362 = vrot.slane %v1353, %v2361
    %v2363 = vlaneseq
    %v2364 = vshrl.u32 %v2363, 7
    %v2365 = vsub.s32 4, %v2364
    %v2366 = vrot.slane %v1353, %v2365
    %v2367 = vlaneseq
    %v2368 = vshrl.u32 %v2367, 7
    %v2369 = vsub.s32 5, %v2368
    %v2370 = vrot.slane %v1353, %v2369
    %v2371 = vlaneseq
    %v2372 = vshrl.u32 %v2371, 7
    %v2373 = vsub.s32 6, %v2372
    %v2374 = vrot.slane %v1353, %v2373
    %v2375 = vlaneseq
    %v2376 = vshrl.u32 %v2375, 7
    %v2377 = vsub.s32 7, %v2376
    %v2378 = vrot.slane %v1353, %v2377
    %v2379 = vlaneseq
    %v2380 = vshrl.u32 %v2379, 7
    %v2381 = vsub.s32 0, %v2380
    %v2382 = vrot.slane %v1354, %v2381
    %v2383 = vlaneseq
    %v2384 = vshrl.u32 %v2383, 7
    %v2385 = vsub.s32 1, %v2384
    %v2386 = vrot.slane %v1354, %v2385
    %v2387 = vlaneseq
    %v2388 = vshrl.u32 %v2387, 7
    %v2389 = vsub.s32 2, %v2388
    %v2390 = vrot.slane %v1354, %v2389
    %v2391 = vlaneseq
    %v2392 = vshrl.u32 %v2391, 7
    %v2393 = vsub.s32 3, %v2392
    %v2394 = vrot.slane %v1354, %v2393
    %v2395 = vlaneseq
    %v2396 = vshrl.u32 %v2395, 7
    %v2397 = vsub.s32 4, %v2396
    %v2398 = vrot.slane %v1354, %v2397
    %v2399 = vlaneseq
    %v2400 = vshrl.u32 %v2399, 7
    %v2401 = vsub.s32 5, %v2400
    %v2402 = vrot.slane %v1354, %v2401
    %v2403 = vlaneseq
    %v2404 = vshrl.u32 %v2403, 7
    %v2405 = vsub.s32 6, %v2404
    %v2406 = vrot.slane %v1354, %v2405
    %v2407 = vlaneseq
    %v2408 = vshrl.u32 %v2407, 7
    %v2409 = vsub.s32 7, %v2408
    %v2410 = vrot.slane %v1354, %v2409
    %v2411 = vcombine.low %v1390, %v1394
    %v2412 = vcombine.low %v1398, %v1402
    %v2413 = vcombine.low %v1406, %v1410
    %v2414 = vcombine.low %v1414, %v1418
    %v2416 = vunpack.c.l.s4 1966171168
    %v2417 = vunpack.c.0.s8 %v2416
    %v2418 = vlaneseq
    %v2419 = vshrl.u32 %v2418, 7
    %v2420 = vsub.s32 %v2417, %v2419
    %v2421 = vrot.slane %v2411, %v2420
    %v2423 = vunpack.c.l.s4 1966171168
    %v2424 = vunpack.c.0.s8 %v2423
    %v2425 = vlaneseq
    %v2426 = vshrl.u32 %v2425, 7
    %v2427 = vsub.s32 %v2424, %v2426
    %v2428 = vrot.slane %v2412, %v2427
    %v2430 = vunpack.c.l.s4 1966171168
    %v2431 = vunpack.c.0.s8 %v2430
    %v2432 = vlaneseq
    %v2433 = vshrl.u32 %v2432, 7
    %v2434 = vsub.s32 %v2431, %v2433
    %v2435 = vrot.slane %v2413, %v2434
    %v2437 = vunpack.c.l.s4 1966171168
    %v2438 = vunpack.c.0.s8 %v2437
    %v2439 = vlaneseq
    %v2440 = vshrl.u32 %v2439, 7
    %v2441 = vsub.s32 %v2438, %v2440
    %v2442 = vrot.slane %v2414, %v2441
    %v2443 = vcombine.low %v2421, %v2428
    %v2444 = vcombine.low %v2435, %v2442
    %v2446 = vunpack.c.l.s4 1966171168
    %v2447 = vunpack.c.0.s8 %v2446
    %v2448 = vlaneseq
    %v2449 = vshrl.u32 %v2448, 7
    %v2450 = vsub.s32 %v2447, %v2449
    %v2451 = vrot.slane %v2443, %v2450
    %v2453 = vunpack.c.l.s4 1966171168
    %v2454 = vunpack.c.0.s8 %v2453
    %v2455 = vlaneseq
    %v2456 = vshrl.u32 %v2455, 7
    %v2457 = vsub.s32 %v2454, %v2456
    %v2458 = vrot.slane %v2444, %v2457
    %v2459 = vcombine.low %v2451, %v2458
    %v2460 = vcombine.low %v1422, %v1426
    %v2461 = vcombine.low %v1430, %v1434
    %v2462 = vcombine.low %v1438, %v1442
    %v2463 = vcombine.low %v1446, %v1450
    %v2465 = vunpack.c.l.s4 1966171168
    %v2466 = vunpack.c.0.s8 %v2465
    %v2467 = vlaneseq
    %v2468 = vshrl.u32 %v2467, 7
    %v2469 = vsub.s32 %v2466, %v2468
    %v2470 = vrot.slane %v2460, %v2469
    %v2472 = vunpack.c.l.s4 1966171168
    %v2473 = vunpack.c.0.s8 %v2472
    %v2474 = vlaneseq
    %v2475 = vshrl.u32 %v2474, 7
    %v2476 = vsub.s32 %v2473, %v2475
    %v2477 = vrot.slane %v2461, %v2476
    %v2479 = vunpack.c.l.s4 1966171168
    %v2480 = vunpack.c.0.s8 %v2479
    %v2481 = vlaneseq
    %v2482 = vshrl.u32 %v2481, 7
    %v2483 = vsub.s32 %v2480, %v2482
    %v2484 = vrot.slane %v2462, %v2483
    %v2486 = vunpack.c.l.s4 1966171168
    %v2487 = vunpack.c.0.s8 %v2486
    %v2488 = vlaneseq
    %v2489 = vshrl.u32 %v2488, 7
    %v2490 = vsub.s32 %v2487, %v2489
    %v2491 = vrot.slane %v2463, %v2490
    %v2492 = vcombine.low %v2470, %v2477
    %v2493 = vcombine.low %v2484, %v2491
    %v2495 = vunpack.c.l.s4 1966171168
    %v2496 = vunpack.c.0.s8 %v2495
    %v2497 = vlaneseq
    %v2498 = vshrl.u32 %v2497, 7
    %v2499 = vsub.s32 %v2496, %v2498
    %v2500 = vrot.slane %v2492, %v2499
    %v2502 = vunpack.c.l.s4 1966171168
    %v2503 = vunpack.c.0.s8 %v2502
    %v2504 = vlaneseq
    %v2505 = vshrl.u32 %v2504, 7
    %v2506 = vsub.s32 %v2503, %v2505
    %v2507 = vrot.slane %v2493, %v2506
    %v2508 = vcombine.low %v2500, %v2507
    %v2509 = vcombine.low %v1454, %v1458
    %v2510 = vcombine.low %v1462, %v1466
    %v2511 = vcombine.low %v1470, %v1474
    %v2512 = vcombine.low %v1478, %v1482
    %v2514 = vunpack.c.l.s4 1966171168
    %v2515 = vunpack.c.0.s8 %v2514
    %v2516 = vlaneseq
    %v2517 = vshrl.u32 %v2516, 7
    %v2518 = vsub.s32 %v2515, %v2517
    %v2519 = vrot.slane %v2509, %v2518
    %v2521 = vunpack.c.l.s4 1966171168
    %v2522 = vunpack.c.0.s8 %v2521
    %v2523 = vlaneseq
    %v2524 = vshrl.u32 %v2523, 7
    %v2525 = vsub.s32 %v2522, %v2524
    %v2526 = vrot.slane %v2510, %v2525
    %v2528 = vunpack.c.l.s4 1966171168
    %v2529 = vunpack.c.0.s8 %v2528
    %v2530 = vlaneseq
    %v2531 = vshrl.u32 %v2530, 7
    %v2532 = vsub.s32 %v2529, %v2531
    %v2533 = vrot.slane %v2511, %v2532
    %v2535 = vunpack.c.l.s4 1966171168
    %v2536 = vunpack.c.0.s8 %v2535
    %v2537 = vlaneseq
    %v2538 = vshrl.u32 %v2537, 7
    %v2539 = vsub.s32 %v2536, %v2538
    %v2540 = vrot.slane %v2512, %v2539
    %v2541 = vcombine.low %v2519, %v2526
    %v2542 = vcombine.low %v2533, %v2540
    %v2544 = vunpack.c.l.s4 1966171168
    %v2545 = vunpack.c.0.s8 %v2544
    %v2546 = vlaneseq
    %v2547 = vshrl.u32 %v2546, 7
    %v2548 = vsub.s32 %v2545, %v2547
    %v2549 = vrot.slane %v2541, %v2548
    %v2551 = vunpack.c.l.s4 1966171168
    %v2552 = vunpack.c.0.s8 %v2551
    %v2553 = vlaneseq
    %v2554 = vshrl.u32 %v2553, 7
    %v2555 = vsub.s32 %v2552, %v2554
    %v2556 = vrot.slane %v2542, %v2555
    %v2557 = vcombine.low %v2549, %v2556
    %v2558 = vcombine.low %v1486, %v1490
    %v2559 = vcombine.low %v1494, %v1498
    %v2560 = vcombine.low %v1502, %v1506
    %v2561 = vcombine.low %v1510, %v1514
    %v2563 = vunpack.c.l.s4 1966171168
    %v2564 = vunpack.c.0.s8 %v2563
    %v2565 = vlaneseq
    %v2566 = vshrl.u32 %v2565, 7
    %v2567 = vsub.s32 %v2564, %v2566
    %v2568 = vrot.slane %v2558, %v2567
    %v2570 = vunpack.c.l.s4 1966171168
    %v2571 = vunpack.c.0.s8 %v2570
    %v2572 = vlaneseq
    %v2573 = vshrl.u32 %v2572, 7
    %v2574 = vsub.s32 %v2571, %v2573
    %v2575 = vrot.slane %v2559, %v2574
    %v2577 = vunpack.c.l.s4 1966171168
    %v2578 = vunpack.c.0.s8 %v2577
    %v2579 = vlaneseq
    %v2580 = vshrl.u32 %v2579, 7
    %v2581 = vsub.s32 %v2578, %v2580
    %v2582 = vrot.slane %v2560, %v2581
    %v2584 = vunpack.c.l.s4 1966171168
    %v2585 = vunpack.c.0.s8 %v2584
    %v2586 = vlaneseq
    %v2587 = vshrl.u32 %v2586, 7
    %v2588 = vsub.s32 %v2585, %v2587
    %v2589 = vrot.slane %v2561, %v2588
    %v2590 = vcombine.low %v2568, %v2575
    %v2591 = vcombine.low %v2582, %v2589
    %v2593 = vunpack.c.l.s4 1966171168
    %v2594 = vunpack.c.0.s8 %v2593
    %v2595 = vlaneseq
    %v2596 = vshrl.u32 %v2595, 7
    %v2597 = vsub.s32 %v2594, %v2596
    %v2598 = vrot.slane %v2590, %v2597
    %v2600 = vunpack.c.l.s4 1966171168
    %v2601 = vunpack.c.0.s8 %v2600
    %v2602 = vlaneseq
    %v2603 = vshrl.u32 %v2602, 7
    %v2604 = vsub.s32 %v2601, %v2603
    %v2605 = vrot.slane %v2591, %v2604
    %v2606 = vcombine.low %v2598, %v2605
    %v2607 = vcombine.low %v1518, %v1522
    %v2608 = vcombine.low %v1526, %v1530
    %v2609 = vcombine.low %v1534, %v1538
    %v2610 = vcombine.low %v1542, %v1546
    %v2612 = vunpack.c.l.s4 1966171168
    %v2613 = vunpack.c.0.s8 %v2612
    %v2614 = vlaneseq
    %v2615 = vshrl.u32 %v2614, 7
    %v2616 = vsub.s32 %v2613, %v2615
    %v2617 = vrot.slane %v2607, %v2616
    %v2619 = vunpack.c.l.s4 1966171168
    %v2620 = vunpack.c.0.s8 %v2619
    %v2621 = vlaneseq
    %v2622 = vshrl.u32 %v2621, 7
    %v2623 = vsub.s32 %v2620, %v2622
    %v2624 = vrot.slane %v2608, %v2623
    %v2626 = vunpack.c.l.s4 1966171168
    %v2627 = vunpack.c.0.s8 %v2626
    %v2628 = vlaneseq
    %v2629 = vshrl.u32 %v2628, 7
    %v2630 = vsub.s32 %v2627, %v2629
    %v2631 = vrot.slane %v2609, %v2630
    %v2633 = vunpack.c.l.s4 1966171168
    %v2634 = vunpack.c.0.s8 %v2633
    %v2635 = vlaneseq
    %v2636 = vshrl.u32 %v2635, 7
    %v2637 = vsub.s32 %v2634, %v2636
    %v2638 = vrot.slane %v2610, %v2637
    %v2639 = vcombine.low %v2617, %v2624
    %v2640 = vcombine.low %v2631, %v2638
    %v2642 = vunpack.c.l.s4 1966171168
    %v2643 = vunpack.c.0.s8 %v2642
    %v2644 = vlaneseq
    %v2645 = vshrl.u32 %v2644, 7
    %v2646 = vsub.s32 %v2643, %v2645
    %v2647 = vrot.slane %v2639, %v2646
    %v2649 = vunpack.c.l.s4 1966171168
    %v2650 = vunpack.c.0.s8 %v2649
    %v2651 = vlaneseq
    %v2652 = vshrl.u32 %v2651, 7
    %v2653 = vsub.s32 %v2650, %v2652
    %v2654 = vrot.slane %v2640, %v2653
    %v2655 = vcombine.low %v2647, %v2654
    %v2656 = vcombine.low %v1550, %v1554
    %v2657 = vcombine.low %v1558, %v1562
    %v2658 = vcombine.low %v1566, %v1570
    %v2659 = vcombine.low %v1574, %v1578
    %v2661 = vunpack.c.l.s4 1966171168
    %v2662 = vunpack.c.0.s8 %v2661
    %v2663 = vlaneseq
    %v2664 = vshrl.u32 %v2663, 7
    %v2665 = vsub.s32 %v2662, %v2664
    %v2666 = vrot.slane %v2656, %v2665
    %v2668 = vunpack.c.l.s4 1966171168
    %v2669 = vunpack.c.0.s8 %v2668
    %v2670 = vlaneseq
    %v2671 = vshrl.u32 %v2670, 7
    %v2672 = vsub.s32 %v2669, %v2671
    %v2673 = vrot.slane %v2657, %v2672
    %v2675 = vunpack.c.l.s4 1966171168
    %v2676 = vunpack.c.0.s8 %v2675
    %v2677 = vlaneseq
    %v2678 = vshrl.u32 %v2677, 7
    %v2679 = vsub.s32 %v2676, %v2678
    %v2680 = vrot.slane %v2658, %v2679
    %v2682 = vunpack.c.l.s4 1966171168
    %v2683 = vunpack.c.0.s8 %v2682
    %v2684 = vlaneseq
    %v2685 = vshrl.u32 %v2684, 7
    %v2686 = vsub.s32 %v2683, %v2685
    %v2687 = vrot.slane %v2659, %v2686
    %v2688 = vcombine.low %v2666, %v2673
    %v2689 = vcombine.low %v2680, %v2687
    %v2691 = vunpack.c.l.s4 1966171168
    %v2692 = vunpack.c.0.s8 %v2691
    %v2693 = vlaneseq
    %v2694 = vshrl.u32 %v2693, 7
    %v2695 = vsub.s32 %v2692, %v2694
    %v2696 = vrot.slane %v2688, %v2695
    %v2698 = vunpack.c.l.s4 1966171168
    %v2699 = vunpack.c.0.s8 %v2698
    %v2700 = vlaneseq
    %v2701 = vshrl.u32 %v2700, 7
    %v2702 = vsub.s32 %v2699, %v2701
    %v2703 = vrot.slane %v2689, %v2702
    %v2704 = vcombine.low %v2696, %v2703
    %v2705 = vcombine.low %v1582, %v1586
    %v2706 = vcombine.low %v1590, %v1594
    %v2707 = vcombine.low %v1598, %v1602
    %v2708 = vcombine.low %v1606, %v1610
    %v2710 = vunpack.c.l.s4 1966171168
    %v2711 = vunpack.c.0.s8 %v2710
    %v2712 = vlaneseq
    %v2713 = vshrl.u32 %v2712, 7
    %v2714 = vsub.s32 %v2711, %v2713
    %v2715 = vrot.slane %v2705, %v2714
    %v2717 = vunpack.c.l.s4 1966171168
    %v2718 = vunpack.c.0.s8 %v2717
    %v2719 = vlaneseq
    %v2720 = vshrl.u32 %v2719, 7
    %v2721 = vsub.s32 %v2718, %v2720
    %v2722 = vrot.slane %v2706, %v2721
    %v2724 = vunpack.c.l.s4 1966171168
    %v2725 = vunpack.c.0.s8 %v2724
    %v2726 = vlaneseq
    %v2727 = vshrl.u32 %v2726, 7
    %v2728 = vsub.s32 %v2725, %v2727
    %v2729 = vrot.slane %v2707, %v2728
    %v2731 = vunpack.c.l.s4 1966171168
    %v2732 = vunpack.c.0.s8 %v2731
    %v2733 = vlaneseq
    %v2734 = vshrl.u32 %v2733, 7
    %v2735 = vsub.s32 %v2732, %v2734
    %v2736 = vrot.slane %v2708, %v2735
    %v2737 = vcombine.low %v2715, %v2722
    %v2738 = vcombine.low %v2729, %v2736
    %v2740 = vunpack.c.l.s4 1966171168
    %v2741 = vunpack.c.0.s8 %v2740
    %v2742 = vlaneseq
    %v2743 = vshrl.u32 %v2742, 7
    %v2744 = vsub.s32 %v2741, %v2743
    %v2745 = vrot.slane %v2737, %v2744
    %v2747 = vunpack.c.l.s4 1966171168
    %v2748 = vunpack.c.0.s8 %v2747
    %v2749 = vlaneseq
    %v2750 = vshrl.u32 %v2749, 7
    %v2751 = vsub.s32 %v2748, %v2750
    %v2752 = vrot.slane %v2738, %v2751
    %v2753 = vcombine.low %v2745, %v2752
    %v2754 = vcombine.low %v1614, %v1618
    %v2755 = vcombine.low %v1622, %v1626
    %v2756 = vcombine.low %v1630, %v1634
    %v2757 = vcombine.low %v1638, %v1642
    %v2759 = vunpack.c.l.s4 1966171168
    %v2760 = vunpack.c.0.s8 %v2759
    %v2761 = vlaneseq
    %v2762 = vshrl.u32 %v2761, 7
    %v2763 = vsub.s32 %v2760, %v2762
    %v2764 = vrot.slane %v2754, %v2763
    %v2766 = vunpack.c.l.s4 1966171168
    %v2767 = vunpack.c.0.s8 %v2766
    %v2768 = vlaneseq
    %v2769 = vshrl.u32 %v2768, 7
    %v2770 = vsub.s32 %v2767, %v2769
    %v2771 = vrot.slane %v2755, %v2770
    %v2773 = vunpack.c.l.s4 1966171168
    %v2774 = vunpack.c.0.s8 %v2773
    %v2775 = vlaneseq
    %v2776 = vshrl.u32 %v2775, 7
    %v2777 = vsub.s32 %v2774, %v2776
    %v2778 = vrot.slane %v2756, %v2777
    %v2780 = vunpack.c.l.s4 1966171168
    %v2781 = vunpack.c.0.s8 %v2780
    %v2782 = vlaneseq
    %v2783 = vshrl.u32 %v2782, 7
    %v2784 = vsub.s32 %v2781, %v2783
    %v2785 = vrot.slane %v2757, %v2784
    %v2786 = vcombine.low %v2764, %v2771
    %v2787 = vcombine.low %v2778, %v2785
    %v2789 = vunpack.c.l.s4 1966171168
    %v2790 = vunpack.c.0.s8 %v2789
    %v2791 = vlaneseq
    %v2792 = vshrl.u32 %v2791, 7
    %v2793 = vsub.s32 %v2790, %v2792
    %v2794 = vrot.slane %v2786, %v2793
    %v2796 = vunpack.c.l.s4 1966171168
    %v2797 = vunpack.c.0.s8 %v2796
    %v2798 = vlaneseq
    %v2799 = vshrl.u32 %v2798, 7
    %v2800 = vsub.s32 %v2797, %v2799
    %v2801 = vrot.slane %v2787, %v2800
    %v2802 = vcombine.low %v2794, %v2801
    %v2803 = vcombine.low %v1646, %v1650
    %v2804 = vcombine.low %v1654, %v1658
    %v2805 = vcombine.low %v1662, %v1666
    %v2806 = vcombine.low %v1670, %v1674
    %v2808 = vunpack.c.l.s4 1966171168
    %v2809 = vunpack.c.0.s8 %v2808
    %v2810 = vlaneseq
    %v2811 = vshrl.u32 %v2810, 7
    %v2812 = vsub.s32 %v2809, %v2811
    %v2813 = vrot.slane %v2803, %v2812
    %v2815 = vunpack.c.l.s4 1966171168
    %v2816 = vunpack.c.0.s8 %v2815
    %v2817 = vlaneseq
    %v2818 = vshrl.u32 %v2817, 7
    %v2819 = vsub.s32 %v2816, %v2818
    %v2820 = vrot.slane %v2804, %v2819
    %v2822 = vunpack.c.l.s4 1966171168
    %v2823 = vunpack.c.0.s8 %v2822
    %v2824 = vlaneseq
    %v2825 = vshrl.u32 %v2824, 7
    %v2826 = vsub.s32 %v2823, %v2825
    %v2827 = vrot.slane %v2805, %v2826
    %v2829 = vunpack.c.l.s4 1966171168
    %v2830 = vunpack.c.0.s8 %v2829
    %v2831 = vlaneseq
    %v2832 = vshrl.u32 %v2831, 7
    %v2833 = vsub.s32 %v2830, %v2832
    %v2834 = vrot.slane %v2806, %v2833
    %v2835 = vcombine.low %v2813, %v2820
    %v2836 = vcombine.low %v2827, %v2834
    %v2838 = vunpack.c.l.s4 1966171168
    %v2839 = vunpack.c.0.s8 %v2838
    %v2840 = vlaneseq
    %v2841 = vshrl.u32 %v2840, 7
    %v2842 = vsub.s32 %v2839, %v2841
    %v2843 = vrot.slane %v2835, %v2842
    %v2845 = vunpack.c.l.s4 1966171168
    %v2846 = vunpack.c.0.s8 %v2845
    %v2847 = vlaneseq
    %v2848 = vshrl.u32 %v2847, 7
    %v2849 = vsub.s32 %v2846, %v2848
    %v2850 = vrot.slane %v2836, %v2849
    %v2851 = vcombine.low %v2843, %v2850
    %v2852 = vcombine.low %v1678, %v1682
    %v2853 = vcombine.low %v1686, %v1690
    %v2854 = vcombine.low %v1694, %v1698
    %v2855 = vcombine.low %v1702, %v1706
    %v2857 = vunpack.c.l.s4 1966171168
    %v2858 = vunpack.c.0.s8 %v2857
    %v2859 = vlaneseq
    %v2860 = vshrl.u32 %v2859, 7
    %v2861 = vsub.s32 %v2858, %v2860
    %v2862 = vrot.slane %v2852, %v2861
    %v2864 = vunpack.c.l.s4 1966171168
    %v2865 = vunpack.c.0.s8 %v2864
    %v2866 = vlaneseq
    %v2867 = vshrl.u32 %v2866, 7
    %v2868 = vsub.s32 %v2865, %v2867
    %v2869 = vrot.slane %v2853, %v2868
    %v2871 = vunpack.c.l.s4 1966171168
    %v2872 = vunpack.c.0.s8 %v2871
    %v2873 = vlaneseq
    %v2874 = vshrl.u32 %v2873, 7
    %v2875 = vsub.s32 %v2872, %v2874
    %v2876 = vrot.slane %v2854, %v2875
    %v2878 = vunpack.c.l.s4 1966171168
    %v2879 = vunpack.c.0.s8 %v2878
    %v2880 = vlaneseq
    %v2881 = vshrl.u32 %v2880, 7
    %v2882 = vsub.s32 %v2879, %v2881
    %v2883 = vrot.slane %v2855, %v2882
    %v2884 = vcombine.low %v2862, %v2869
    %v2885 = vcombine.low %v2876, %v2883
    %v2887 = vunpack.c.l.s4 1966171168
    %v2888 = vunpack.c.0.s8 %v2887
    %v2889 = vlaneseq
    %v2890 = vshrl.u32 %v2889, 7
    %v2891 = vsub.s32 %v2888, %v2890
    %v2892 = vrot.slane %v2884, %v2891
    %v2894 = vunpack.c.l.s4 1966171168
    %v2895 = vunpack.c.0.s8 %v2894
    %v2896 = vlaneseq
    %v2897 = vshrl.u32 %v2896, 7
    %v2898 = vsub.s32 %v2895, %v2897
    %v2899 = vrot.slane %v2885, %v2898
    %v2900 = vcombine.low %v2892, %v2899
    %v2901 = vcombine.low %v1710, %v1714
    %v2902 = vcombine.low %v1718, %v1722
    %v2903 = vcombine.low %v1726, %v1730
    %v2904 = vcombine.low %v1734, %v1738
    %v2906 = vunpack.c.l.s4 1966171168
    %v2907 = vunpack.c.0.s8 %v2906
    %v2908 = vlaneseq
    %v2909 = vshrl.u32 %v2908, 7
    %v2910 = vsub.s32 %v2907, %v2909
    %v2911 = vrot.slane %v2901, %v2910
    %v2913 = vunpack.c.l.s4 1966171168
    %v2914 = vunpack.c.0.s8 %v2913
    %v2915 = vlaneseq
    %v2916 = vshrl.u32 %v2915, 7
    %v2917 = vsub.s32 %v2914, %v2916
    %v2918 = vrot.slane %v2902, %v2917
    %v2920 = vunpack.c.l.s4 1966171168
    %v2921 = vunpack.c.0.s8 %v2920
    %v2922 = vlaneseq
    %v2923 = vshrl.u32 %v2922, 7
    %v2924 = vsub.s32 %v2921, %v2923
    %v2925 = vrot.slane %v2903, %v2924
    %v2927 = vunpack.c.l.s4 1966171168
    %v2928 = vunpack.c.0.s8 %v2927
    %v2929 = vlaneseq
    %v2930 = vshrl.u32 %v2929, 7
    %v2931 = vsub.s32 %v2928, %v2930
    %v2932 = vrot.slane %v2904, %v2931
    %v2933 = vcombine.low %v2911, %v2918
    %v2934 = vcombine.low %v2925, %v2932
    %v2936 = vunpack.c.l.s4 1966171168
    %v2937 = vunpack.c.0.s8 %v2936
    %v2938 = vlaneseq
    %v2939 = vshrl.u32 %v2938, 7
    %v2940 = vsub.s32 %v2937, %v2939
    %v2941 = vrot.slane %v2933, %v2940
    %v2943 = vunpack.c.l.s4 1966171168
    %v2944 = vunpack.c.0.s8 %v2943
    %v2945 = vlaneseq
    %v2946 = vshrl.u32 %v2945, 7
    %v2947 = vsub.s32 %v2944, %v2946
    %v2948 = vrot.slane %v2934, %v2947
    %v2949 = vcombine.low %v2941, %v2948
    %v2950 = vcombine.low %v1742, %v1746
    %v2951 = vcombine.low %v1750, %v1754
    %v2952 = vcombine.low %v1758, %v1762
    %v2953 = vcombine.low %v1766, %v1770
    %v2955 = vunpack.c.l.s4 1966171168
    %v2956 = vunpack.c.0.s8 %v2955
    %v2957 = vlaneseq
    %v2958 = vshrl.u32 %v2957, 7
    %v2959 = vsub.s32 %v2956, %v2958
    %v2960 = vrot.slane %v2950, %v2959
    %v2962 = vunpack.c.l.s4 1966171168
    %v2963 = vunpack.c.0.s8 %v2962
    %v2964 = vlaneseq
    %v2965 = vshrl.u32 %v2964, 7
    %v2966 = vsub.s32 %v2963, %v2965
    %v2967 = vrot.slane %v2951, %v2966
    %v2969 = vunpack.c.l.s4 1966171168
    %v2970 = vunpack.c.0.s8 %v2969
    %v2971 = vlaneseq
    %v2972 = vshrl.u32 %v2971, 7
    %v2973 = vsub.s32 %v2970, %v2972
    %v2974 = vrot.slane %v2952, %v2973
    %v2976 = vunpack.c.l.s4 1966171168
    %v2977 = vunpack.c.0.s8 %v2976
    %v2978 = vlaneseq
    %v2979 = vshrl.u32 %v2978, 7
    %v2980 = vsub.s32 %v2977, %v2979
    %v2981 = vrot.slane %v2953, %v2980
    %v2982 = vcombine.low %v2960, %v2967
    %v2983 = vcombine.low %v2974, %v2981
    %v2985 = vunpack.c.l.s4 1966171168
    %v2986 = vunpack.c.0.s8 %v2985
    %v2987 = vlaneseq
    %v2988 = vshrl.u32 %v2987, 7
    %v2989 = vsub.s32 %v2986, %v2988
    %v2990 = vrot.slane %v2982, %v2989
    %v2992 = vunpack.c.l.s4 1966171168
    %v2993 = vunpack.c.0.s8 %v2992
    %v2994 = vlaneseq
    %v2995 = vshrl.u32 %v2994, 7
    %v2996 = vsub.s32 %v2993, %v2995
    %v2997 = vrot.slane %v2983, %v2996
    %v2998 = vcombine.low %v2990, %v2997
    %v2999 = vcombine.low %v1774, %v1778
    %v3000 = vcombine.low %v1782, %v1786
    %v3001 = vcombine.low %v1790, %v1794
    %v3002 = vcombine.low %v1798, %v1802
    %v3004 = vunpack.c.l.s4 1966171168
    %v3005 = vunpack.c.0.s8 %v3004
    %v3006 = vlaneseq
    %v3007 = vshrl.u32 %v3006, 7
    %v3008 = vsub.s32 %v3005, %v3007
    %v3009 = vrot.slane %v2999, %v3008
    %v3011 = vunpack.c.l.s4 1966171168
    %v3012 = vunpack.c.0.s8 %v3011
    %v3013 = vlaneseq
    %v3014 = vshrl.u32 %v3013, 7
    %v3015 = vsub.s32 %v3012, %v3014
    %v3016 = vrot.slane %v3000, %v3015
    %v3018 = vunpack.c.l.s4 1966171168
    %v3019 = vunpack.c.0.s8 %v3018
    %v3020 = vlaneseq
    %v3021 = vshrl.u32 %v3020, 7
    %v3022 = vsub.s32 %v3019, %v3021
    %v3023 = vrot.slane %v3001, %v3022
    %v3025 = vunpack.c.l.s4 1966171168
    %v3026 = vunpack.c.0.s8 %v3025
    %v3027 = vlaneseq
    %v3028 = vshrl.u32 %v3027, 7
    %v3029 = vsub.s32 %v3026, %v3028
    %v3030 = vrot.slane %v3002, %v3029
    %v3031 = vcombine.low %v3009, %v3016
    %v3032 = vcombine.low %v3023, %v3030
    %v3034 = vunpack.c.l.s4 1966171168
    %v3035 = vunpack.c.0.s8 %v3034
    %v3036 = vlaneseq
    %v3037 = vshrl.u32 %v3036, 7
    %v3038 = vsub.s32 %v3035, %v3037
    %v3039 = vrot.slane %v3031, %v3038
    %v3041 = vunpack.c.l.s4 1966171168
    %v3042 = vunpack.c.0.s8 %v3041
    %v3043 = vlaneseq
    %v3044 = vshrl.u32 %v3043, 7
    %v3045 = vsub.s32 %v3042, %v3044
    %v3046 = vrot.slane %v3032, %v3045
    %v3047 = vcombine.low %v3039, %v3046
    %v3048 = vcombine.low %v1806, %v1810
    %v3049 = vcombine.low %v1814, %v1818
    %v3050 = vcombine.low %v1822, %v1826
    %v3051 = vcombine.low %v1830, %v1834
    %v3053 = vunpack.c.l.s4 1966171168
    %v3054 = vunpack.c.0.s8 %v3053
    %v3055 = vlaneseq
    %v3056 = vshrl.u32 %v3055, 7
    %v3057 = vsub.s32 %v3054, %v3056
    %v3058 = vrot.slane %v3048, %v3057
    %v3060 = vunpack.c.l.s4 1966171168
    %v3061 = vunpack.c.0.s8 %v3060
    %v3062 = vlaneseq
    %v3063 = vshrl.u32 %v3062, 7
    %v3064 = vsub.s32 %v3061, %v3063
    %v3065 = vrot.slane %v3049, %v3064
    %v3067 = vunpack.c.l.s4 1966171168
    %v3068 = vunpack.c.0.s8 %v3067
    %v3069 = vlaneseq
    %v3070 = vshrl.u32 %v3069, 7
    %v3071 = vsub.s32 %v3068, %v3070
    %v3072 = vrot.slane %v3050, %v3071
    %v3074 = vunpack.c.l.s4 1966171168
    %v3075 = vunpack.c.0.s8 %v3074
    %v3076 = vlaneseq
    %v3077 = vshrl.u32 %v3076, 7
    %v3078 = vsub.s32 %v3075, %v3077
    %v3079 = vrot.slane %v3051, %v3078
    %v3080 = vcombine.low %v3058, %v3065
    %v3081 = vcombine.low %v3072, %v3079
    %v3083 = vunpack.c.l.s4 1966171168
    %v3084 = vunpack.c.0.s8 %v3083
    %v3085 = vlaneseq
    %v3086 = vshrl.u32 %v3085, 7
    %v3087 = vsub.s32 %v3084, %v3086
    %v3088 = vrot.slane %v3080, %v3087
    %v3090 = vunpack.c.l.s4 1966171168
    %v3091 = vunpack.c.0.s8 %v3090
    %v3092 = vlaneseq
    %v3093 = vshrl.u32 %v3092, 7
    %v3094 = vsub.s32 %v3091, %v3093
    %v3095 = vrot.slane %v3081, %v3094
    %v3096 = vcombine.low %v3088, %v3095
    %v3097 = vcombine.low %v1838, %v1842
    %v3098 = vcombine.low %v1846, %v1850
    %v3099 = vcombine.low %v1854, %v1858
    %v3100 = vcombine.low %v1862, %v1866
    %v3102 = vunpack.c.l.s4 1966171168
    %v3103 = vunpack.c.0.s8 %v3102
    %v3104 = vlaneseq
    %v3105 = vshrl.u32 %v3104, 7
    %v3106 = vsub.s32 %v3103, %v3105
    %v3107 = vrot.slane %v3097, %v3106
    %v3109 = vunpack.c.l.s4 1966171168
    %v3110 = vunpack.c.0.s8 %v3109
    %v3111 = vlaneseq
    %v3112 = vshrl.u32 %v3111, 7
    %v3113 = vsub.s32 %v3110, %v3112
    %v3114 = vrot.slane %v3098, %v3113
    %v3116 = vunpack.c.l.s4 1966171168
    %v3117 = vunpack.c.0.s8 %v3116
    %v3118 = vlaneseq
    %v3119 = vshrl.u32 %v3118, 7
    %v3120 = vsub.s32 %v3117, %v3119
    %v3121 = vrot.slane %v3099, %v3120
    %v3123 = vunpack.c.l.s4 1966171168
    %v3124 = vunpack.c.0.s8 %v3123
    %v3125 = vlaneseq
    %v3126 = vshrl.u32 %v3125, 7
    %v3127 = vsub.s32 %v3124, %v3126
    %v3128 = vrot.slane %v3100, %v3127
    %v3129 = vcombine.low %v3107, %v3114
    %v3130 = vcombine.low %v3121, %v3128
    %v3132 = vunpack.c.l.s4 1966171168
    %v3133 = vunpack.c.0.s8 %v3132
    %v3134 = vlaneseq
    %v3135 = vshrl.u32 %v3134, 7
    %v3136 = vsub.s32 %v3133, %v3135
    %v3137 = vrot.slane %v3129, %v3136
    %v3139 = vunpack.c.l.s4 1966171168
    %v3140 = vunpack.c.0.s8 %v3139
    %v3141 = vlaneseq
    %v3142 = vshrl.u32 %v3141, 7
    %v3143 = vsub.s32 %v3140, %v3142
    %v3144 = vrot.slane %v3130, %v3143
    %v3145 = vcombine.low %v3137, %v3144
    %v3146 = vcombine.low %v1870, %v1874
    %v3147 = vcombine.low %v1878, %v1882
    %v3148 = vcombine.low %v1886, %v1890
    %v3149 = vcombine.low %v1894, %v1898
    %v3151 = vunpack.c.l.s4 1966171168
    %v3152 = vunpack.c.0.s8 %v3151
    %v3153 = vlaneseq
    %v3154 = vshrl.u32 %v3153, 7
    %v3155 = vsub.s32 %v3152, %v3154
    %v3156 = vrot.slane %v3146, %v3155
    %v3158 = vunpack.c.l.s4 1966171168
    %v3159 = vunpack.c.0.s8 %v3158
    %v3160 = vlaneseq
    %v3161 = vshrl.u32 %v3160, 7
    %v3162 = vsub.s32 %v3159, %v3161
    %v3163 = vrot.slane %v3147, %v3162
    %v3165 = vunpack.c.l.s4 1966171168
    %v3166 = vunpack.c.0.s8 %v3165
    %v3167 = vlaneseq
    %v3168 = vshrl.u32 %v3167, 7
    %v3169 = vsub.s32 %v3166, %v3168
    %v3170 = vrot.slane %v3148, %v3169
    %v3172 = vunpack.c.l.s4 1966171168
    %v3173 = vunpack.c.0.s8 %v3172
    %v3174 = vlaneseq
    %v3175 = vshrl.u32 %v3174, 7
    %v3176 = vsub.s32 %v3173, %v3175
    %v3177 = vrot.slane %v3149, %v3176
    %v3178 = vcombine.low %v3156, %v3163
    %v3179 = vcombine.low %v3170, %v3177
    %v3181 = vunpack.c.l.s4 1966171168
    %v3182 = vunpack.c.0.s8 %v3181
    %v3183 = vlaneseq
    %v3184 = vshrl.u32 %v3183, 7
    %v3185 = vsub.s32 %v3182, %v3184
    %v3186 = vrot.slane %v3178, %v3185
    %v3188 = vunpack.c.l.s4 1966171168
    %v3189 = vunpack.c.0.s8 %v3188
    %v3190 = vlaneseq
    %v3191 = vshrl.u32 %v3190, 7
    %v3192 = vsub.s32 %v3189, %v3191
    %v3193 = vrot.slane %v3179, %v3192
    %v3194 = vcombine.low %v3186, %v3193
    %v3195 = vcombine.low %v1902, %v1906
    %v3196 = vcombine.low %v1910, %v1914
    %v3197 = vcombine.low %v1918, %v1922
    %v3198 = vcombine.low %v1926, %v1930
    %v3200 = vunpack.c.l.s4 1966171168
    %v3201 = vunpack.c.0.s8 %v3200
    %v3202 = vlaneseq
    %v3203 = vshrl.u32 %v3202, 7
    %v3204 = vsub.s32 %v3201, %v3203
    %v3205 = vrot.slane %v3195, %v3204
    %v3207 = vunpack.c.l.s4 1966171168
    %v3208 = vunpack.c.0.s8 %v3207
    %v3209 = vlaneseq
    %v3210 = vshrl.u32 %v3209, 7
    %v3211 = vsub.s32 %v3208, %v3210
    %v3212 = vrot.slane %v3196, %v3211
    %v3214 = vunpack.c.l.s4 1966171168
    %v3215 = vunpack.c.0.s8 %v3214
    %v3216 = vlaneseq
    %v3217 = vshrl.u32 %v3216, 7
    %v3218 = vsub.s32 %v3215, %v3217
    %v3219 = vrot.slane %v3197, %v3218
    %v3221 = vunpack.c.l.s4 1966171168
    %v3222 = vunpack.c.0.s8 %v3221
    %v3223 = vlaneseq
    %v3224 = vshrl.u32 %v3223, 7
    %v3225 = vsub.s32 %v3222, %v3224
    %v3226 = vrot.slane %v3198, %v3225
    %v3227 = vcombine.low %v3205, %v3212
    %v3228 = vcombine.low %v3219, %v3226
    %v3230 = vunpack.c.l.s4 1966171168
    %v3231 = vunpack.c.0.s8 %v3230
    %v3232 = vlaneseq
    %v3233 = vshrl.u32 %v3232, 7
    %v3234 = vsub.s32 %v3231, %v3233
    %v3235 = vrot.slane %v3227, %v3234
    %v3237 = vunpack.c.l.s4 1966171168
    %v3238 = vunpack.c.0.s8 %v3237
    %v3239 = vlaneseq
    %v3240 = vshrl.u32 %v3239, 7
    %v3241 = vsub.s32 %v3238, %v3240
    %v3242 = vrot.slane %v3228, %v3241
    %v3243 = vcombine.low %v3235, %v3242
    %v3244 = vcombine.low %v1934, %v1938
    %v3245 = vcombine.low %v1942, %v1946
    %v3246 = vcombine.low %v1950, %v1954
    %v3247 = vcombine.low %v1958, %v1962
    %v3249 = vunpack.c.l.s4 1966171168
    %v3250 = vunpack.c.0.s8 %v3249
    %v3251 = vlaneseq
    %v3252 = vshrl.u32 %v3251, 7
    %v3253 = vsub.s32 %v3250, %v3252
    %v3254 = vrot.slane %v3244, %v3253
    %v3256 = vunpack.c.l.s4 1966171168
    %v3257 = vunpack.c.0.s8 %v3256
    %v3258 = vlaneseq
    %v3259 = vshrl.u32 %v3258, 7
    %v3260 = vsub.s32 %v3257, %v3259
    %v3261 = vrot.slane %v3245, %v3260
    %v3263 = vunpack.c.l.s4 1966171168
    %v3264 = vunpack.c.0.s8 %v3263
    %v3265 = vlaneseq
    %v3266 = vshrl.u32 %v3265, 7
    %v3267 = vsub.s32 %v3264, %v3266
    %v3268 = vrot.slane %v3246, %v3267
    %v3270 = vunpack.c.l.s4 1966171168
    %v3271 = vunpack.c.0.s8 %v3270
    %v3272 = vlaneseq
    %v3273 = vshrl.u32 %v3272, 7
    %v3274 = vsub.s32 %v3271, %v3273
    %v3275 = vrot.slane %v3247, %v3274
    %v3276 = vcombine.low %v3254, %v3261
    %v3277 = vcombine.low %v3268, %v3275
    %v3279 = vunpack.c.l.s4 1966171168
    %v3280 = vunpack.c.0.s8 %v3279
    %v3281 = vlaneseq
    %v3282 = vshrl.u32 %v3281, 7
    %v3283 = vsub.s32 %v3280, %v3282
    %v3284 = vrot.slane %v3276, %v3283
    %v3286 = vunpack.c.l.s4 1966171168
    %v3287 = vunpack.c.0.s8 %v3286
    %v3288 = vlaneseq
    %v3289 = vshrl.u32 %v3288, 7
    %v3290 = vsub.s32 %v3287, %v3289
    %v3291 = vrot.slane %v3277, %v3290
    %v3292 = vcombine.low %v3284, %v3291
    %v3293 = vcombine.low %v1966, %v1970
    %v3294 = vcombine.low %v1974, %v1978
    %v3295 = vcombine.low %v1982, %v1986
    %v3296 = vcombine.low %v1990, %v1994
    %v3298 = vunpack.c.l.s4 1966171168
    %v3299 = vunpack.c.0.s8 %v3298
    %v3300 = vlaneseq
    %v3301 = vshrl.u32 %v3300, 7
    %v3302 = vsub.s32 %v3299, %v3301
    %v3303 = vrot.slane %v3293, %v3302
    %v3305 = vunpack.c.l.s4 1966171168
    %v3306 = vunpack.c.0.s8 %v3305
    %v3307 = vlaneseq
    %v3308 = vshrl.u32 %v3307, 7
    %v3309 = vsub.s32 %v3306, %v3308
    %v3310 = vrot.slane %v3294, %v3309
    %v3312 = vunpack.c.l.s4 1966171168
    %v3313 = vunpack.c.0.s8 %v3312
    %v3314 = vlaneseq
    %v3315 = vshrl.u32 %v3314, 7
    %v3316 = vsub.s32 %v3313, %v3315
    %v3317 = vrot.slane %v3295, %v3316
    %v3319 = vunpack.c.l.s4 1966171168
    %v3320 = vunpack.c.0.s8 %v3319
    %v3321 = vlaneseq
    %v3322 = vshrl.u32 %v3321, 7
    %v3323 = vsub.s32 %v3320, %v3322
    %v3324 = vrot.slane %v3296, %v3323
    %v3325 = vcombine.low %v3303, %v3310
    %v3326 = vcombine.low %v3317, %v3324
    %v3328 = vunpack.c.l.s4 1966171168
    %v3329 = vunpack.c.0.s8 %v3328
    %v3330 = vlaneseq
    %v3331 = vshrl.u32 %v3330, 7
    %v3332 = vsub.s32 %v3329, %v3331
    %v3333 = vrot.slane %v3325, %v3332
    %v3335 = vunpack.c.l.s4 1966171168
    %v3336 = vunpack.c.0.s8 %v3335
    %v3337 = vlaneseq
    %v3338 = vshrl.u32 %v3337, 7
    %v3339 = vsub.s32 %v3336, %v3338
    %v3340 = vrot.slane %v3326, %v3339
    %v3341 = vcombine.low %v3333, %v3340
    %v3342 = vcombine.low %v1998, %v2002
    %v3343 = vcombine.low %v2006, %v2010
    %v3344 = vcombine.low %v2014, %v2018
    %v3345 = vcombine.low %v2022, %v2026
    %v3347 = vunpack.c.l.s4 1966171168
    %v3348 = vunpack.c.0.s8 %v3347
    %v3349 = vlaneseq
    %v3350 = vshrl.u32 %v3349, 7
    %v3351 = vsub.s32 %v3348, %v3350
    %v3352 = vrot.slane %v3342, %v3351
    %v3354 = vunpack.c.l.s4 1966171168
    %v3355 = vunpack.c.0.s8 %v3354
    %v3356 = vlaneseq
    %v3357 = vshrl.u32 %v3356, 7
    %v3358 = vsub.s32 %v3355, %v3357
    %v3359 = vrot.slane %v3343, %v3358
    %v3361 = vunpack.c.l.s4 1966171168
    %v3362 = vunpack.c.0.s8 %v3361
    %v3363 = vlaneseq
    %v3364 = vshrl.u32 %v3363, 7
    %v3365 = vsub.s32 %v3362, %v3364
    %v3366 = vrot.slane %v3344, %v3365
    %v3368 = vunpack.c.l.s4 1966171168
    %v3369 = vunpack.c.0.s8 %v3368
    %v3370 = vlaneseq
    %v3371 = vshrl.u32 %v3370, 7
    %v3372 = vsub.s32 %v3369, %v3371
    %v3373 = vrot.slane %v3345, %v3372
    %v3374 = vcombine.low %v3352, %v3359
    %v3375 = vcombine.low %v3366, %v3373
    %v3377 = vunpack.c.l.s4 1966171168
    %v3378 = vunpack.c.0.s8 %v3377
    %v3379 = vlaneseq
    %v3380 = vshrl.u32 %v3379, 7
    %v3381 = vsub.s32 %v3378, %v3380
    %v3382 = vrot.slane %v3374, %v3381
    %v3384 = vunpack.c.l.s4 1966171168
    %v3385 = vunpack.c.0.s8 %v3384
    %v3386 = vlaneseq
    %v3387 = vshrl.u32 %v3386, 7
    %v3388 = vsub.s32 %v3385, %v3387
    %v3389 = vrot.slane %v3375, %v3388
    %v3390 = vcombine.low %v3382, %v3389
    %v3391 = vcombine.low %v2030, %v2034
    %v3392 = vcombine.low %v2038, %v2042
    %v3393 = vcombine.low %v2046, %v2050
    %v3394 = vcombine.low %v2054, %v2058
    %v3396 = vunpack.c.l.s4 1966171168
    %v3397 = vunpack.c.0.s8 %v3396
    %v3398 = vlaneseq
    %v3399 = vshrl.u32 %v3398, 7
    %v3400 = vsub.s32 %v3397, %v3399
    %v3401 = vrot.slane %v3391, %v3400
    %v3403 = vunpack.c.l.s4 1966171168
    %v3404 = vunpack.c.0.s8 %v3403
    %v3405 = vlaneseq
    %v3406 = vshrl.u32 %v3405, 7
    %v3407 = vsub.s32 %v3404, %v3406
    %v3408 = vrot.slane %v3392, %v3407
    %v3410 = vunpack.c.l.s4 1966171168
    %v3411 = vunpack.c.0.s8 %v3410
    %v3412 = vlaneseq
    %v3413 = vshrl.u32 %v3412, 7
    %v3414 = vsub.s32 %v3411, %v3413
    %v3415 = vrot.slane %v3393, %v3414
    %v3417 = vunpack.c.l.s4 1966171168
    %v3418 = vunpack.c.0.s8 %v3417
    %v3419 = vlaneseq
    %v3420 = vshrl.u32 %v3419, 7
    %v3421 = vsub.s32 %v3418, %v3420
    %v3422 = vrot.slane %v3394, %v3421
    %v3423 = vcombine.low %v3401, %v3408
    %v3424 = vcombine.low %v3415, %v3422
    %v3426 = vunpack.c.l.s4 1966171168
    %v3427 = vunpack.c.0.s8 %v3426
    %v3428 = vlaneseq
    %v3429 = vshrl.u32 %v3428, 7
    %v3430 = vsub.s32 %v3427, %v3429
    %v3431 = vrot.slane %v3423, %v3430
    %v3433 = vunpack.c.l.s4 1966171168
    %v3434 = vunpack.c.0.s8 %v3433
    %v3435 = vlaneseq
    %v3436 = vshrl.u32 %v3435, 7
    %v3437 = vsub.s32 %v3434, %v3436
    %v3438 = vrot.slane %v3424, %v3437
    %v3439 = vcombine.low %v3431, %v3438
    %v3440 = vcombine.low %v2062, %v2066
    %v3441 = vcombine.low %v2070, %v2074
    %v3442 = vcombine.low %v2078, %v2082
    %v3443 = vcombine.low %v2086, %v2090
    %v3445 = vunpack.c.l.s4 1966171168
    %v3446 = vunpack.c.0.s8 %v3445
    %v3447 = vlaneseq
    %v3448 = vshrl.u32 %v3447, 7
    %v3449 = vsub.s32 %v3446, %v3448
    %v3450 = vrot.slane %v3440, %v3449
    %v3452 = vunpack.c.l.s4 1966171168
    %v3453 = vunpack.c.0.s8 %v3452
    %v3454 = vlaneseq
    %v3455 = vshrl.u32 %v3454, 7
    %v3456 = vsub.s32 %v3453, %v3455
    %v3457 = vrot.slane %v3441, %v3456
    %v3459 = vunpack.c.l.s4 1966171168
    %v3460 = vunpack.c.0.s8 %v3459
    %v3461 = vlaneseq
    %v3462 = vshrl.u32 %v3461, 7
    %v3463 = vsub.s32 %v3460, %v3462
    %v3464 = vrot.slane %v3442, %v3463
    %v3466 = vunpack.c.l.s4 1966171168
    %v3467 = vunpack.c.0.s8 %v3466
    %v3468 = vlaneseq
    %v3469 = vshrl.u32 %v3468, 7
    %v3470 = vsub.s32 %v3467, %v3469
    %v3471 = vrot.slane %v3443, %v3470
    %v3472 = vcombine.low %v3450, %v3457
    %v3473 = vcombine.low %v3464, %v3471
    %v3475 = vunpack.c.l.s4 1966171168
    %v3476 = vunpack.c.0.s8 %v3475
    %v3477 = vlaneseq
    %v3478 = vshrl.u32 %v3477, 7
    %v3479 = vsub.s32 %v3476, %v3478
    %v3480 = vrot.slane %v3472, %v3479
    %v3482 = vunpack.c.l.s4 1966171168
    %v3483 = vunpack.c.0.s8 %v3482
    %v3484 = vlaneseq
    %v3485 = vshrl.u32 %v3484, 7
    %v3486 = vsub.s32 %v3483, %v3485
    %v3487 = vrot.slane %v3473, %v3486
    %v3488 = vcombine.low %v3480, %v3487
    %v3489 = vcombine.low %v2094, %v2098
    %v3490 = vcombine.low %v2102, %v2106
    %v3491 = vcombine.low %v2110, %v2114
    %v3492 = vcombine.low %v2118, %v2122
    %v3494 = vunpack.c.l.s4 1966171168
    %v3495 = vunpack.c.0.s8 %v3494
    %v3496 = vlaneseq
    %v3497 = vshrl.u32 %v3496, 7
    %v3498 = vsub.s32 %v3495, %v3497
    %v3499 = vrot.slane %v3489, %v3498
    %v3501 = vunpack.c.l.s4 1966171168
    %v3502 = vunpack.c.0.s8 %v3501
    %v3503 = vlaneseq
    %v3504 = vshrl.u32 %v3503, 7
    %v3505 = vsub.s32 %v3502, %v3504
    %v3506 = vrot.slane %v3490, %v3505
    %v3508 = vunpack.c.l.s4 1966171168
    %v3509 = vunpack.c.0.s8 %v3508
    %v3510 = vlaneseq
    %v3511 = vshrl.u32 %v3510, 7
    %v3512 = vsub.s32 %v3509, %v3511
    %v3513 = vrot.slane %v3491, %v3512
    %v3515 = vunpack.c.l.s4 1966171168
    %v3516 = vunpack.c.0.s8 %v3515
    %v3517 = vlaneseq
    %v3518 = vshrl.u32 %v3517, 7
    %v3519 = vsub.s32 %v3516, %v3518
    %v3520 = vrot.slane %v3492, %v3519
    %v3521 = vcombine.low %v3499, %v3506
    %v3522 = vcombine.low %v3513, %v3520
    %v3524 = vunpack.c.l.s4 1966171168
    %v3525 = vunpack.c.0.s8 %v3524
    %v3526 = vlaneseq
    %v3527 = vshrl.u32 %v3526, 7
    %v3528 = vsub.s32 %v3525, %v3527
    %v3529 = vrot.slane %v3521, %v3528
    %v3531 = vunpack.c.l.s4 1966171168
    %v3532 = vunpack.c.0.s8 %v3531
    %v3533 = vlaneseq
    %v3534 = vshrl.u32 %v3533, 7
    %v3535 = vsub.s32 %v3532, %v3534
    %v3536 = vrot.slane %v3522, %v3535
    %v3537 = vcombine.low %v3529, %v3536
    %v3538 = vcombine.low %v2126, %v2130
    %v3539 = vcombine.low %v2134, %v2138
    %v3540 = vcombine.low %v2142, %v2146
    %v3541 = vcombine.low %v2150, %v2154
    %v3543 = vunpack.c.l.s4 1966171168
    %v3544 = vunpack.c.0.s8 %v3543
    %v3545 = vlaneseq
    %v3546 = vshrl.u32 %v3545, 7
    %v3547 = vsub.s32 %v3544, %v3546
    %v3548 = vrot.slane %v3538, %v3547
    %v3550 = vunpack.c.l.s4 1966171168
    %v3551 = vunpack.c.0.s8 %v3550
    %v3552 = vlaneseq
    %v3553 = vshrl.u32 %v3552, 7
    %v3554 = vsub.s32 %v3551, %v3553
    %v3555 = vrot.slane %v3539, %v3554
    %v3557 = vunpack.c.l.s4 1966171168
    %v3558 = vunpack.c.0.s8 %v3557
    %v3559 = vlaneseq
    %v3560 = vshrl.u32 %v3559, 7
    %v3561 = vsub.s32 %v3558, %v3560
    %v3562 = vrot.slane %v3540, %v3561
    %v3564 = vunpack.c.l.s4 1966171168
    %v3565 = vunpack.c.0.s8 %v3564
    %v3566 = vlaneseq
    %v3567 = vshrl.u32 %v3566, 7
    %v3568 = vsub.s32 %v3565, %v3567
    %v3569 = vrot.slane %v3541, %v3568
    %v3570 = vcombine.low %v3548, %v3555
    %v3571 = vcombine.low %v3562, %v3569
    %v3573 = vunpack.c.l.s4 1966171168
    %v3574 = vunpack.c.0.s8 %v3573
    %v3575 = vlaneseq
    %v3576 = vshrl.u32 %v3575, 7
    %v3577 = vsub.s32 %v3574, %v3576
    %v3578 = vrot.slane %v3570, %v3577
    %v3580 = vunpack.c.l.s4 1966171168
    %v3581 = vunpack.c.0.s8 %v3580
    %v3582 = vlaneseq
    %v3583 = vshrl.u32 %v3582, 7
    %v3584 = vsub.s32 %v3581, %v3583
    %v3585 = vrot.slane %v3571, %v3584
    %v3586 = vcombine.low %v3578, %v3585
    %v3587 = vcombine.low %v2158, %v2162
    %v3588 = vcombine.low %v2166, %v2170
    %v3589 = vcombine.low %v2174, %v2178
    %v3590 = vcombine.low %v2182, %v2186
    %v3592 = vunpack.c.l.s4 1966171168
    %v3593 = vunpack.c.0.s8 %v3592
    %v3594 = vlaneseq
    %v3595 = vshrl.u32 %v3594, 7
    %v3596 = vsub.s32 %v3593, %v3595
    %v3597 = vrot.slane %v3587, %v3596
    %v3599 = vunpack.c.l.s4 1966171168
    %v3600 = vunpack.c.0.s8 %v3599
    %v3601 = vlaneseq
    %v3602 = vshrl.u32 %v3601, 7
    %v3603 = vsub.s32 %v3600, %v3602
    %v3604 = vrot.slane %v3588, %v3603
    %v3606 = vunpack.c.l.s4 1966171168
    %v3607 = vunpack.c.0.s8 %v3606
    %v3608 = vlaneseq
    %v3609 = vshrl.u32 %v3608, 7
    %v3610 = vsub.s32 %v3607, %v3609
    %v3611 = vrot.slane %v3589, %v3610
    %v3613 = vunpack.c.l.s4 1966171168
    %v3614 = vunpack.c.0.s8 %v3613
    %v3615 = vlaneseq
    %v3616 = vshrl.u32 %v3615, 7
    %v3617 = vsub.s32 %v3614, %v3616
    %v3618 = vrot.slane %v3590, %v3617
    %v3619 = vcombine.low %v3597, %v3604
    %v3620 = vcombine.low %v3611, %v3618
    %v3622 = vunpack.c.l.s4 1966171168
    %v3623 = vunpack.c.0.s8 %v3622
    %v3624 = vlaneseq
    %v3625 = vshrl.u32 %v3624, 7
    %v3626 = vsub.s32 %v3623, %v3625
    %v3627 = vrot.slane %v3619, %v3626
    %v3629 = vunpack.c.l.s4 1966171168
    %v3630 = vunpack.c.0.s8 %v3629
    %v3631 = vlaneseq
    %v3632 = vshrl.u32 %v3631, 7
    %v3633 = vsub.s32 %v3630, %v3632
    %v3634 = vrot.slane %v3620, %v3633
    %v3635 = vcombine.low %v3627, %v3634
    %v3636 = vcombine.low %v2190, %v2194
    %v3637 = vcombine.low %v2198, %v2202
    %v3638 = vcombine.low %v2206, %v2210
    %v3639 = vcombine.low %v2214, %v2218
    %v3641 = vunpack.c.l.s4 1966171168
    %v3642 = vunpack.c.0.s8 %v3641
    %v3643 = vlaneseq
    %v3644 = vshrl.u32 %v3643, 7
    %v3645 = vsub.s32 %v3642, %v3644
    %v3646 = vrot.slane %v3636, %v3645
    %v3648 = vunpack.c.l.s4 1966171168
    %v3649 = vunpack.c.0.s8 %v3648
    %v3650 = vlaneseq
    %v3651 = vshrl.u32 %v3650, 7
    %v3652 = vsub.s32 %v3649, %v3651
    %v3653 = vrot.slane %v3637, %v3652
    %v3655 = vunpack.c.l.s4 1966171168
    %v3656 = vunpack.c.0.s8 %v3655
    %v3657 = vlaneseq
    %v3658 = vshrl.u32 %v3657, 7
    %v3659 = vsub.s32 %v3656, %v3658
    %v3660 = vrot.slane %v3638, %v3659
    %v3662 = vunpack.c.l.s4 1966171168
    %v3663 = vunpack.c.0.s8 %v3662
    %v3664 = vlaneseq
    %v3665 = vshrl.u32 %v3664, 7
    %v3666 = vsub.s32 %v3663, %v3665
    %v3667 = vrot.slane %v3639, %v3666
    %v3668 = vcombine.low %v3646, %v3653
    %v3669 = vcombine.low %v3660, %v3667
    %v3671 = vunpack.c.l.s4 1966171168
    %v3672 = vunpack.c.0.s8 %v3671
    %v3673 = vlaneseq
    %v3674 = vshrl.u32 %v3673, 7
    %v3675 = vsub.s32 %v3672, %v3674
    %v3676 = vrot.slane %v3668, %v3675
    %v3678 = vunpack.c.l.s4 1966171168
    %v3679 = vunpack.c.0.s8 %v3678
    %v3680 = vlaneseq
    %v3681 = vshrl.u32 %v3680, 7
    %v3682 = vsub.s32 %v3679, %v3681
    %v3683 = vrot.slane %v3669, %v3682
    %v3684 = vcombine.low %v3676, %v3683
    %v3685 = vcombine.low %v2222, %v2226
    %v3686 = vcombine.low %v2230, %v2234
    %v3687 = vcombine.low %v2238, %v2242
    %v3688 = vcombine.low %v2246, %v2250
    %v3690 = vunpack.c.l.s4 1966171168
    %v3691 = vunpack.c.0.s8 %v3690
    %v3692 = vlaneseq
    %v3693 = vshrl.u32 %v3692, 7
    %v3694 = vsub.s32 %v3691, %v3693
    %v3695 = vrot.slane %v3685, %v3694
    %v3697 = vunpack.c.l.s4 1966171168
    %v3698 = vunpack.c.0.s8 %v3697
    %v3699 = vlaneseq
    %v3700 = vshrl.u32 %v3699, 7
    %v3701 = vsub.s32 %v3698, %v3700
    %v3702 = vrot.slane %v3686, %v3701
    %v3704 = vunpack.c.l.s4 1966171168
    %v3705 = vunpack.c.0.s8 %v3704
    %v3706 = vlaneseq
    %v3707 = vshrl.u32 %v3706, 7
    %v3708 = vsub.s32 %v3705, %v3707
    %v3709 = vrot.slane %v3687, %v3708
    %v3711 = vunpack.c.l.s4 1966171168
    %v3712 = vunpack.c.0.s8 %v3711
    %v3713 = vlaneseq
    %v3714 = vshrl.u32 %v3713, 7
    %v3715 = vsub.s32 %v3712, %v3714
    %v3716 = vrot.slane %v3688, %v3715
    %v3717 = vcombine.low %v3695, %v3702
    %v3718 = vcombine.low %v3709, %v3716
    %v3720 = vunpack.c.l.s4 1966171168
    %v3721 = vunpack.c.0.s8 %v3720
    %v3722 = vlaneseq
    %v3723 = vshrl.u32 %v3722, 7
    %v3724 = vsub.s32 %v3721, %v3723
    %v3725 = vrot.slane %v3717, %v3724
    %v3727 = vunpack.c.l.s4 1966171168
    %v3728 = vunpack.c.0.s8 %v3727
    %v3729 = vlaneseq
    %v3730 = vshrl.u32 %v3729, 7
    %v3731 = vsub.s32 %v3728, %v3730
    %v3732 = vrot.slane %v3718, %v3731
    %v3733 = vcombine.low %v3725, %v3732
    %v3734 = vcombine.low %v2254, %v2258
    %v3735 = vcombine.low %v2262, %v2266
    %v3736 = vcombine.low %v2270, %v2274
    %v3737 = vcombine.low %v2278, %v2282
    %v3739 = vunpack.c.l.s4 1966171168
    %v3740 = vunpack.c.0.s8 %v3739
    %v3741 = vlaneseq
    %v3742 = vshrl.u32 %v3741, 7
    %v3743 = vsub.s32 %v3740, %v3742
    %v3744 = vrot.slane %v3734, %v3743
    %v3746 = vunpack.c.l.s4 1966171168
    %v3747 = vunpack.c.0.s8 %v3746
    %v3748 = vlaneseq
    %v3749 = vshrl.u32 %v3748, 7
    %v3750 = vsub.s32 %v3747, %v3749
    %v3751 = vrot.slane %v3735, %v3750
    %v3753 = vunpack.c.l.s4 1966171168
    %v3754 = vunpack.c.0.s8 %v3753
    %v3755 = vlaneseq
    %v3756 = vshrl.u32 %v3755, 7
    %v3757 = vsub.s32 %v3754, %v3756
    %v3758 = vrot.slane %v3736, %v3757
    %v3760 = vunpack.c.l.s4 1966171168
    %v3761 = vunpack.c.0.s8 %v3760
    %v3762 = vlaneseq
    %v3763 = vshrl.u32 %v3762, 7
    %v3764 = vsub.s32 %v3761, %v3763
    %v3765 = vrot.slane %v3737, %v3764
    %v3766 = vcombine.low %v3744, %v3751
    %v3767 = vcombine.low %v3758, %v3765
    %v3769 = vunpack.c.l.s4 1966171168
    %v3770 = vunpack.c.0.s8 %v3769
    %v3771 = vlaneseq
    %v3772 = vshrl.u32 %v3771, 7
    %v3773 = vsub.s32 %v3770, %v3772
    %v3774 = vrot.slane %v3766, %v3773
    %v3776 = vunpack.c.l.s4 1966171168
    %v3777 = vunpack.c.0.s8 %v3776
    %v3778 = vlaneseq
    %v3779 = vshrl.u32 %v3778, 7
    %v3780 = vsub.s32 %v3777, %v3779
    %v3781 = vrot.slane %v3767, %v3780
    %v3782 = vcombine.low %v3774, %v3781
    %v3783 = vcombine.low %v2286, %v2290
    %v3784 = vcombine.low %v2294, %v2298
    %v3785 = vcombine.low %v2302, %v2306
    %v3786 = vcombine.low %v2310, %v2314
    %v3788 = vunpack.c.l.s4 1966171168
    %v3789 = vunpack.c.0.s8 %v3788
    %v3790 = vlaneseq
    %v3791 = vshrl.u32 %v3790, 7
    %v3792 = vsub.s32 %v3789, %v3791
    %v3793 = vrot.slane %v3783, %v3792
    %v3795 = vunpack.c.l.s4 1966171168
    %v3796 = vunpack.c.0.s8 %v3795
    %v3797 = vlaneseq
    %v3798 = vshrl.u32 %v3797, 7
    %v3799 = vsub.s32 %v3796, %v3798
    %v3800 = vrot.slane %v3784, %v3799
    %v3802 = vunpack.c.l.s4 1966171168
    %v3803 = vunpack.c.0.s8 %v3802
    %v3804 = vlaneseq
    %v3805 = vshrl.u32 %v3804, 7
    %v3806 = vsub.s32 %v3803, %v3805
    %v3807 = vrot.slane %v3785, %v3806
    %v3809 = vunpack.c.l.s4 1966171168
    %v3810 = vunpack.c.0.s8 %v3809
    %v3811 = vlaneseq
    %v3812 = vshrl.u32 %v3811, 7
    %v3813 = vsub.s32 %v3810, %v3812
    %v3814 = vrot.slane %v3786, %v3813
    %v3815 = vcombine.low %v3793, %v3800
    %v3816 = vcombine.low %v3807, %v3814
    %v3818 = vunpack.c.l.s4 1966171168
    %v3819 = vunpack.c.0.s8 %v3818
    %v3820 = vlaneseq
    %v3821 = vshrl.u32 %v3820, 7
    %v3822 = vsub.s32 %v3819, %v3821
    %v3823 = vrot.slane %v3815, %v3822
    %v3825 = vunpack.c.l.s4 1966171168
    %v3826 = vunpack.c.0.s8 %v3825
    %v3827 = vlaneseq
    %v3828 = vshrl.u32 %v3827, 7
    %v3829 = vsub.s32 %v3826, %v3828
    %v3830 = vrot.slane %v3816, %v3829
    %v3831 = vcombine.low %v3823, %v3830
    %v3832 = vcombine.low %v2318, %v2322
    %v3833 = vcombine.low %v2326, %v2330
    %v3834 = vcombine.low %v2334, %v2338
    %v3835 = vcombine.low %v2342, %v2346
    %v3837 = vunpack.c.l.s4 1966171168
    %v3838 = vunpack.c.0.s8 %v3837
    %v3839 = vlaneseq
    %v3840 = vshrl.u32 %v3839, 7
    %v3841 = vsub.s32 %v3838, %v3840
    %v3842 = vrot.slane %v3832, %v3841
    %v3844 = vunpack.c.l.s4 1966171168
    %v3845 = vunpack.c.0.s8 %v3844
    %v3846 = vlaneseq
    %v3847 = vshrl.u32 %v3846, 7
    %v3848 = vsub.s32 %v3845, %v3847
    %v3849 = vrot.slane %v3833, %v3848
    %v3851 = vunpack.c.l.s4 1966171168
    %v3852 = vunpack.c.0.s8 %v3851
    %v3853 = vlaneseq
    %v3854 = vshrl.u32 %v3853, 7
    %v3855 = vsub.s32 %v3852, %v3854
    %v3856 = vrot.slane %v3834, %v3855
    %v3858 = vunpack.c.l.s4 1966171168
    %v3859 = vunpack.c.0.s8 %v3858
    %v3860 = vlaneseq
    %v3861 = vshrl.u32 %v3860, 7
    %v3862 = vsub.s32 %v3859, %v3861
    %v3863 = vrot.slane %v3835, %v3862
    %v3864 = vcombine.low %v3842, %v3849
    %v3865 = vcombine.low %v3856, %v3863
    %v3867 = vunpack.c.l.s4 1966171168
    %v3868 = vunpack.c.0.s8 %v3867
    %v3869 = vlaneseq
    %v3870 = vshrl.u32 %v3869, 7
    %v3871 = vsub.s32 %v3868, %v3870
    %v3872 = vrot.slane %v3864, %v3871
    %v3874 = vunpack.c.l.s4 1966171168
    %v3875 = vunpack.c.0.s8 %v3874
    %v3876 = vlaneseq
    %v3877 = vshrl.u32 %v3876, 7
    %v3878 = vsub.s32 %v3875, %v3877
    %v3879 = vrot.slane %v3865, %v3878
    %v3880 = vcombine.low %v3872, %v3879
    %v3881 = vcombine.low %v2350, %v2354
    %v3882 = vcombine.low %v2358, %v2362
    %v3883 = vcombine.low %v2366, %v2370
    %v3884 = vcombine.low %v2374, %v2378
    %v3886 = vunpack.c.l.s4 1966171168
    %v3887 = vunpack.c.0.s8 %v3886
    %v3888 = vlaneseq
    %v3889 = vshrl.u32 %v3888, 7
    %v3890 = vsub.s32 %v3887, %v3889
    %v3891 = vrot.slane %v3881, %v3890
    %v3893 = vunpack.c.l.s4 1966171168
    %v3894 = vunpack.c.0.s8 %v3893
    %v3895 = vlaneseq
    %v3896 = vshrl.u32 %v3895, 7
    %v3897 = vsub.s32 %v3894, %v3896
    %v3898 = vrot.slane %v3882, %v3897
    %v3900 = vunpack.c.l.s4 1966171168
    %v3901 = vunpack.c.0.s8 %v3900
    %v3902 = vlaneseq
    %v3903 = vshrl.u32 %v3902, 7
    %v3904 = vsub.s32 %v3901, %v3903
    %v3905 = vrot.slane %v3883, %v3904
    %v3907 = vunpack.c.l.s4 1966171168
    %v3908 = vunpack.c.0.s8 %v3907
    %v3909 = vlaneseq
    %v3910 = vshrl.u32 %v3909, 7
    %v3911 = vsub.s32 %v3908, %v3910
    %v3912 = vrot.slane %v3884, %v3911
    %v3913 = vcombine.low %v3891, %v3898
    %v3914 = vcombine.low %v3905, %v3912
    %v3916 = vunpack.c.l.s4 1966171168
    %v3917 = vunpack.c.0.s8 %v3916
    %v3918 = vlaneseq
    %v3919 = vshrl.u32 %v3918, 7
    %v3920 = vsub.s32 %v3917, %v3919
    %v3921 = vrot.slane %v3913, %v3920
    %v3923 = vunpack.c.l.s4 1966171168
    %v3924 = vunpack.c.0.s8 %v3923
    %v3925 = vlaneseq
    %v3926 = vshrl.u32 %v3925, 7
    %v3927 = vsub.s32 %v3924, %v3926
    %v3928 = vrot.slane %v3914, %v3927
    %v3929 = vcombine.low %v3921, %v3928
    %v3930 = vcombine.low %v2382, %v2386
    %v3931 = vcombine.low %v2390, %v2394
    %v3932 = vcombine.low %v2398, %v2402
    %v3933 = vcombine.low %v2406, %v2410
    %v3935 = vunpack.c.l.s4 1966171168
    %v3936 = vunpack.c.0.s8 %v3935
    %v3937 = vlaneseq
    %v3938 = vshrl.u32 %v3937, 7
    %v3939 = vsub.s32 %v3936, %v3938
    %v3940 = vrot.slane %v3930, %v3939
    %v3942 = vunpack.c.l.s4 1966171168
    %v3943 = vunpack.c.0.s8 %v3942
    %v3944 = vlaneseq
    %v3945 = vshrl.u32 %v3944, 7
    %v3946 = vsub.s32 %v3943, %v3945
    %v3947 = vrot.slane %v3931, %v3946
    %v3949 = vunpack.c.l.s4 1966171168
    %v3950 = vunpack.c.0.s8 %v3949
    %v3951 = vlaneseq
    %v3952 = vshrl.u32 %v3951, 7
    %v3953 = vsub.s32 %v3950, %v3952
    %v3954 = vrot.slane %v3932, %v3953
    %v3956 = vunpack.c.l.s4 1966171168
    %v3957 = vunpack.c.0.s8 %v3956
    %v3958 = vlaneseq
    %v3959 = vshrl.u32 %v3958, 7
    %v3960 = vsub.s32 %v3957, %v3959
    %v3961 = vrot.slane %v3933, %v3960
    %v3962 = vcombine.low %v3940, %v3947
    %v3963 = vcombine.low %v3954, %v3961
    %v3965 = vunpack.c.l.s4 1966171168
    %v3966 = vunpack.c.0.s8 %v3965
    %v3967 = vlaneseq
    %v3968 = vshrl.u32 %v3967, 7
    %v3969 = vsub.s32 %v3966, %v3968
    %v3970 = vrot.slane %v3962, %v3969
    %v3972 = vunpack.c.l.s4 1966171168
    %v3973 = vunpack.c.0.s8 %v3972
    %v3974 = vlaneseq
    %v3975 = vshrl.u32 %v3974, 7
    %v3976 = vsub.s32 %v3973, %v3975
    %v3977 = vrot.slane %v3963, %v3976
    %v3978 = vcombine.low %v3970, %v3977
    %3979 = vset.pattern.permute.xlu0 0
    %3980 = vperm.xlu0 %3979, %v2459
    %v3981 = vpop.permute.xlu0 %3980
    %3982 = vset.pattern.permute.xlu0 0
    %3983 = vperm.xlu0 %3982, %v2508
    %v3984 = vpop.permute.xlu0 %3983
    %3985 = vset.pattern.permute.xlu0 0
    %3986 = vperm.xlu0 %3985, %v2557
    %v3987 = vpop.permute.xlu0 %3986
    %3988 = vset.pattern.permute.xlu0 0
    %3989 = vperm.xlu0 %3988, %v2606
    %v3990 = vpop.permute.xlu0 %3989
    %3991 = vset.pattern.permute.xlu0 0
    %3992 = vperm.xlu0 %3991, %v2655
    %v3993 = vpop.permute.xlu0 %3992
    %3994 = vset.pattern.permute.xlu0 0
    %3995 = vperm.xlu0 %3994, %v2704
    %v3996 = vpop.permute.xlu0 %3995
    %3997 = vset.pattern.permute.xlu0 0
    %3998 = vperm.xlu0 %3997, %v2753
    %v3999 = vpop.permute.xlu0 %3998
    %4000 = vset.pattern.permute.xlu0 0
    %4001 = vperm.xlu0 %4000, %v2802
    %v4002 = vpop.permute.xlu0 %4001
    %4003 = vset.pattern.permute.xlu0 0
    %4004 = vperm.xlu0 %4003, %v2851
    %v4005 = vpop.permute.xlu0 %4004
    %4006 = vset.pattern.permute.xlu0 0
    %4007 = vperm.xlu0 %4006, %v2900
    %v4008 = vpop.permute.xlu0 %4007
    %4009 = vset.pattern.permute.xlu0 0
    %4010 = vperm.xlu0 %4009, %v2949
    %v4011 = vpop.permute.xlu0 %4010
    %4012 = vset.pattern.permute.xlu0 0
    %4013 = vperm.xlu0 %4012, %v2998
    %v4014 = vpop.permute.xlu0 %4013
    %4015 = vset.pattern.permute.xlu0 0
    %4016 = vperm.xlu0 %4015, %v3047
    %v4017 = vpop.permute.xlu0 %4016
    %4018 = vset.pattern.permute.xlu0 0
    %4019 = vperm.xlu0 %4018, %v3096
    %v4020 = vpop.permute.xlu0 %4019
    %4021 = vset.pattern.permute.xlu0 0
    %4022 = vperm.xlu0 %4021, %v3145
    %v4023 = vpop.permute.xlu0 %4022
    %4024 = vset.pattern.permute.xlu0 0
    %4025 = vperm.xlu0 %4024, %v3194
    %v4026 = vpop.permute.xlu0 %4025
    %4027 = vset.pattern.permute.xlu0 0
    %4028 = vperm.xlu0 %4027, %v3243
    %v4029 = vpop.permute.xlu0 %4028
    %4030 = vset.pattern.permute.xlu0 0
    %4031 = vperm.xlu0 %4030, %v3292
    %v4032 = vpop.permute.xlu0 %4031
    %4033 = vset.pattern.permute.xlu0 0
    %4034 = vperm.xlu0 %4033, %v3341
    %v4035 = vpop.permute.xlu0 %4034
    %4036 = vset.pattern.permute.xlu0 0
    %4037 = vperm.xlu0 %4036, %v3390
    %v4038 = vpop.permute.xlu0 %4037
    %4039 = vset.pattern.permute.xlu0 0
    %4040 = vperm.xlu0 %4039, %v3439
    %v4041 = vpop.permute.xlu0 %4040
    %4042 = vset.pattern.permute.xlu0 0
    %4043 = vperm.xlu0 %4042, %v3488
    %v4044 = vpop.permute.xlu0 %4043
    %4045 = vset.pattern.permute.xlu0 0
    %4046 = vperm.xlu0 %4045, %v3537
    %v4047 = vpop.permute.xlu0 %4046
    %4048 = vset.pattern.permute.xlu0 0
    %4049 = vperm.xlu0 %4048, %v3586
    %v4050 = vpop.permute.xlu0 %4049
    %4051 = vset.pattern.permute.xlu0 0
    %4052 = vperm.xlu0 %4051, %v3635
    %v4053 = vpop.permute.xlu0 %4052
    %4054 = vset.pattern.permute.xlu0 0
    %4055 = vperm.xlu0 %4054, %v3684
    %v4056 = vpop.permute.xlu0 %4055
    %4057 = vset.pattern.permute.xlu0 0
    %4058 = vperm.xlu0 %4057, %v3733
    %v4059 = vpop.permute.xlu0 %4058
    %4060 = vset.pattern.permute.xlu0 0
    %4061 = vperm.xlu0 %4060, %v3782
    %v4062 = vpop.permute.xlu0 %4061
    %4063 = vset.pattern.permute.xlu0 0
    %4064 = vperm.xlu0 %4063, %v3831
    %v4065 = vpop.permute.xlu0 %4064
    %4066 = vset.pattern.permute.xlu0 0
    %4067 = vperm.xlu0 %4066, %v3880
    %v4068 = vpop.permute.xlu0 %4067
    %4069 = vset.pattern.permute.xlu0 0
    %4070 = vperm.xlu0 %4069, %v3929
    %v4071 = vpop.permute.xlu0 %4070
    %4072 = vset.pattern.permute.xlu0 0
    %4073 = vperm.xlu0 %4072, %v3978
    %v4074 = vpop.permute.xlu0 %4073
    %v4075 = vlaneseq
    %v4076 = vand.u32 %v4075, 127
    %v4077 = vlaneseq
    %v4078 = vshrl.u32 %v4077, 7
    %v4079 = vsub.s32 %v4076, %v4078
    %v4080 = vrot.slane %v3981, %v4079
    %v4081 = vadd.s32 %v4076, 4294967288
    %v4082 = vlaneseq
    %v4083 = vshrl.u32 %v4082, 7
    %v4084 = vsub.s32 %v4081, %v4083
    %v4085 = vrot.slane %v3984, %v4084
    %vm4086 = vcmask 130112
    %v4087 = vsel %vm4086, %v4085, %v4080
    %v4088 = vadd.s32 %v4076, 4294967280
    %v4089 = vlaneseq
    %v4090 = vshrl.u32 %v4089, 7
    %v4091 = vsub.s32 %v4088, %v4090
    %v4092 = vrot.slane %v3987, %v4091
    %vm4093 = vcmask 195712
    %v4094 = vsel %vm4093, %v4092, %v4087
    %v4095 = vadd.s32 %v4076, 4294967272
    %v4096 = vlaneseq
    %v4097 = vshrl.u32 %v4096, 7
    %v4098 = vsub.s32 %v4095, %v4097
    %v4099 = vrot.slane %v3990, %v4098
    %vm4100 = vcmask 261312
    %v4101 = vsel %vm4100, %v4099, %v4094
    %v4102 = vadd.s32 %v4076, 4294967264
    %v4103 = vlaneseq
    %v4104 = vshrl.u32 %v4103, 7
    %v4105 = vsub.s32 %v4102, %v4104
    %v4106 = vrot.slane %v3993, %v4105
    %vm4107 = vcmask 326912
    %v4108 = vsel %vm4107, %v4106, %v4101
    %v4109 = vadd.s32 %v4076, 4294967256
    %v4110 = vlaneseq
    %v4111 = vshrl.u32 %v4110, 7
    %v4112 = vsub.s32 %v4109, %v4111
    %v4113 = vrot.slane %v3996, %v4112
    %vm4114 = vcmask 392512
    %v4115 = vsel %vm4114, %v4113, %v4108
    %v4116 = vadd.s32 %v4076, 4294967248
    %v4117 = vlaneseq
    %v4118 = vshrl.u32 %v4117, 7
    %v4119 = vsub.s32 %v4116, %v4118
    %v4120 = vrot.slane %v3999, %v4119
    %vm4121 = vcmask 458112
    %v4122 = vsel %vm4121, %v4120, %v4115
    %v4123 = vadd.s32 %v4076, 4294967240
    %v4124 = vlaneseq
    %v4125 = vshrl.u32 %v4124, 7
    %v4126 = vsub.s32 %v4123, %v4125
    %v4127 = vrot.slane %v4002, %v4126
    %vm4128 = vcmask 523712
    %v4129 = vsel %vm4128, %v4127, %v4122
    %v4130 = vadd.s32 %v4076, 4294967232
    %v4131 = vlaneseq
    %v4132 = vshrl.u32 %v4131, 7
    %v4133 = vsub.s32 %v4130, %v4132
    %v4134 = vrot.slane %v4005, %v4133
    %vm4135 = vcmask 589312
    %v4136 = vsel %vm4135, %v4134, %v4129
    %v4137 = vadd.s32 %v4076, 4294967224
    %v4138 = vlaneseq
    %v4139 = vshrl.u32 %v4138, 7
    %v4140 = vsub.s32 %v4137, %v4139
    %v4141 = vrot.slane %v4008, %v4140
    %vm4142 = vcmask 654912
    %v4143 = vsel %vm4142, %v4141, %v4136
    %v4144 = vadd.s32 %v4076, 4294967216
    %v4145 = vlaneseq
    %v4146 = vshrl.u32 %v4145, 7
    %v4147 = vsub.s32 %v4144, %v4146
    %v4148 = vrot.slane %v4011, %v4147
    %vm4149 = vcmask 720512
    %v4150 = vsel %vm4149, %v4148, %v4143
    %v4151 = vadd.s32 %v4076, 4294967208
    %v4152 = vlaneseq
    %v4153 = vshrl.u32 %v4152, 7
    %v4154 = vsub.s32 %v4151, %v4153
    %v4155 = vrot.slane %v4014, %v4154
    %vm4156 = vcmask 786112
    %v4157 = vsel %vm4156, %v4155, %v4150
    %v4158 = vadd.s32 %v4076, 4294967200
    %v4159 = vlaneseq
    %v4160 = vshrl.u32 %v4159, 7
    %v4161 = vsub.s32 %v4158, %v4160
    %v4162 = vrot.slane %v4017, %v4161
    %vm4163 = vcmask 851712
    %v4164 = vsel %vm4163, %v4162, %v4157
    %v4165 = vadd.s32 %v4076, 4294967192
    %v4166 = vlaneseq
    %v4167 = vshrl.u32 %v4166, 7
    %v4168 = vsub.s32 %v4165, %v4167
    %v4169 = vrot.slane %v4020, %v4168
    %vm4170 = vcmask 917312
    %v4171 = vsel %vm4170, %v4169, %v4164
    %v4172 = vadd.s32 %v4076, 4294967184
    %v4173 = vlaneseq
    %v4174 = vshrl.u32 %v4173, 7
    %v4175 = vsub.s32 %v4172, %v4174
    %v4176 = vrot.slane %v4023, %v4175
    %vm4177 = vcmask 982912
    %v4178 = vsel %vm4177, %v4176, %v4171
    %v4179 = vadd.s32 %v4076, 4294967176
    %v4180 = vlaneseq
    %v4181 = vshrl.u32 %v4180, 7
    %v4182 = vsub.s32 %v4179, %v4181
    %v4183 = vrot.slane %v4026, %v4182
    %vm4184 = vcmask 1048512
    %v4185 = vsel %vm4184, %v4183, %v4178
    %v4186 = vlaneseq
    %v4187 = vshrl.u32 %v4186, 7
    %v4188 = vsub.s32 %v4076, %v4187
    %v4189 = vrot.slane %v4029, %v4188
    %v4190 = vlaneseq
    %v4191 = vshrl.u32 %v4190, 7
    %v4192 = vsub.s32 %v4081, %v4191
    %v4193 = vrot.slane %v4032, %v4192
    %v4194 = vsel %vm4086, %v4193, %v4189
    %v4195 = vlaneseq
    %v4196 = vshrl.u32 %v4195, 7
    %v4197 = vsub.s32 %v4088, %v4196
    %v4198 = vrot.slane %v4035, %v4197
    %v4199 = vsel %vm4093, %v4198, %v4194
    %v4200 = vlaneseq
    %v4201 = vshrl.u32 %v4200, 7
    %v4202 = vsub.s32 %v4095, %v4201
    %v4203 = vrot.slane %v4038, %v4202
    %v4204 = vsel %vm4100, %v4203, %v4199
    %v4205 = vlaneseq
    %v4206 = vshrl.u32 %v4205, 7
    %v4207 = vsub.s32 %v4102, %v4206
    %v4208 = vrot.slane %v4041, %v4207
    %v4209 = vsel %vm4107, %v4208, %v4204
    %v4210 = vlaneseq
    %v4211 = vshrl.u32 %v4210, 7
    %v4212 = vsub.s32 %v4109, %v4211
    %v4213 = vrot.slane %v4044, %v4212
    %v4214 = vsel %vm4114, %v4213, %v4209
    %v4215 = vlaneseq
    %v4216 = vshrl.u32 %v4215, 7
    %v4217 = vsub.s32 %v4116, %v4216
    %v4218 = vrot.slane %v4047, %v4217
    %v4219 = vsel %vm4121, %v4218, %v4214
    %v4220 = vlaneseq
    %v4221 = vshrl.u32 %v4220, 7
    %v4222 = vsub.s32 %v4123, %v4221
    %v4223 = vrot.slane %v4050, %v4222
    %v4224 = vsel %vm4128, %v4223, %v4219
    %v4225 = vlaneseq
    %v4226 = vshrl.u32 %v4225, 7
    %v4227 = vsub.s32 %v4130, %v4226
    %v4228 = vrot.slane %v4053, %v4227
    %v4229 = vsel %vm4135, %v4228, %v4224
    %v4230 = vlaneseq
    %v4231 = vshrl.u32 %v4230, 7
    %v4232 = vsub.s32 %v4137, %v4231
    %v4233 = vrot.slane %v4056, %v4232
    %v4234 = vsel %vm4142, %v4233, %v4229
    %v4235 = vlaneseq
    %v4236 = vshrl.u32 %v4235, 7
    %v4237 = vsub.s32 %v4144, %v4236
    %v4238 = vrot.slane %v4059, %v4237
    %v4239 = vsel %vm4149, %v4238, %v4234
    %v4240 = vlaneseq
    %v4241 = vshrl.u32 %v4240, 7
    %v4242 = vsub.s32 %v4151, %v4241
    %v4243 = vrot.slane %v4062, %v4242
    %v4244 = vsel %vm4156, %v4243, %v4239
    %v4245 = vlaneseq
    %v4246 = vshrl.u32 %v4245, 7
    %v4247 = vsub.s32 %v4158, %v4246
    %v4248 = vrot.slane %v4065, %v4247
    %v4249 = vsel %vm4163, %v4248, %v4244
    %v4250 = vlaneseq
    %v4251 = vshrl.u32 %v4250, 7
    %v4252 = vsub.s32 %v4165, %v4251
    %v4253 = vrot.slane %v4068, %v4252
    %v4254 = vsel %vm4170, %v4253, %v4249
    %v4255 = vlaneseq
    %v4256 = vshrl.u32 %v4255, 7
    %v4257 = vsub.s32 %v4172, %v4256
    %v4258 = vrot.slane %v4071, %v4257
    %v4259 = vsel %vm4177, %v4258, %v4254
    %v4260 = vlaneseq
    %v4261 = vshrl.u32 %v4260, 7
    %v4262 = vsub.s32 %v4179, %v4261
    %v4263 = vrot.slane %v4074, %v4262
    %v4264 = vsel %vm4184, %v4263, %v4259
    %v4265 = vcombine.low %v4185, %v4264
    %v4267 = vunpack.c.l.s4 1966171168
    %v4268 = vunpack.c.0.s8 %v4267
    %v4269 = vlaneseq
    %v4270 = vshrl.u32 %v4269, 7
    %v4271 = vsub.s32 %v4268, %v4270
    %v4272 = vrot.slane %v4265, %v4271
    %v4274 = vunpack.c.l.s4 1966171168
    %v4275 = vunpack.c.0.s8 %v4274
    %v4276 = vlaneseq
    %v4277 = vshrl.u32 %v4276, 7
    %v4278 = vsub.s32 %v4275, %v4277
    %v4279 = vrot.slane %v4272, %v4278
    %v4281 = vlaneseq
    %vm4282 = vcmp.ge.s32.totalorder %v4281, 0
    %vm4283 = vcmp.lt.s32.totalorder %v4281, 256
    %vm4284 = vmand %vm4282, %vm4283
    %4285 = vst.msk [vmem:[#allocation3] sm:$0x3] %vm4284, %v4279
    // Predicated region
    $region34: #{tpu_custom_call.1} parent=1 // pred_check
      _
    $region35: #{tpu_custom_call.1} parent=1 // pred_check_branch
      %4287 = sbr.rel (0) target = $region37
    $region36: #{tpu_custom_call.1} parent=1 // pred_region
      %s4289 = ssub.s32 32, 32
      %4290 = vsyncadd [#allocation4], %s4289
      %s4292 = sshll.u32 [#allocation3], 4
      %s4293 = int_to_ptr.vmem [resolvable:$true] %s4292
      %4295 = dma.vmem_to_hbm [thread:$0]  %s4293, 32, %s8, [#allocation4]
    $region37: #{tpu_custom_call.1} parent=1 // pred_fallthru
      _
    // Predicated region
    $region38: #{tpu_custom_call.1} parent=1 // pred_check
      _
    $region39: #{tpu_custom_call.1} parent=1 // pred_check_branch
      %4297 = sbr.rel (0) target = $region41
    $region40: #{tpu_custom_call.1} parent=1 // pred_region
      %4298 = dma.done [#allocation4], 32
    $region41: #{tpu_custom_call.1} parent=1 // pred_fallthru
      _
    %4299 = vsyncpa [#allocation4], 1

</llo_original>
